<compile_context>
chip_gen: v6e
topology: v6e:2x2x1
jax: 0.10.0
libtpu: 0.0.40
codegen_flags: <defaults>
</compile_context>

<pallas_src>
import math

import jax
import jax.numpy as jnp
from jax.experimental import pallas as pl
from jax.experimental.pallas import tpu as pltpu

# ----------------------------- model constants -------------------------------
EMB = 32          # _embsize
N_KERNELS = 11    # mm_light_kernels
CONV_OUT = 300
CONV_PAD = 384    # CONV_OUT zero-padded up to a lane multiple (3*128)
N_GRAMS = 4       # conv kernel sizes 2..4
KSIZES = (2, 3, 4)
ATT_DIM = 32      # projection_dim (= values_dim)
N_HEADS = 32
FF_HIDDEN = 100
COMB = N_KERNELS * N_GRAMS          # 44 features per (sum|mean) head


def kernel_mus(n_kernels):
    l_mu = [1.0]
    if n_kernels == 1:
        return l_mu
    bin_size = 2.0 / (n_kernels - 1)
    l_mu.append(1 - bin_size / 2)
    for i in range(1, n_kernels - 1):
        l_mu.append(l_mu[i] - bin_size)
    return l_mu


def kernel_sigmas(n_kernels):
    bin_size = 2.0 / (n_kernels - 1)
    l_sigma = [0.0001]
    if n_kernels == 1:
        return l_sigma
    l_sigma += [0.5 * bin_size] * (n_kernels - 1)
    return l_sigma


MUS = tuple(kernel_mus(N_KERNELS))
SIGMAS = tuple(kernel_sigmas(N_KERNELS))
NEG_HALF_INV_SIG2 = tuple(-1.0 / (2.0 * s * s) for s in SIGMAS)

# Shared-sigma recurrence constants (kernels 1..N-1 have sigma=0.1, mu spaced
# by BIN): e_k = e_{k-1} * r * STEP_G[k], r = exp(2*A1*BIN*(s - mu_1)).
BIN = 2.0 / (N_KERNELS - 1)
A1 = NEG_HALF_INV_SIG2[1]                       # -1/(2*sigma^2) = -50
R_COEF = 2.0 * A1 * BIN                         # -20
STEP_G = tuple(math.exp(A1 * BIN * BIN * (2 * k - 3)) for k in range(N_KERNELS))


# ----------------------------- fused Pallas kernel ----------------------------
def _fused_match_body(q_ref, d_ref, qm_ref, dm_ref,
                      w2_ref, w3_ref, w4_ref, cb_ref,
                      sum_ref, mean_ref):
    """Per batch-block (vectorized over Bt): one-to-one + 3 n-gram poolings."""
    Bt, Q, C = q_ref.shape
    D = d_ref.shape[1]
    CP = w2_ref.shape[1]                                     # padded conv out

    qm = qm_ref[...]                                         # (Bt, Q, 1)
    dm = dm_ref[...]                                         # (Bt, 1, D)
    # doc_len guard only changes the degenerate all-padded-document case.
    inv_dl = 1.0 / jnp.maximum(jnp.sum(dm, axis=2, keepdims=True), 1e-10)

    def cos_tanh(a, b):
        # CosineMatrixAttention (allennlp): L2 normalize, +1e-13 on the norm.
        an = a * (1.0 / (jnp.sqrt(jnp.sum(a * a, axis=-1, keepdims=True)) + 1e-13))
        bn = b * (1.0 / (jnp.sqrt(jnp.sum(b * b, axis=-1, keepdims=True)) + 1e-13))
        sim = jnp.einsum('bqf,bdf->bqd',
                         an.astype(jnp.bfloat16), bn.astype(jnp.bfloat16),
                         preferred_element_type=jnp.float32)  # (Bt, Q, D)
        return jnp.tanh(sim)

    def pool_and_store(path, sim):
        # sim: (Bt, Q, D) f32.  Doc mask folded into the kernel values once;
        # it propagates through the shared-sigma recurrence (0 * finite = 0).
        d0 = sim - MUS[0]
        e = jnp.exp(NEG_HALF_INV_SIG2[0] * (d0 * d0)) * dm    # exact-match, f32 exp
        kq_cols = [jnp.sum(e, axis=2, keepdims=True)]         # (Bt, Q, 1)
        d1 = sim - MUS[1]
        e = jnp.exp(A1 * (d1 * d1)) * dm                       # kernel 1
        r = jnp.exp(R_COEF * d1)                               # shared ratio
        kq_cols.append(jnp.sum(e, axis=2, keepdims=True))
        for k in range(2, N_KERNELS):                          # kernels 2..10
            e = e * (STEP_G[k] * r)
            kq_cols.append(jnp.sum(e, axis=2, keepdims=True))
        kq = jnp.concatenate(kq_cols, axis=2)                  # (Bt, Q, 11)
        # keep the exact reference clamp semantics (two independent clamps)
        log_s = jnp.log(jnp.maximum(kq, 1e-10)) * qm
        log_m = jnp.log(jnp.maximum(kq * inv_dl, 1e-10)) * qm
        c0 = path * N_KERNELS
        c1 = c0 + N_KERNELS
        sum_ref[0, :, c0:c1] = jnp.sum(log_s, axis=1)          # (Bt, 11)
        mean_ref[0, :, c0:c1] = jnp.sum(log_m, axis=1)

    q = q_ref[...]                                             # (Bt, Q, C)
    d = d_ref[...]                                             # (Bt, D, C)

    # ---- path 0: one-to-one match on the [embedding ; context] features ----
    pool_and_store(0, cos_tanh(q, d))

    # ---- n-gram paths: batched im2col conv (bf16 MXU) + bias + ReLU + pool --
    qpad = jnp.concatenate([q, jnp.zeros((Bt, N_GRAMS - 1, C), q.dtype)], axis=1)
    dpad = jnp.concatenate([d, jnp.zeros((Bt, N_GRAMS - 1, C), d.dtype)], axis=1)
    cbias = cb_ref[...]                                        # (3, CP)

    for idx, (ksize, w_ref) in enumerate(zip(KSIZES, (w2_ref, w3_ref, w4_ref))):
        wk = w_ref[...]                                        # (k*C, CP) bf16
        brow = cbias[idx:idx + 1, :]                           # (1, CP)
        # batched im2col: k sublane-shifted slices, concat over channels
        q_im = jnp.concatenate([qpad[:, j:j + Q, :] for j in range(ksize)], axis=2)
        d_im = jnp.concatenate([dpad[:, j:j + D, :] for j in range(ksize)], axis=2)
        # fuse query + document rows into ONE matmul per kernel size
        im = jnp.concatenate([q_im, d_im], axis=1)             # (Bt, Q+D, k*C)
        im2 = im.reshape(Bt * (Q + D), ksize * C).astype(jnp.bfloat16)
        act = jnp.maximum(
            jnp.dot(im2, wk, preferred_element_type=jnp.float32) + brow, 0.0)
        act3 = act.reshape(Bt, Q + D, CP)
        pool_and_store(idx + 1, cos_tanh(act3[:, :Q, :], act3[:, Q:, :]))


def fused_match_pool(q_cat, d_cat, q_mask, d_mask, conv_params):
    """q_cat: (B,Q,2E), d_cat: (B,D,2E), masks (B,Q)/(B,D) -> ((B,44),(B,44))."""
    B, Q, C = q_cat.shape
    D = d_cat.shape[1]

    # Bt: batch rows per grid step.  Keep at least 2 grid steps so the
    # "parallel" axis can shard across v7x's two TensorCores; cap at 8 rows
    # to amortize per-step overhead while staying well inside VMEM.
    Bt = 1
    cap = max(1, min(8, B // 2))
    for cand in range(cap, 0, -1):
        if B % cand == 0:
            Bt = cand
            break
    nblk = B // Bt

    qm = q_mask.reshape(B, Q, 1).astype(jnp.float32)
    dm = d_mask.reshape(B, 1, D).astype(jnp.float32)

    # im2col-folded conv weights (k*Cin, Cout) zero-padded 300->384 and cast
    # to bf16 for the MXU; biases stacked / padded into one (3, 384) f32 array.
    ws = []
    for i, ks in enumerate(KSIZES):
        w = conv_params[i]['w'].reshape(ks * C, CONV_OUT)
        w = jnp.pad(w, ((0, 0), (0, CONV_PAD - CONV_OUT)))
        ws.append(w.astype(jnp.bfloat16))
    bstack = jnp.stack(
        [jnp.pad(conv_params[i]['b'], (0, CONV_PAD - CONV_OUT))
         for i in range(len(KSIZES))], axis=0).astype(jnp.float32)

    sum_k, mean_k = pl.pallas_call(
        _fused_match_body,
        out_shape=(jax.ShapeDtypeStruct((nblk, Bt, COMB), jnp.float32),
                   jax.ShapeDtypeStruct((nblk, Bt, COMB), jnp.float32)),
        grid_spec=pltpu.PrefetchScalarGridSpec(
            num_scalar_prefetch=0,
            grid=(nblk,),
            in_specs=[
                pl.BlockSpec((Bt, Q, C), lambda g: (g, 0, 0)),
                pl.BlockSpec((Bt, D, C), lambda g: (g, 0, 0)),
                pl.BlockSpec((Bt, Q, 1), lambda g: (g, 0, 0)),
                pl.BlockSpec((Bt, 1, D), lambda g: (g, 0, 0)),
                pl.BlockSpec((KSIZES[0] * C, CONV_PAD), lambda g: (0, 0)),
                pl.BlockSpec((KSIZES[1] * C, CONV_PAD), lambda g: (0, 0)),
                pl.BlockSpec((KSIZES[2] * C, CONV_PAD), lambda g: (0, 0)),
                pl.BlockSpec((len(KSIZES), CONV_PAD), lambda g: (0, 0)),
            ],
            out_specs=[
                pl.BlockSpec((1, Bt, COMB), lambda g: (g, 0, 0)),
                pl.BlockSpec((1, Bt, COMB), lambda g: (g, 0, 0)),
            ],
        ),
        compiler_params=pltpu.CompilerParams(
            dimension_semantics=("parallel",)),
    )(q_cat.astype(jnp.float32), d_cat.astype(jnp.float32), qm, dm,
      ws[0], ws[1], ws[2], bstack)
    return sum_k.reshape(B, COMB), mean_k.reshape(B, COMB)


# --------------------- plain-JAX glue: contextual encoder --------------------
def _layer_norm(x, gamma, beta, eps=1e-6):
    # allennlp LayerNorm: population std, eps added to std.
    mean = jnp.mean(x, axis=-1, keepdims=True)
    std = jnp.sqrt(jnp.mean(jnp.square(x - mean), axis=-1, keepdims=True))
    return gamma * (x - mean) / (std + eps) + beta


def _positional_features(L, E):
    positions = jnp.arange(L, dtype=jnp.float32)
    num_ts = E // 2
    log_inc = math.log(1.0e4) / float(num_ts - 1)
    inv = jnp.exp(jnp.arange(num_ts, dtype=jnp.float32) * -log_inc)
    scaled = positions[:, None] * inv[None, :]
    return jnp.concatenate([jnp.sin(scaled), jnp.cos(scaled)], axis=1)  # (L, E)


def stacked_self_attention(p, x, mask):
    """AllenNLP StackedSelfAttentionEncoder, 1 layer, 32 heads of size 1, no dropout."""
    B, L, E = x.shape
    out = x + _positional_features(L, E)[None]
    cached = out
    # FeedForward([relu, linear], dims [100, E])
    h = jnp.maximum(out @ p['ff_w1'] + p['ff_b1'], 0.0)
    ff = h @ p['ff_w2'] + p['ff_b2']
    ff = _layer_norm(ff + cached, p['ff_ln_g'], p['ff_ln_b'])
    # MultiHeadSelfAttention(num_heads=32, attention_dim=values_dim=32).
    # Per-head size is 1, so the score matrix is a rank-1 outer product per
    # head: compute it with broadcast multiplies instead of 1-wide matmuls.
    comb = ff @ p['att_w'] + p['att_b']                     # (B, L, 96)
    q = comb[..., :ATT_DIM]
    k = comb[..., ATT_DIM:2 * ATT_DIM]
    v = comb[..., 2 * ATT_DIM:]
    scale = math.sqrt(E // N_HEADS)
    scores = q[:, :, None, :] * k[:, None, :, :] / scale    # (B, Li, Lj, H)
    m = mask[:, None, :, None].astype(jnp.float32)          # mask over j
    att = jax.nn.softmax(scores * m, axis=2) * m            # allennlp masked_softmax
    att = att / (jnp.sum(att, axis=2, keepdims=True) + 1e-13)
    ctx = jnp.sum(att * v[:, None, :, :], axis=2)           # (B, Li, 32)
    ctx = ctx @ p['out_w'] + p['out_b']
    return _layer_norm(ctx + ff, p['att_ln_g'], p['att_ln_b'])


# ------------------------------ parameters ------------------------------------
def init_params(key):
    ks = jax.random.split(key, 16)

    def w(k, shape, scale=0.05):
        return scale * jax.random.normal(k, shape, jnp.float32)

    p = {
        'ff_w1': w(ks[0], (EMB, FF_HIDDEN)),
        'ff_b1': jnp.zeros((FF_HIDDEN,), jnp.float32),
        'ff_w2': w(ks[1], (FF_HIDDEN, EMB)),
        'ff_b2': jnp.zeros((EMB,), jnp.float32),
        'ff_ln_g': jnp.ones((EMB,), jnp.float32),
        'ff_ln_b': jnp.zeros((EMB,), jnp.float32),
        'att_w': w(ks[2], (EMB, 3 * ATT_DIM)),
        'att_b': jnp.zeros((3 * ATT_DIM,), jnp.float32),
        'out_w': w(ks[3], (ATT_DIM, EMB)),
        'out_b': jnp.zeros((EMB,), jnp.float32),
        'att_ln_g': jnp.ones((EMB,), jnp.float32),
        'att_ln_b': jnp.zeros((EMB,), jnp.float32),
    }
    conv = []
    for idx, ksize in enumerate(KSIZES):
        conv.append({'w': w(ks[4 + idx], (ksize, 2 * EMB, CONV_OUT)),
                     'b': 0.01 * jax.random.normal(ks[7 + idx], (CONV_OUT,),
                                                   jnp.float32)})
    p['conv'] = conv
    p['lin_sum_w'] = w(ks[10], (COMB, 1))
    p['lin_sum_b'] = jnp.zeros((1,), jnp.float32)
    p['lin_mean_w'] = w(ks[11], (COMB, 1))
    p['lin_mean_b'] = jnp.zeros((1,), jnp.float32)
    p['lin_comb_w'] = w(ks[12], (2, 1))                      # no bias
    return p


# ------------------------------ full forward ----------------------------------
def matchmaker_forward(p, q_emb, d_emb, q_mask, d_mask):
    q_ctx = stacked_self_attention(p, q_emb, q_mask)
    d_ctx = stacked_self_attention(p, d_emb, d_mask)
    q_cat = jnp.concatenate([q_emb, q_ctx], axis=2)          # (B, Q, 2E)
    d_cat = jnp.concatenate([d_emb, d_ctx], axis=2)          # (B, D, 2E)

    # single fused Pallas kernel: one-to-one + all 3 n-gram conv+pool paths.
    # feature order per row: [oto(11), k2(11), k3(11), k4(11)]
    sum_cat, mean_cat = fused_match_pool(q_cat, d_cat, q_mask, d_mask, p['conv'])

    lin_sum = sum_cat @ p['lin_sum_w'] + p['lin_sum_b']      # (B, 1)
    lin_mean = mean_cat @ p['lin_mean_w'] + p['lin_mean_b']  # (B, 1)
    comb = jnp.concatenate([lin_sum, lin_mean], axis=1)      # (B, 2)
    score = (comb @ p['lin_comb_w'])[:, 0]                   # (B,)
    return score


if __name__ == "__main__":
    key = jax.random.PRNGKey(0)
    kp, kq, kd = jax.random.split(key, 3)
    B, QLEN, DLEN = 2, 8, 16

    params = init_params(kp)
    q_emb = jax.random.normal(kq, (B, QLEN, EMB), jnp.float32)
    d_emb = jax.random.normal(kd, (B, DLEN, EMB), jnp.float32)
    q_lens = jnp.array([QLEN, 5])
    d_lens = jnp.array([DLEN, 10])
    q_mask = (jnp.arange(QLEN)[None, :] < q_lens[:, None]).astype(jnp.float32)
    d_mask = (jnp.arange(DLEN)[None, :] < d_lens[:, None]).astype(jnp.float32)

    score = jax.jit(matchmaker_forward)(params, q_emb, d_emb, q_mask, d_mask)
    jax.block_until_ready(score)
    print("KERNEL_OK")
</pallas_src>

<mosaic_0001>
module attributes {stable_mosaic.version = 11 : i64} {
  func.func @_fused_match_body(%arg0: i32, %arg1: memref<1x8x64xf32, #tpu.memory_space<vmem>>, %arg2: memref<1x16x64xf32, #tpu.memory_space<vmem>>, %arg3: memref<1x8x1xf32, #tpu.memory_space<vmem>>, %arg4: memref<1x1x16xf32, #tpu.memory_space<vmem>>, %arg5: memref<128x384xbf16, #tpu.memory_space<vmem>>, %arg6: memref<192x384xbf16, #tpu.memory_space<vmem>>, %arg7: memref<256x384xbf16, #tpu.memory_space<vmem>>, %arg8: memref<3x384xf32, #tpu.memory_space<vmem>>, %arg9: memref<1x1x44xf32, #tpu.memory_space<vmem>>, %arg10: memref<1x1x44xf32, #tpu.memory_space<vmem>>) attributes {dimension_semantics = [#tpu.dimension_semantics<parallel>], iteration_bounds = array<i64: 2>, scalar_prefetch = 0 : i64, scratch_operands = 0 : i64, tpu.core_type = #tpu.core_type<tc>, window_params = [{transform_indices = @transform_0, window_bounds = array<i64: 1, 8, 64>}, {transform_indices = @transform_1, window_bounds = array<i64: 1, 16, 64>}, {transform_indices = @transform_2, window_bounds = array<i64: 1, 8, 1>}, {transform_indices = @transform_3, window_bounds = array<i64: 1, 1, 16>}, {pipeline_mode = #tpu.pipeline_mode<synchronous>, transform_indices = @transform_4, window_bounds = array<i64: 128, 384>}, {pipeline_mode = #tpu.pipeline_mode<synchronous>, transform_indices = @transform_5, window_bounds = array<i64: 192, 384>}, {pipeline_mode = #tpu.pipeline_mode<synchronous>, transform_indices = @transform_6, window_bounds = array<i64: 256, 384>}, {pipeline_mode = #tpu.pipeline_mode<synchronous>, transform_indices = @transform_7, window_bounds = array<i64: 3, 384>}, {transform_indices = @transform_8, window_bounds = array<i64: 1, 1, 44>}, {transform_indices = @transform_9, window_bounds = array<i64: 1, 1, 44>}]} {
    %c0 = arith.constant 0 : index
    %c0_0 = arith.constant 0 : index
    %c0_1 = arith.constant 0 : index
    %0 = vector.load %arg3[%c0, %c0_0, %c0_1] : memref<1x8x1xf32, #tpu.memory_space<vmem>>, vector<1x8x1xf32>
    %c0_2 = arith.constant 0 : index
    %c0_3 = arith.constant 0 : index
    %c0_4 = arith.constant 0 : index
    %1 = vector.load %arg4[%c0_2, %c0_3, %c0_4] : memref<1x1x16xf32, #tpu.memory_space<vmem>>, vector<1x1x16xf32>
    %cst = arith.constant dense<0.000000e+00> : vector<1x1xf32>
    %2 = vector.multi_reduction <add>, %1, %cst [2] : vector<1x1x16xf32> to vector<1x1xf32>
    %3 = vector.shape_cast %2 : vector<1x1xf32> to vector<1x1x1xf32>
    %cst_5 = arith.constant 1.000000e-10 : f32
    %4 = vector.broadcast %cst_5 : f32 to vector<1x1x1xf32>
    %5 = arith.maximumf %3, %4 : vector<1x1x1xf32>
    %cst_6 = arith.constant 1.000000e+00 : f32
    %6 = vector.broadcast %cst_6 : f32 to vector<1x1x1xf32>
    %7 = arith.divf %6, %5 : vector<1x1x1xf32>
    %c0_7 = arith.constant 0 : index
    %c0_8 = arith.constant 0 : index
    %c0_9 = arith.constant 0 : index
    %8 = vector.load %arg1[%c0_7, %c0_8, %c0_9] : memref<1x8x64xf32, #tpu.memory_space<vmem>>, vector<1x8x64xf32>
    %c0_10 = arith.constant 0 : index
    %c0_11 = arith.constant 0 : index
    %c0_12 = arith.constant 0 : index
    %9 = vector.load %arg2[%c0_10, %c0_11, %c0_12] : memref<1x16x64xf32, #tpu.memory_space<vmem>>, vector<1x16x64xf32>
    %10 = arith.mulf %8, %8 : vector<1x8x64xf32>
    %cst_13 = arith.constant dense<0.000000e+00> : vector<1x8xf32>
    %11 = vector.multi_reduction <add>, %10, %cst_13 [2] : vector<1x8x64xf32> to vector<1x8xf32>
    %12 = vector.shape_cast %11 : vector<1x8xf32> to vector<1x8x1xf32>
    %13 = math.sqrt %12 : vector<1x8x1xf32>
    %cst_14 = arith.constant 9.99999982E-14 : f32
    %14 = vector.broadcast %cst_14 : f32 to vector<1x8x1xf32>
    %15 = arith.addf %13, %14 : vector<1x8x1xf32>
    %cst_15 = arith.constant 1.000000e+00 : f32
    %16 = vector.broadcast %cst_15 : f32 to vector<1x8x1xf32>
    %17 = arith.divf %16, %15 : vector<1x8x1xf32>
    %18 = vector.broadcast %17 : vector<1x8x1xf32> to vector<1x8x64xf32>
    %19 = arith.mulf %8, %18 : vector<1x8x64xf32>
    %20 = arith.mulf %9, %9 : vector<1x16x64xf32>
    %cst_16 = arith.constant dense<0.000000e+00> : vector<1x16xf32>
    %21 = vector.multi_reduction <add>, %20, %cst_16 [2] : vector<1x16x64xf32> to vector<1x16xf32>
    %22 = vector.shape_cast %21 : vector<1x16xf32> to vector<1x16x1xf32>
    %23 = math.sqrt %22 : vector<1x16x1xf32>
    %cst_17 = arith.constant 9.99999982E-14 : f32
    %24 = vector.broadcast %cst_17 : f32 to vector<1x16x1xf32>
    %25 = arith.addf %23, %24 : vector<1x16x1xf32>
    %cst_18 = arith.constant 1.000000e+00 : f32
    %26 = vector.broadcast %cst_18 : f32 to vector<1x16x1xf32>
    %27 = arith.divf %26, %25 : vector<1x16x1xf32>
    %28 = vector.broadcast %27 : vector<1x16x1xf32> to vector<1x16x64xf32>
    %29 = arith.mulf %9, %28 : vector<1x16x64xf32>
    %30 = arith.truncf %19 : vector<1x8x64xf32> to vector<1x8x64xbf16>
    %31 = arith.truncf %29 : vector<1x16x64xf32> to vector<1x16x64xbf16>
    "tpu.trace_start"() <{level = 10 : i32, message = "bqf,bdf->bqd"}> : () -> ()
    %cst_19 = arith.constant dense<0.000000e+00> : vector<1x8x16xf32>
    %32 = tpu.matmul %30, %31, %cst_19 {dimension_numbers = #tpu.dot_dimension_numbers<[2], [2], [1], [1], [0, 0, 0, 1, 1, 1], [0], [0]>} : vector<1x8x64xbf16>, vector<1x16x64xbf16>, vector<1x8x16xf32> -> vector<1x8x16xf32>
    "tpu.trace_stop"() : () -> ()
    %33 = math.tanh %32 : vector<1x8x16xf32>
    %cst_20 = arith.constant 1.000000e+00 : f32
    %34 = vector.broadcast %cst_20 : f32 to vector<1x8x16xf32>
    %35 = arith.subf %33, %34 : vector<1x8x16xf32>
    %36 = arith.mulf %35, %35 : vector<1x8x16xf32>
    %cst_21 = arith.constant -5.000000e+07 : f32
    %37 = vector.broadcast %cst_21 : f32 to vector<1x8x16xf32>
    %38 = arith.mulf %37, %36 : vector<1x8x16xf32>
    %39 = math.exp %38 : vector<1x8x16xf32>
    %40 = vector.broadcast %1 : vector<1x1x16xf32> to vector<1x8x16xf32>
    %41 = arith.mulf %39, %40 : vector<1x8x16xf32>
    %cst_22 = arith.constant dense<0.000000e+00> : vector<1x8xf32>
    %42 = vector.multi_reduction <add>, %41, %cst_22 [2] : vector<1x8x16xf32> to vector<1x8xf32>
    %43 = vector.shape_cast %42 : vector<1x8xf32> to vector<1x8x1xf32>
    %cst_23 = arith.constant 0.899999976 : f32
    %44 = vector.broadcast %cst_23 : f32 to vector<1x8x16xf32>
    %45 = arith.subf %33, %44 : vector<1x8x16xf32>
    %46 = arith.mulf %45, %45 : vector<1x8x16xf32>
    %cst_24 = arith.constant -5.000000e+01 : f32
    %47 = vector.broadcast %cst_24 : f32 to vector<1x8x16xf32>
    %48 = arith.mulf %47, %46 : vector<1x8x16xf32>
    %49 = math.exp %48 : vector<1x8x16xf32>
    %50 = vector.broadcast %1 : vector<1x1x16xf32> to vector<1x8x16xf32>
    %51 = arith.mulf %49, %50 : vector<1x8x16xf32>
    %cst_25 = arith.constant -2.000000e+01 : f32
    %52 = vector.broadcast %cst_25 : f32 to vector<1x8x16xf32>
    %53 = arith.mulf %52, %45 : vector<1x8x16xf32>
    %54 = math.exp %53 : vector<1x8x16xf32>
    %cst_26 = arith.constant dense<0.000000e+00> : vector<1x8xf32>
    %55 = vector.multi_reduction <add>, %51, %cst_26 [2] : vector<1x8x16xf32> to vector<1x8xf32>
    %56 = vector.shape_cast %55 : vector<1x8xf32> to vector<1x8x1xf32>
    %cst_27 = arith.constant 0.135335281 : f32
    %57 = vector.broadcast %cst_27 : f32 to vector<1x8x16xf32>
    %58 = arith.mulf %57, %54 : vector<1x8x16xf32>
    %59 = arith.mulf %51, %58 : vector<1x8x16xf32>
    %cst_28 = arith.constant dense<0.000000e+00> : vector<1x8xf32>
    %60 = vector.multi_reduction <add>, %59, %cst_28 [2] : vector<1x8x16xf32> to vector<1x8xf32>
    %61 = vector.shape_cast %60 : vector<1x8xf32> to vector<1x8x1xf32>
    %cst_29 = arith.constant 0.00247875229 : f32
    %62 = vector.broadcast %cst_29 : f32 to vector<1x8x16xf32>
    %63 = arith.mulf %62, %54 : vector<1x8x16xf32>
    %64 = arith.mulf %59, %63 : vector<1x8x16xf32>
    %cst_30 = arith.constant dense<0.000000e+00> : vector<1x8xf32>
    %65 = vector.multi_reduction <add>, %64, %cst_30 [2] : vector<1x8x16xf32> to vector<1x8xf32>
    %66 = vector.shape_cast %65 : vector<1x8xf32> to vector<1x8x1xf32>
    %cst_31 = arith.constant 4.5399931E-5 : f32
    %67 = vector.broadcast %cst_31 : f32 to vector<1x8x16xf32>
    %68 = arith.mulf %67, %54 : vector<1x8x16xf32>
    %69 = arith.mulf %64, %68 : vector<1x8x16xf32>
    %cst_32 = arith.constant dense<0.000000e+00> : vector<1x8xf32>
    %70 = vector.multi_reduction <add>, %69, %cst_32 [2] : vector<1x8x16xf32> to vector<1x8xf32>
    %71 = vector.shape_cast %70 : vector<1x8xf32> to vector<1x8x1xf32>
    %cst_33 = arith.constant 8.31528723E-7 : f32
    %72 = vector.broadcast %cst_33 : f32 to vector<1x8x16xf32>
    %73 = arith.mulf %72, %54 : vector<1x8x16xf32>
    %74 = arith.mulf %69, %73 : vector<1x8x16xf32>
    %cst_34 = arith.constant dense<0.000000e+00> : vector<1x8xf32>
    %75 = vector.multi_reduction <add>, %74, %cst_34 [2] : vector<1x8x16xf32> to vector<1x8xf32>
    %76 = vector.shape_cast %75 : vector<1x8xf32> to vector<1x8x1xf32>
    %cst_35 = arith.constant 1.52299791E-8 : f32
    %77 = vector.broadcast %cst_35 : f32 to vector<1x8x16xf32>
    %78 = arith.mulf %77, %54 : vector<1x8x16xf32>
    %79 = arith.mulf %74, %78 : vector<1x8x16xf32>
    %cst_36 = arith.constant dense<0.000000e+00> : vector<1x8xf32>
    %80 = vector.multi_reduction <add>, %79, %cst_36 [2] : vector<1x8x16xf32> to vector<1x8xf32>
    %81 = vector.shape_cast %80 : vector<1x8xf32> to vector<1x8x1xf32>
    %cst_37 = arith.constant 2.7894681E-10 : f32
    %82 = vector.broadcast %cst_37 : f32 to vector<1x8x16xf32>
    %83 = arith.mulf %82, %54 : vector<1x8x16xf32>
    %84 = arith.mulf %79, %83 : vector<1x8x16xf32>
    %cst_38 = arith.constant dense<0.000000e+00> : vector<1x8xf32>
    %85 = vector.multi_reduction <add>, %84, %cst_38 [2] : vector<1x8x16xf32> to vector<1x8xf32>
    %86 = vector.shape_cast %85 : vector<1x8xf32> to vector<1x8x1xf32>
    %cst_39 = arith.constant 5.10908893E-12 : f32
    %87 = vector.broadcast %cst_39 : f32 to vector<1x8x16xf32>
    %88 = arith.mulf %87, %54 : vector<1x8x16xf32>
    %89 = arith.mulf %84, %88 : vector<1x8x16xf32>
    %cst_40 = arith.constant dense<0.000000e+00> : vector<1x8xf32>
    %90 = vector.multi_reduction <add>, %89, %cst_40 [2] : vector<1x8x16xf32> to vector<1x8xf32>
    %91 = vector.shape_cast %90 : vector<1x8xf32> to vector<1x8x1xf32>
    %cst_41 = arith.constant 9.35762291E-14 : f32
    %92 = vector.broadcast %cst_41 : f32 to vector<1x8x16xf32>
    %93 = arith.mulf %92, %54 : vector<1x8x16xf32>
    %94 = arith.mulf %89, %93 : vector<1x8x16xf32>
    %cst_42 = arith.constant dense<0.000000e+00> : vector<1x8xf32>
    %95 = vector.multi_reduction <add>, %94, %cst_42 [2] : vector<1x8x16xf32> to vector<1x8xf32>
    %96 = vector.shape_cast %95 : vector<1x8xf32> to vector<1x8x1xf32>
    %cst_43 = arith.constant 1.71390838E-15 : f32
    %97 = vector.broadcast %cst_43 : f32 to vector<1x8x16xf32>
    %98 = arith.mulf %97, %54 : vector<1x8x16xf32>
    %99 = arith.mulf %94, %98 : vector<1x8x16xf32>
    %cst_44 = arith.constant dense<0.000000e+00> : vector<1x8xf32>
    %100 = vector.multi_reduction <add>, %99, %cst_44 [2] : vector<1x8x16xf32> to vector<1x8xf32>
    %101 = vector.shape_cast %100 : vector<1x8xf32> to vector<1x8x1xf32>
    %102 = tpu.concatenate %43, %56, %61, %66, %71, %76, %81, %86, %91, %96, %101 in 2 : vector<1x8x1xf32>, vector<1x8x1xf32>, vector<1x8x1xf32>, vector<1x8x1xf32>, vector<1x8x1xf32>, vector<1x8x1xf32>, vector<1x8x1xf32>, vector<1x8x1xf32>, vector<1x8x1xf32>, vector<1x8x1xf32>, vector<1x8x1xf32> -> vector<1x8x11xf32>
    %cst_45 = arith.constant 1.000000e-10 : f32
    %103 = vector.broadcast %cst_45 : f32 to vector<1x8x11xf32>
    %104 = arith.maximumf %102, %103 : vector<1x8x11xf32>
    %105 = math.log %104 : vector<1x8x11xf32>
    %106 = vector.broadcast %0 : vector<1x8x1xf32> to vector<1x8x11xf32>
    %107 = arith.mulf %105, %106 : vector<1x8x11xf32>
    %108 = vector.broadcast %7 : vector<1x1x1xf32> to vector<1x8x11xf32>
    %109 = arith.mulf %102, %108 : vector<1x8x11xf32>
    %cst_46 = arith.constant 1.000000e-10 : f32
    %110 = vector.broadcast %cst_46 : f32 to vector<1x8x11xf32>
    %111 = arith.maximumf %109, %110 : vector<1x8x11xf32>
    %112 = math.log %111 : vector<1x8x11xf32>
    %113 = vector.broadcast %0 : vector<1x8x1xf32> to vector<1x8x11xf32>
    %114 = arith.mulf %112, %113 : vector<1x8x11xf32>
    %cst_47 = arith.constant dense<0.000000e+00> : vector<1x11xf32>
    %115 = vector.multi_reduction <add>, %107, %cst_47 [1] : vector<1x8x11xf32> to vector<1x11xf32>
    %c0_48 = arith.constant 0 : index
    %c0_49 = arith.constant 0 : index
    %c0_50 = arith.constant 0 : index
    %116 = vector.load %arg9[%c0_48, %c0_49, %c0_50] : memref<1x1x44xf32, #tpu.memory_space<vmem>>, vector<1x1x11xf32>
    %117 = vector.shape_cast %116 : vector<1x1x11xf32> to vector<1x11xf32>
    %118 = vector.shape_cast %115 : vector<1x11xf32> to vector<1x1x11xf32>
    tpu.vector_store %arg9[%c0_48, %c0_49, %c0_50], %118 {strides = array<i32>} : memref<1x1x44xf32, #tpu.memory_space<vmem>>, vector<1x1x11xf32>,
    %cst_51 = arith.constant dense<0.000000e+00> : vector<1x11xf32>
    %119 = vector.multi_reduction <add>, %114, %cst_51 [1] : vector<1x8x11xf32> to vector<1x11xf32>
    %c0_52 = arith.constant 0 : index
    %c0_53 = arith.constant 0 : index
    %c0_54 = arith.constant 0 : index
    %120 = vector.load %arg10[%c0_52, %c0_53, %c0_54] : memref<1x1x44xf32, #tpu.memory_space<vmem>>, vector<1x1x11xf32>
    %121 = vector.shape_cast %120 : vector<1x1x11xf32> to vector<1x11xf32>
    %122 = vector.shape_cast %119 : vector<1x11xf32> to vector<1x1x11xf32>
    tpu.vector_store %arg10[%c0_52, %c0_53, %c0_54], %122 {strides = array<i32>} : memref<1x1x44xf32, #tpu.memory_space<vmem>>, vector<1x1x11xf32>,
    %cst_55 = arith.constant 0.000000e+00 : f32
    %123 = vector.broadcast %cst_55 : f32 to vector<1x3x64xf32>
    %124 = tpu.concatenate %8, %123 in 1 : vector<1x8x64xf32>, vector<1x3x64xf32> -> vector<1x11x64xf32>
    %cst_56 = arith.constant 0.000000e+00 : f32
    %125 = vector.broadcast %cst_56 : f32 to vector<1x3x64xf32>
    %126 = tpu.concatenate %9, %125 in 1 : vector<1x16x64xf32>, vector<1x3x64xf32> -> vector<1x19x64xf32>
    %c0_57 = arith.constant 0 : index
    %c0_58 = arith.constant 0 : index
    %127 = vector.load %arg8[%c0_57, %c0_58] : memref<3x384xf32, #tpu.memory_space<vmem>>, vector<3x384xf32>
    %c0_59 = arith.constant 0 : index
    %c0_60 = arith.constant 0 : index
    %128 = vector.load %arg5[%c0_59, %c0_60] : memref<128x384xbf16, #tpu.memory_space<vmem>>, vector<128x384xbf16>
    %129 = vector.extract_strided_slice %127 {offsets = [0, 0], sizes = [1, 384], strides = [1, 1]} : vector<3x384xf32> to vector<1x384xf32>
    %130 = vector.extract_strided_slice %124 {offsets = [0, 0, 0], sizes = [1, 8, 64], strides = [1, 1, 1]} : vector<1x11x64xf32> to vector<1x8x64xf32>
    %131 = vector.extract_strided_slice %124 {offsets = [0, 1, 0], sizes = [1, 8, 64], strides = [1, 1, 1]} : vector<1x11x64xf32> to vector<1x8x64xf32>
    %132 = tpu.concatenate %130, %131 in 2 : vector<1x8x64xf32>, vector<1x8x64xf32> -> vector<1x8x128xf32>
    %133 = vector.extract_strided_slice %126 {offsets = [0, 0, 0], sizes = [1, 16, 64], strides = [1, 1, 1]} : vector<1x19x64xf32> to vector<1x16x64xf32>
    %134 = vector.extract_strided_slice %126 {offsets = [0, 1, 0], sizes = [1, 16, 64], strides = [1, 1, 1]} : vector<1x19x64xf32> to vector<1x16x64xf32>
    %135 = tpu.concatenate %133, %134 in 2 : vector<1x16x64xf32>, vector<1x16x64xf32> -> vector<1x16x128xf32>
    %136 = tpu.concatenate %132, %135 in 1 : vector<1x8x128xf32>, vector<1x16x128xf32> -> vector<1x24x128xf32>
    %137 = vector.shape_cast %136 : vector<1x24x128xf32> to vector<24x128xf32>
    %138 = arith.truncf %137 : vector<24x128xf32> to vector<24x128xbf16>
    %cst_61 = arith.constant dense<0.000000e+00> : vector<24x384xf32>
    %139 = tpu.matmul %138, %128, %cst_61 {dimension_numbers = #tpu.dot_dimension_numbers<[1], [0], [0], [1], [0, 0, 1, 1], [], []>} : vector<24x128xbf16>, vector<128x384xbf16>, vector<24x384xf32> -> vector<24x384xf32>
    %140 = vector.broadcast %129 : vector<1x384xf32> to vector<24x384xf32>
    %141 = arith.addf %139, %140 : vector<24x384xf32>
    %cst_62 = arith.constant 0.000000e+00 : f32
    %142 = vector.broadcast %cst_62 : f32 to vector<24x384xf32>
    %143 = arith.maximumf %141, %142 : vector<24x384xf32>
    %144 = vector.shape_cast %143 : vector<24x384xf32> to vector<1x24x384xf32>
    %145 = vector.extract_strided_slice %144 {offsets = [0, 0, 0], sizes = [1, 8, 384], strides = [1, 1, 1]} : vector<1x24x384xf32> to vector<1x8x384xf32>
    %146 = vector.extract_strided_slice %144 {offsets = [0, 8, 0], sizes = [1, 16, 384], strides = [1, 1, 1]} : vector<1x24x384xf32> to vector<1x16x384xf32>
    %147 = arith.mulf %145, %145 : vector<1x8x384xf32>
    %cst_63 = arith.constant dense<0.000000e+00> : vector<1x8xf32>
    %148 = vector.multi_reduction <add>, %147, %cst_63 [2] : vector<1x8x384xf32> to vector<1x8xf32>
    %149 = vector.shape_cast %148 : vector<1x8xf32> to vector<1x8x1xf32>
    %150 = math.sqrt %149 : vector<1x8x1xf32>
    %cst_64 = arith.constant 9.99999982E-14 : f32
    %151 = vector.broadcast %cst_64 : f32 to vector<1x8x1xf32>
    %152 = arith.addf %150, %151 : vector<1x8x1xf32>
    %cst_65 = arith.constant 1.000000e+00 : f32
    %153 = vector.broadcast %cst_65 : f32 to vector<1x8x1xf32>
    %154 = arith.divf %153, %152 : vector<1x8x1xf32>
    %155 = vector.broadcast %154 : vector<1x8x1xf32> to vector<1x8x384xf32>
    %156 = arith.mulf %145, %155 : vector<1x8x384xf32>
    %157 = arith.mulf %146, %146 : vector<1x16x384xf32>
    %cst_66 = arith.constant dense<0.000000e+00> : vector<1x16xf32>
    %158 = vector.multi_reduction <add>, %157, %cst_66 [2] : vector<1x16x384xf32> to vector<1x16xf32>
    %159 = vector.shape_cast %158 : vector<1x16xf32> to vector<1x16x1xf32>
    %160 = math.sqrt %159 : vector<1x16x1xf32>
    %cst_67 = arith.constant 9.99999982E-14 : f32
    %161 = vector.broadcast %cst_67 : f32 to vector<1x16x1xf32>
    %162 = arith.addf %160, %161 : vector<1x16x1xf32>
    %cst_68 = arith.constant 1.000000e+00 : f32
    %163 = vector.broadcast %cst_68 : f32 to vector<1x16x1xf32>
    %164 = arith.divf %163, %162 : vector<1x16x1xf32>
    %165 = vector.broadcast %164 : vector<1x16x1xf32> to vector<1x16x384xf32>
    %166 = arith.mulf %146, %165 : vector<1x16x384xf32>
    %167 = arith.truncf %156 : vector<1x8x384xf32> to vector<1x8x384xbf16>
    %168 = arith.truncf %166 : vector<1x16x384xf32> to vector<1x16x384xbf16>
    "tpu.trace_start"() <{level = 10 : i32, message = "bqf,bdf->bqd"}> : () -> ()
    %cst_69 = arith.constant dense<0.000000e+00> : vector<1x8x16xf32>
    %169 = tpu.matmul %167, %168, %cst_69 {dimension_numbers = #tpu.dot_dimension_numbers<[2], [2], [1], [1], [0, 0, 0, 1, 1, 1], [0], [0]>} : vector<1x8x384xbf16>, vector<1x16x384xbf16>, vector<1x8x16xf32> -> vector<1x8x16xf32>
    "tpu.trace_stop"() : () -> ()
    %170 = math.tanh %169 : vector<1x8x16xf32>
    %cst_70 = arith.constant 1.000000e+00 : f32
    %171 = vector.broadcast %cst_70 : f32 to vector<1x8x16xf32>
    %172 = arith.subf %170, %171 : vector<1x8x16xf32>
    %173 = arith.mulf %172, %172 : vector<1x8x16xf32>
    %cst_71 = arith.constant -5.000000e+07 : f32
    %174 = vector.broadcast %cst_71 : f32 to vector<1x8x16xf32>
    %175 = arith.mulf %174, %173 : vector<1x8x16xf32>
    %176 = math.exp %175 : vector<1x8x16xf32>
    %177 = vector.broadcast %1 : vector<1x1x16xf32> to vector<1x8x16xf32>
    %178 = arith.mulf %176, %177 : vector<1x8x16xf32>
    %cst_72 = arith.constant dense<0.000000e+00> : vector<1x8xf32>
    %179 = vector.multi_reduction <add>, %178, %cst_72 [2] : vector<1x8x16xf32> to vector<1x8xf32>
    %180 = vector.shape_cast %179 : vector<1x8xf32> to vector<1x8x1xf32>
    %cst_73 = arith.constant 0.899999976 : f32
    %181 = vector.broadcast %cst_73 : f32 to vector<1x8x16xf32>
    %182 = arith.subf %170, %181 : vector<1x8x16xf32>
    %183 = arith.mulf %182, %182 : vector<1x8x16xf32>
    %cst_74 = arith.constant -5.000000e+01 : f32
    %184 = vector.broadcast %cst_74 : f32 to vector<1x8x16xf32>
    %185 = arith.mulf %184, %183 : vector<1x8x16xf32>
    %186 = math.exp %185 : vector<1x8x16xf32>
    %187 = vector.broadcast %1 : vector<1x1x16xf32> to vector<1x8x16xf32>
    %188 = arith.mulf %186, %187 : vector<1x8x16xf32>
    %cst_75 = arith.constant -2.000000e+01 : f32
    %189 = vector.broadcast %cst_75 : f32 to vector<1x8x16xf32>
    %190 = arith.mulf %189, %182 : vector<1x8x16xf32>
    %191 = math.exp %190 : vector<1x8x16xf32>
    %cst_76 = arith.constant dense<0.000000e+00> : vector<1x8xf32>
    %192 = vector.multi_reduction <add>, %188, %cst_76 [2] : vector<1x8x16xf32> to vector<1x8xf32>
    %193 = vector.shape_cast %192 : vector<1x8xf32> to vector<1x8x1xf32>
    %cst_77 = arith.constant 0.135335281 : f32
    %194 = vector.broadcast %cst_77 : f32 to vector<1x8x16xf32>
    %195 = arith.mulf %194, %191 : vector<1x8x16xf32>
    %196 = arith.mulf %188, %195 : vector<1x8x16xf32>
    %cst_78 = arith.constant dense<0.000000e+00> : vector<1x8xf32>
    %197 = vector.multi_reduction <add>, %196, %cst_78 [2] : vector<1x8x16xf32> to vector<1x8xf32>
    %198 = vector.shape_cast %197 : vector<1x8xf32> to vector<1x8x1xf32>
    %cst_79 = arith.constant 0.00247875229 : f32
    %199 = vector.broadcast %cst_79 : f32 to vector<1x8x16xf32>
    %200 = arith.mulf %199, %191 : vector<1x8x16xf32>
    %201 = arith.mulf %196, %200 : vector<1x8x16xf32>
    %cst_80 = arith.constant dense<0.000000e+00> : vector<1x8xf32>
    %202 = vector.multi_reduction <add>, %201, %cst_80 [2] : vector<1x8x16xf32> to vector<1x8xf32>
    %203 = vector.shape_cast %202 : vector<1x8xf32> to vector<1x8x1xf32>
    %cst_81 = arith.constant 4.5399931E-5 : f32
    %204 = vector.broadcast %cst_81 : f32 to vector<1x8x16xf32>
    %205 = arith.mulf %204, %191 : vector<1x8x16xf32>
    %206 = arith.mulf %201, %205 : vector<1x8x16xf32>
    %cst_82 = arith.constant dense<0.000000e+00> : vector<1x8xf32>
    %207 = vector.multi_reduction <add>, %206, %cst_82 [2] : vector<1x8x16xf32> to vector<1x8xf32>
    %208 = vector.shape_cast %207 : vector<1x8xf32> to vector<1x8x1xf32>
    %cst_83 = arith.constant 8.31528723E-7 : f32
    %209 = vector.broadcast %cst_83 : f32 to vector<1x8x16xf32>
    %210 = arith.mulf %209, %191 : vector<1x8x16xf32>
    %211 = arith.mulf %206, %210 : vector<1x8x16xf32>
    %cst_84 = arith.constant dense<0.000000e+00> : vector<1x8xf32>
    %212 = vector.multi_reduction <add>, %211, %cst_84 [2] : vector<1x8x16xf32> to vector<1x8xf32>
    %213 = vector.shape_cast %212 : vector<1x8xf32> to vector<1x8x1xf32>
    %cst_85 = arith.constant 1.52299791E-8 : f32
    %214 = vector.broadcast %cst_85 : f32 to vector<1x8x16xf32>
    %215 = arith.mulf %214, %191 : vector<1x8x16xf32>
    %216 = arith.mulf %211, %215 : vector<1x8x16xf32>
    %cst_86 = arith.constant dense<0.000000e+00> : vector<1x8xf32>
    %217 = vector.multi_reduction <add>, %216, %cst_86 [2] : vector<1x8x16xf32> to vector<1x8xf32>
    %218 = vector.shape_cast %217 : vector<1x8xf32> to vector<1x8x1xf32>
    %cst_87 = arith.constant 2.7894681E-10 : f32
    %219 = vector.broadcast %cst_87 : f32 to vector<1x8x16xf32>
    %220 = arith.mulf %219, %191 : vector<1x8x16xf32>
    %221 = arith.mulf %216, %220 : vector<1x8x16xf32>
    %cst_88 = arith.constant dense<0.000000e+00> : vector<1x8xf32>
    %222 = vector.multi_reduction <add>, %221, %cst_88 [2] : vector<1x8x16xf32> to vector<1x8xf32>
    %223 = vector.shape_cast %222 : vector<1x8xf32> to vector<1x8x1xf32>
    %cst_89 = arith.constant 5.10908893E-12 : f32
    %224 = vector.broadcast %cst_89 : f32 to vector<1x8x16xf32>
    %225 = arith.mulf %224, %191 : vector<1x8x16xf32>
    %226 = arith.mulf %221, %225 : vector<1x8x16xf32>
    %cst_90 = arith.constant dense<0.000000e+00> : vector<1x8xf32>
    %227 = vector.multi_reduction <add>, %226, %cst_90 [2] : vector<1x8x16xf32> to vector<1x8xf32>
    %228 = vector.shape_cast %227 : vector<1x8xf32> to vector<1x8x1xf32>
    %cst_91 = arith.constant 9.35762291E-14 : f32
    %229 = vector.broadcast %cst_91 : f32 to vector<1x8x16xf32>
    %230 = arith.mulf %229, %191 : vector<1x8x16xf32>
    %231 = arith.mulf %226, %230 : vector<1x8x16xf32>
    %cst_92 = arith.constant dense<0.000000e+00> : vector<1x8xf32>
    %232 = vector.multi_reduction <add>, %231, %cst_92 [2] : vector<1x8x16xf32> to vector<1x8xf32>
    %233 = vector.shape_cast %232 : vector<1x8xf32> to vector<1x8x1xf32>
    %cst_93 = arith.constant 1.71390838E-15 : f32
    %234 = vector.broadcast %cst_93 : f32 to vector<1x8x16xf32>
    %235 = arith.mulf %234, %191 : vector<1x8x16xf32>
    %236 = arith.mulf %231, %235 : vector<1x8x16xf32>
    %cst_94 = arith.constant dense<0.000000e+00> : vector<1x8xf32>
    %237 = vector.multi_reduction <add>, %236, %cst_94 [2] : vector<1x8x16xf32> to vector<1x8xf32>
    %238 = vector.shape_cast %237 : vector<1x8xf32> to vector<1x8x1xf32>
    %239 = tpu.concatenate %180, %193, %198, %203, %208, %213, %218, %223, %228, %233, %238 in 2 : vector<1x8x1xf32>, vector<1x8x1xf32>, vector<1x8x1xf32>, vector<1x8x1xf32>, vector<1x8x1xf32>, vector<1x8x1xf32>, vector<1x8x1xf32>, vector<1x8x1xf32>, vector<1x8x1xf32>, vector<1x8x1xf32>, vector<1x8x1xf32> -> vector<1x8x11xf32>
    %cst_95 = arith.constant 1.000000e-10 : f32
    %240 = vector.broadcast %cst_95 : f32 to vector<1x8x11xf32>
    %241 = arith.maximumf %239, %240 : vector<1x8x11xf32>
    %242 = math.log %241 : vector<1x8x11xf32>
    %243 = vector.broadcast %0 : vector<1x8x1xf32> to vector<1x8x11xf32>
    %244 = arith.mulf %242, %243 : vector<1x8x11xf32>
    %245 = vector.broadcast %7 : vector<1x1x1xf32> to vector<1x8x11xf32>
    %246 = arith.mulf %239, %245 : vector<1x8x11xf32>
    %cst_96 = arith.constant 1.000000e-10 : f32
    %247 = vector.broadcast %cst_96 : f32 to vector<1x8x11xf32>
    %248 = arith.maximumf %246, %247 : vector<1x8x11xf32>
    %249 = math.log %248 : vector<1x8x11xf32>
    %250 = vector.broadcast %0 : vector<1x8x1xf32> to vector<1x8x11xf32>
    %251 = arith.mulf %249, %250 : vector<1x8x11xf32>
    %cst_97 = arith.constant dense<0.000000e+00> : vector<1x11xf32>
    %252 = vector.multi_reduction <add>, %244, %cst_97 [1] : vector<1x8x11xf32> to vector<1x11xf32>
    %c0_98 = arith.constant 0 : index
    %c0_99 = arith.constant 0 : index
    %c11 = arith.constant 11 : index
    %253 = vector.load %arg9[%c0_98, %c0_99, %c11] : memref<1x1x44xf32, #tpu.memory_space<vmem>>, vector<1x1x11xf32>
    %254 = vector.shape_cast %253 : vector<1x1x11xf32> to vector<1x11xf32>
    %255 = vector.shape_cast %252 : vector<1x11xf32> to vector<1x1x11xf32>
    tpu.vector_store %arg9[%c0_98, %c0_99, %c11], %255 {strides = array<i32>} : memref<1x1x44xf32, #tpu.memory_space<vmem>>, vector<1x1x11xf32>,
    %cst_100 = arith.constant dense<0.000000e+00> : vector<1x11xf32>
    %256 = vector.multi_reduction <add>, %251, %cst_100 [1] : vector<1x8x11xf32> to vector<1x11xf32>
    %c0_101 = arith.constant 0 : index
    %c0_102 = arith.constant 0 : index
    %c11_103 = arith.constant 11 : index
    %257 = vector.load %arg10[%c0_101, %c0_102, %c11_103] : memref<1x1x44xf32, #tpu.memory_space<vmem>>, vector<1x1x11xf32>
    %258 = vector.shape_cast %257 : vector<1x1x11xf32> to vector<1x11xf32>
    %259 = vector.shape_cast %256 : vector<1x11xf32> to vector<1x1x11xf32>
    tpu.vector_store %arg10[%c0_101, %c0_102, %c11_103], %259 {strides = array<i32>} : memref<1x1x44xf32, #tpu.memory_space<vmem>>, vector<1x1x11xf32>,
    %c0_104 = arith.constant 0 : index
    %c0_105 = arith.constant 0 : index
    %260 = vector.load %arg6[%c0_104, %c0_105] : memref<192x384xbf16, #tpu.memory_space<vmem>>, vector<192x384xbf16>
    %261 = vector.extract_strided_slice %127 {offsets = [1, 0], sizes = [1, 384], strides = [1, 1]} : vector<3x384xf32> to vector<1x384xf32>
    %262 = vector.extract_strided_slice %124 {offsets = [0, 0, 0], sizes = [1, 8, 64], strides = [1, 1, 1]} : vector<1x11x64xf32> to vector<1x8x64xf32>
    %263 = vector.extract_strided_slice %124 {offsets = [0, 1, 0], sizes = [1, 8, 64], strides = [1, 1, 1]} : vector<1x11x64xf32> to vector<1x8x64xf32>
    %264 = vector.extract_strided_slice %124 {offsets = [0, 2, 0], sizes = [1, 8, 64], strides = [1, 1, 1]} : vector<1x11x64xf32> to vector<1x8x64xf32>
    %265 = tpu.concatenate %262, %263, %264 in 2 : vector<1x8x64xf32>, vector<1x8x64xf32>, vector<1x8x64xf32> -> vector<1x8x192xf32>
    %266 = vector.extract_strided_slice %126 {offsets = [0, 0, 0], sizes = [1, 16, 64], strides = [1, 1, 1]} : vector<1x19x64xf32> to vector<1x16x64xf32>
    %267 = vector.extract_strided_slice %126 {offsets = [0, 1, 0], sizes = [1, 16, 64], strides = [1, 1, 1]} : vector<1x19x64xf32> to vector<1x16x64xf32>
    %268 = vector.extract_strided_slice %126 {offsets = [0, 2, 0], sizes = [1, 16, 64], strides = [1, 1, 1]} : vector<1x19x64xf32> to vector<1x16x64xf32>
    %269 = tpu.concatenate %266, %267, %268 in 2 : vector<1x16x64xf32>, vector<1x16x64xf32>, vector<1x16x64xf32> -> vector<1x16x192xf32>
    %270 = tpu.concatenate %265, %269 in 1 : vector<1x8x192xf32>, vector<1x16x192xf32> -> vector<1x24x192xf32>
    %271 = vector.shape_cast %270 : vector<1x24x192xf32> to vector<24x192xf32>
    %272 = arith.truncf %271 : vector<24x192xf32> to vector<24x192xbf16>
    %cst_106 = arith.constant dense<0.000000e+00> : vector<24x384xf32>
    %273 = tpu.matmul %272, %260, %cst_106 {dimension_numbers = #tpu.dot_dimension_numbers<[1], [0], [0], [1], [0, 0, 1, 1], [], []>} : vector<24x192xbf16>, vector<192x384xbf16>, vector<24x384xf32> -> vector<24x384xf32>
    %274 = vector.broadcast %261 : vector<1x384xf32> to vector<24x384xf32>
    %275 = arith.addf %273, %274 : vector<24x384xf32>
    %cst_107 = arith.constant 0.000000e+00 : f32
    %276 = vector.broadcast %cst_107 : f32 to vector<24x384xf32>
    %277 = arith.maximumf %275, %276 : vector<24x384xf32>
    %278 = vector.shape_cast %277 : vector<24x384xf32> to vector<1x24x384xf32>
    %279 = vector.extract_strided_slice %278 {offsets = [0, 0, 0], sizes = [1, 8, 384], strides = [1, 1, 1]} : vector<1x24x384xf32> to vector<1x8x384xf32>
    %280 = vector.extract_strided_slice %278 {offsets = [0, 8, 0], sizes = [1, 16, 384], strides = [1, 1, 1]} : vector<1x24x384xf32> to vector<1x16x384xf32>
    %281 = arith.mulf %279, %279 : vector<1x8x384xf32>
    %cst_108 = arith.constant dense<0.000000e+00> : vector<1x8xf32>
    %282 = vector.multi_reduction <add>, %281, %cst_108 [2] : vector<1x8x384xf32> to vector<1x8xf32>
    %283 = vector.shape_cast %282 : vector<1x8xf32> to vector<1x8x1xf32>
    %284 = math.sqrt %283 : vector<1x8x1xf32>
    %cst_109 = arith.constant 9.99999982E-14 : f32
    %285 = vector.broadcast %cst_109 : f32 to vector<1x8x1xf32>
    %286 = arith.addf %284, %285 : vector<1x8x1xf32>
    %cst_110 = arith.constant 1.000000e+00 : f32
    %287 = vector.broadcast %cst_110 : f32 to vector<1x8x1xf32>
    %288 = arith.divf %287, %286 : vector<1x8x1xf32>
    %289 = vector.broadcast %288 : vector<1x8x1xf32> to vector<1x8x384xf32>
    %290 = arith.mulf %279, %289 : vector<1x8x384xf32>
    %291 = arith.mulf %280, %280 : vector<1x16x384xf32>
    %cst_111 = arith.constant dense<0.000000e+00> : vector<1x16xf32>
    %292 = vector.multi_reduction <add>, %291, %cst_111 [2] : vector<1x16x384xf32> to vector<1x16xf32>
    %293 = vector.shape_cast %292 : vector<1x16xf32> to vector<1x16x1xf32>
    %294 = math.sqrt %293 : vector<1x16x1xf32>
    %cst_112 = arith.constant 9.99999982E-14 : f32
    %295 = vector.broadcast %cst_112 : f32 to vector<1x16x1xf32>
    %296 = arith.addf %294, %295 : vector<1x16x1xf32>
    %cst_113 = arith.constant 1.000000e+00 : f32
    %297 = vector.broadcast %cst_113 : f32 to vector<1x16x1xf32>
    %298 = arith.divf %297, %296 : vector<1x16x1xf32>
    %299 = vector.broadcast %298 : vector<1x16x1xf32> to vector<1x16x384xf32>
    %300 = arith.mulf %280, %299 : vector<1x16x384xf32>
    %301 = arith.truncf %290 : vector<1x8x384xf32> to vector<1x8x384xbf16>
    %302 = arith.truncf %300 : vector<1x16x384xf32> to vector<1x16x384xbf16>
    "tpu.trace_start"() <{level = 10 : i32, message = "bqf,bdf->bqd"}> : () -> ()
    %cst_114 = arith.constant dense<0.000000e+00> : vector<1x8x16xf32>
    %303 = tpu.matmul %301, %302, %cst_114 {dimension_numbers = #tpu.dot_dimension_numbers<[2], [2], [1], [1], [0, 0, 0, 1, 1, 1], [0], [0]>} : vector<1x8x384xbf16>, vector<1x16x384xbf16>, vector<1x8x16xf32> -> vector<1x8x16xf32>
    "tpu.trace_stop"() : () -> ()
    %304 = math.tanh %303 : vector<1x8x16xf32>
    %cst_115 = arith.constant 1.000000e+00 : f32
    %305 = vector.broadcast %cst_115 : f32 to vector<1x8x16xf32>
    %306 = arith.subf %304, %305 : vector<1x8x16xf32>
    %307 = arith.mulf %306, %306 : vector<1x8x16xf32>
    %cst_116 = arith.constant -5.000000e+07 : f32
    %308 = vector.broadcast %cst_116 : f32 to vector<1x8x16xf32>
    %309 = arith.mulf %308, %307 : vector<1x8x16xf32>
    %310 = math.exp %309 : vector<1x8x16xf32>
    %311 = vector.broadcast %1 : vector<1x1x16xf32> to vector<1x8x16xf32>
    %312 = arith.mulf %310, %311 : vector<1x8x16xf32>
    %cst_117 = arith.constant dense<0.000000e+00> : vector<1x8xf32>
    %313 = vector.multi_reduction <add>, %312, %cst_117 [2] : vector<1x8x16xf32> to vector<1x8xf32>
    %314 = vector.shape_cast %313 : vector<1x8xf32> to vector<1x8x1xf32>
    %cst_118 = arith.constant 0.899999976 : f32
    %315 = vector.broadcast %cst_118 : f32 to vector<1x8x16xf32>
    %316 = arith.subf %304, %315 : vector<1x8x16xf32>
    %317 = arith.mulf %316, %316 : vector<1x8x16xf32>
    %cst_119 = arith.constant -5.000000e+01 : f32
    %318 = vector.broadcast %cst_119 : f32 to vector<1x8x16xf32>
    %319 = arith.mulf %318, %317 : vector<1x8x16xf32>
    %320 = math.exp %319 : vector<1x8x16xf32>
    %321 = vector.broadcast %1 : vector<1x1x16xf32> to vector<1x8x16xf32>
    %322 = arith.mulf %320, %321 : vector<1x8x16xf32>
    %cst_120 = arith.constant -2.000000e+01 : f32
    %323 = vector.broadcast %cst_120 : f32 to vector<1x8x16xf32>
    %324 = arith.mulf %323, %316 : vector<1x8x16xf32>
    %325 = math.exp %324 : vector<1x8x16xf32>
    %cst_121 = arith.constant dense<0.000000e+00> : vector<1x8xf32>
    %326 = vector.multi_reduction <add>, %322, %cst_121 [2] : vector<1x8x16xf32> to vector<1x8xf32>
    %327 = vector.shape_cast %326 : vector<1x8xf32> to vector<1x8x1xf32>
    %cst_122 = arith.constant 0.135335281 : f32
    %328 = vector.broadcast %cst_122 : f32 to vector<1x8x16xf32>
    %329 = arith.mulf %328, %325 : vector<1x8x16xf32>
    %330 = arith.mulf %322, %329 : vector<1x8x16xf32>
    %cst_123 = arith.constant dense<0.000000e+00> : vector<1x8xf32>
    %331 = vector.multi_reduction <add>, %330, %cst_123 [2] : vector<1x8x16xf32> to vector<1x8xf32>
    %332 = vector.shape_cast %331 : vector<1x8xf32> to vector<1x8x1xf32>
    %cst_124 = arith.constant 0.00247875229 : f32
    %333 = vector.broadcast %cst_124 : f32 to vector<1x8x16xf32>
    %334 = arith.mulf %333, %325 : vector<1x8x16xf32>
    %335 = arith.mulf %330, %334 : vector<1x8x16xf32>
    %cst_125 = arith.constant dense<0.000000e+00> : vector<1x8xf32>
    %336 = vector.multi_reduction <add>, %335, %cst_125 [2] : vector<1x8x16xf32> to vector<1x8xf32>
    %337 = vector.shape_cast %336 : vector<1x8xf32> to vector<1x8x1xf32>
    %cst_126 = arith.constant 4.5399931E-5 : f32
    %338 = vector.broadcast %cst_126 : f32 to vector<1x8x16xf32>
    %339 = arith.mulf %338, %325 : vector<1x8x16xf32>
    %340 = arith.mulf %335, %339 : vector<1x8x16xf32>
    %cst_127 = arith.constant dense<0.000000e+00> : vector<1x8xf32>
    %341 = vector.multi_reduction <add>, %340, %cst_127 [2] : vector<1x8x16xf32> to vector<1x8xf32>
    %342 = vector.shape_cast %341 : vector<1x8xf32> to vector<1x8x1xf32>
    %cst_128 = arith.constant 8.31528723E-7 : f32
    %343 = vector.broadcast %cst_128 : f32 to vector<1x8x16xf32>
    %344 = arith.mulf %343, %325 : vector<1x8x16xf32>
    %345 = arith.mulf %340, %344 : vector<1x8x16xf32>
    %cst_129 = arith.constant dense<0.000000e+00> : vector<1x8xf32>
    %346 = vector.multi_reduction <add>, %345, %cst_129 [2] : vector<1x8x16xf32> to vector<1x8xf32>
    %347 = vector.shape_cast %346 : vector<1x8xf32> to vector<1x8x1xf32>
    %cst_130 = arith.constant 1.52299791E-8 : f32
    %348 = vector.broadcast %cst_130 : f32 to vector<1x8x16xf32>
    %349 = arith.mulf %348, %325 : vector<1x8x16xf32>
    %350 = arith.mulf %345, %349 : vector<1x8x16xf32>
    %cst_131 = arith.constant dense<0.000000e+00> : vector<1x8xf32>
    %351 = vector.multi_reduction <add>, %350, %cst_131 [2] : vector<1x8x16xf32> to vector<1x8xf32>
    %352 = vector.shape_cast %351 : vector<1x8xf32> to vector<1x8x1xf32>
    %cst_132 = arith.constant 2.7894681E-10 : f32
    %353 = vector.broadcast %cst_132 : f32 to vector<1x8x16xf32>
    %354 = arith.mulf %353, %325 : vector<1x8x16xf32>
    %355 = arith.mulf %350, %354 : vector<1x8x16xf32>
    %cst_133 = arith.constant dense<0.000000e+00> : vector<1x8xf32>
    %356 = vector.multi_reduction <add>, %355, %cst_133 [2] : vector<1x8x16xf32> to vector<1x8xf32>
    %357 = vector.shape_cast %356 : vector<1x8xf32> to vector<1x8x1xf32>
    %cst_134 = arith.constant 5.10908893E-12 : f32
    %358 = vector.broadcast %cst_134 : f32 to vector<1x8x16xf32>
    %359 = arith.mulf %358, %325 : vector<1x8x16xf32>
    %360 = arith.mulf %355, %359 : vector<1x8x16xf32>
    %cst_135 = arith.constant dense<0.000000e+00> : vector<1x8xf32>
    %361 = vector.multi_reduction <add>, %360, %cst_135 [2] : vector<1x8x16xf32> to vector<1x8xf32>
    %362 = vector.shape_cast %361 : vector<1x8xf32> to vector<1x8x1xf32>
    %cst_136 = arith.constant 9.35762291E-14 : f32
    %363 = vector.broadcast %cst_136 : f32 to vector<1x8x16xf32>
    %364 = arith.mulf %363, %325 : vector<1x8x16xf32>
    %365 = arith.mulf %360, %364 : vector<1x8x16xf32>
    %cst_137 = arith.constant dense<0.000000e+00> : vector<1x8xf32>
    %366 = vector.multi_reduction <add>, %365, %cst_137 [2] : vector<1x8x16xf32> to vector<1x8xf32>
    %367 = vector.shape_cast %366 : vector<1x8xf32> to vector<1x8x1xf32>
    %cst_138 = arith.constant 1.71390838E-15 : f32
    %368 = vector.broadcast %cst_138 : f32 to vector<1x8x16xf32>
    %369 = arith.mulf %368, %325 : vector<1x8x16xf32>
    %370 = arith.mulf %365, %369 : vector<1x8x16xf32>
    %cst_139 = arith.constant dense<0.000000e+00> : vector<1x8xf32>
    %371 = vector.multi_reduction <add>, %370, %cst_139 [2] : vector<1x8x16xf32> to vector<1x8xf32>
    %372 = vector.shape_cast %371 : vector<1x8xf32> to vector<1x8x1xf32>
    %373 = tpu.concatenate %314, %327, %332, %337, %342, %347, %352, %357, %362, %367, %372 in 2 : vector<1x8x1xf32>, vector<1x8x1xf32>, vector<1x8x1xf32>, vector<1x8x1xf32>, vector<1x8x1xf32>, vector<1x8x1xf32>, vector<1x8x1xf32>, vector<1x8x1xf32>, vector<1x8x1xf32>, vector<1x8x1xf32>, vector<1x8x1xf32> -> vector<1x8x11xf32>
    %cst_140 = arith.constant 1.000000e-10 : f32
    %374 = vector.broadcast %cst_140 : f32 to vector<1x8x11xf32>
    %375 = arith.maximumf %373, %374 : vector<1x8x11xf32>
    %376 = math.log %375 : vector<1x8x11xf32>
    %377 = vector.broadcast %0 : vector<1x8x1xf32> to vector<1x8x11xf32>
    %378 = arith.mulf %376, %377 : vector<1x8x11xf32>
    %379 = vector.broadcast %7 : vector<1x1x1xf32> to vector<1x8x11xf32>
    %380 = arith.mulf %373, %379 : vector<1x8x11xf32>
    %cst_141 = arith.constant 1.000000e-10 : f32
    %381 = vector.broadcast %cst_141 : f32 to vector<1x8x11xf32>
    %382 = arith.maximumf %380, %381 : vector<1x8x11xf32>
    %383 = math.log %382 : vector<1x8x11xf32>
    %384 = vector.broadcast %0 : vector<1x8x1xf32> to vector<1x8x11xf32>
    %385 = arith.mulf %383, %384 : vector<1x8x11xf32>
    %cst_142 = arith.constant dense<0.000000e+00> : vector<1x11xf32>
    %386 = vector.multi_reduction <add>, %378, %cst_142 [1] : vector<1x8x11xf32> to vector<1x11xf32>
    %c0_143 = arith.constant 0 : index
    %c0_144 = arith.constant 0 : index
    %c22 = arith.constant 22 : index
    %387 = vector.load %arg9[%c0_143, %c0_144, %c22] : memref<1x1x44xf32, #tpu.memory_space<vmem>>, vector<1x1x11xf32>
    %388 = vector.shape_cast %387 : vector<1x1x11xf32> to vector<1x11xf32>
    %389 = vector.shape_cast %386 : vector<1x11xf32> to vector<1x1x11xf32>
    tpu.vector_store %arg9[%c0_143, %c0_144, %c22], %389 {strides = array<i32>} : memref<1x1x44xf32, #tpu.memory_space<vmem>>, vector<1x1x11xf32>,
    %cst_145 = arith.constant dense<0.000000e+00> : vector<1x11xf32>
    %390 = vector.multi_reduction <add>, %385, %cst_145 [1] : vector<1x8x11xf32> to vector<1x11xf32>
    %c0_146 = arith.constant 0 : index
    %c0_147 = arith.constant 0 : index
    %c22_148 = arith.constant 22 : index
    %391 = vector.load %arg10[%c0_146, %c0_147, %c22_148] : memref<1x1x44xf32, #tpu.memory_space<vmem>>, vector<1x1x11xf32>
    %392 = vector.shape_cast %391 : vector<1x1x11xf32> to vector<1x11xf32>
    %393 = vector.shape_cast %390 : vector<1x11xf32> to vector<1x1x11xf32>
    tpu.vector_store %arg10[%c0_146, %c0_147, %c22_148], %393 {strides = array<i32>} : memref<1x1x44xf32, #tpu.memory_space<vmem>>, vector<1x1x11xf32>,
    %c0_149 = arith.constant 0 : index
    %c0_150 = arith.constant 0 : index
    %394 = vector.load %arg7[%c0_149, %c0_150] : memref<256x384xbf16, #tpu.memory_space<vmem>>, vector<256x384xbf16>
    %395 = vector.extract_strided_slice %127 {offsets = [2, 0], sizes = [1, 384], strides = [1, 1]} : vector<3x384xf32> to vector<1x384xf32>
    %396 = vector.extract_strided_slice %124 {offsets = [0, 0, 0], sizes = [1, 8, 64], strides = [1, 1, 1]} : vector<1x11x64xf32> to vector<1x8x64xf32>
    %397 = vector.extract_strided_slice %124 {offsets = [0, 1, 0], sizes = [1, 8, 64], strides = [1, 1, 1]} : vector<1x11x64xf32> to vector<1x8x64xf32>
    %398 = vector.extract_strided_slice %124 {offsets = [0, 2, 0], sizes = [1, 8, 64], strides = [1, 1, 1]} : vector<1x11x64xf32> to vector<1x8x64xf32>
    %399 = vector.extract_strided_slice %124 {offsets = [0, 3, 0], sizes = [1, 8, 64], strides = [1, 1, 1]} : vector<1x11x64xf32> to vector<1x8x64xf32>
    %400 = tpu.concatenate %396, %397, %398, %399 in 2 : vector<1x8x64xf32>, vector<1x8x64xf32>, vector<1x8x64xf32>, vector<1x8x64xf32> -> vector<1x8x256xf32>
    %401 = vector.extract_strided_slice %126 {offsets = [0, 0, 0], sizes = [1, 16, 64], strides = [1, 1, 1]} : vector<1x19x64xf32> to vector<1x16x64xf32>
    %402 = vector.extract_strided_slice %126 {offsets = [0, 1, 0], sizes = [1, 16, 64], strides = [1, 1, 1]} : vector<1x19x64xf32> to vector<1x16x64xf32>
    %403 = vector.extract_strided_slice %126 {offsets = [0, 2, 0], sizes = [1, 16, 64], strides = [1, 1, 1]} : vector<1x19x64xf32> to vector<1x16x64xf32>
    %404 = vector.extract_strided_slice %126 {offsets = [0, 3, 0], sizes = [1, 16, 64], strides = [1, 1, 1]} : vector<1x19x64xf32> to vector<1x16x64xf32>
    %405 = tpu.concatenate %401, %402, %403, %404 in 2 : vector<1x16x64xf32>, vector<1x16x64xf32>, vector<1x16x64xf32>, vector<1x16x64xf32> -> vector<1x16x256xf32>
    %406 = tpu.concatenate %400, %405 in 1 : vector<1x8x256xf32>, vector<1x16x256xf32> -> vector<1x24x256xf32>
    %407 = vector.shape_cast %406 : vector<1x24x256xf32> to vector<24x256xf32>
    %408 = arith.truncf %407 : vector<24x256xf32> to vector<24x256xbf16>
    %cst_151 = arith.constant dense<0.000000e+00> : vector<24x384xf32>
    %409 = tpu.matmul %408, %394, %cst_151 {dimension_numbers = #tpu.dot_dimension_numbers<[1], [0], [0], [1], [0, 0, 1, 1], [], []>} : vector<24x256xbf16>, vector<256x384xbf16>, vector<24x384xf32> -> vector<24x384xf32>
    %410 = vector.broadcast %395 : vector<1x384xf32> to vector<24x384xf32>
    %411 = arith.addf %409, %410 : vector<24x384xf32>
    %cst_152 = arith.constant 0.000000e+00 : f32
    %412 = vector.broadcast %cst_152 : f32 to vector<24x384xf32>
    %413 = arith.maximumf %411, %412 : vector<24x384xf32>
    %414 = vector.shape_cast %413 : vector<24x384xf32> to vector<1x24x384xf32>
    %415 = vector.extract_strided_slice %414 {offsets = [0, 0, 0], sizes = [1, 8, 384], strides = [1, 1, 1]} : vector<1x24x384xf32> to vector<1x8x384xf32>
    %416 = vector.extract_strided_slice %414 {offsets = [0, 8, 0], sizes = [1, 16, 384], strides = [1, 1, 1]} : vector<1x24x384xf32> to vector<1x16x384xf32>
    %417 = arith.mulf %415, %415 : vector<1x8x384xf32>
    %cst_153 = arith.constant dense<0.000000e+00> : vector<1x8xf32>
    %418 = vector.multi_reduction <add>, %417, %cst_153 [2] : vector<1x8x384xf32> to vector<1x8xf32>
    %419 = vector.shape_cast %418 : vector<1x8xf32> to vector<1x8x1xf32>
    %420 = math.sqrt %419 : vector<1x8x1xf32>
    %cst_154 = arith.constant 9.99999982E-14 : f32
    %421 = vector.broadcast %cst_154 : f32 to vector<1x8x1xf32>
    %422 = arith.addf %420, %421 : vector<1x8x1xf32>
    %cst_155 = arith.constant 1.000000e+00 : f32
    %423 = vector.broadcast %cst_155 : f32 to vector<1x8x1xf32>
    %424 = arith.divf %423, %422 : vector<1x8x1xf32>
    %425 = vector.broadcast %424 : vector<1x8x1xf32> to vector<1x8x384xf32>
    %426 = arith.mulf %415, %425 : vector<1x8x384xf32>
    %427 = arith.mulf %416, %416 : vector<1x16x384xf32>
    %cst_156 = arith.constant dense<0.000000e+00> : vector<1x16xf32>
    %428 = vector.multi_reduction <add>, %427, %cst_156 [2] : vector<1x16x384xf32> to vector<1x16xf32>
    %429 = vector.shape_cast %428 : vector<1x16xf32> to vector<1x16x1xf32>
    %430 = math.sqrt %429 : vector<1x16x1xf32>
    %cst_157 = arith.constant 9.99999982E-14 : f32
    %431 = vector.broadcast %cst_157 : f32 to vector<1x16x1xf32>
    %432 = arith.addf %430, %431 : vector<1x16x1xf32>
    %cst_158 = arith.constant 1.000000e+00 : f32
    %433 = vector.broadcast %cst_158 : f32 to vector<1x16x1xf32>
    %434 = arith.divf %433, %432 : vector<1x16x1xf32>
    %435 = vector.broadcast %434 : vector<1x16x1xf32> to vector<1x16x384xf32>
    %436 = arith.mulf %416, %435 : vector<1x16x384xf32>
    %437 = arith.truncf %426 : vector<1x8x384xf32> to vector<1x8x384xbf16>
    %438 = arith.truncf %436 : vector<1x16x384xf32> to vector<1x16x384xbf16>
    "tpu.trace_start"() <{level = 10 : i32, message = "bqf,bdf->bqd"}> : () -> ()
    %cst_159 = arith.constant dense<0.000000e+00> : vector<1x8x16xf32>
    %439 = tpu.matmul %437, %438, %cst_159 {dimension_numbers = #tpu.dot_dimension_numbers<[2], [2], [1], [1], [0, 0, 0, 1, 1, 1], [0], [0]>} : vector<1x8x384xbf16>, vector<1x16x384xbf16>, vector<1x8x16xf32> -> vector<1x8x16xf32>
    "tpu.trace_stop"() : () -> ()
    %440 = math.tanh %439 : vector<1x8x16xf32>
    %cst_160 = arith.constant 1.000000e+00 : f32
    %441 = vector.broadcast %cst_160 : f32 to vector<1x8x16xf32>
    %442 = arith.subf %440, %441 : vector<1x8x16xf32>
    %443 = arith.mulf %442, %442 : vector<1x8x16xf32>
    %cst_161 = arith.constant -5.000000e+07 : f32
    %444 = vector.broadcast %cst_161 : f32 to vector<1x8x16xf32>
    %445 = arith.mulf %444, %443 : vector<1x8x16xf32>
    %446 = math.exp %445 : vector<1x8x16xf32>
    %447 = vector.broadcast %1 : vector<1x1x16xf32> to vector<1x8x16xf32>
    %448 = arith.mulf %446, %447 : vector<1x8x16xf32>
    %cst_162 = arith.constant dense<0.000000e+00> : vector<1x8xf32>
    %449 = vector.multi_reduction <add>, %448, %cst_162 [2] : vector<1x8x16xf32> to vector<1x8xf32>
    %450 = vector.shape_cast %449 : vector<1x8xf32> to vector<1x8x1xf32>
    %cst_163 = arith.constant 0.899999976 : f32
    %451 = vector.broadcast %cst_163 : f32 to vector<1x8x16xf32>
    %452 = arith.subf %440, %451 : vector<1x8x16xf32>
    %453 = arith.mulf %452, %452 : vector<1x8x16xf32>
    %cst_164 = arith.constant -5.000000e+01 : f32
    %454 = vector.broadcast %cst_164 : f32 to vector<1x8x16xf32>
    %455 = arith.mulf %454, %453 : vector<1x8x16xf32>
    %456 = math.exp %455 : vector<1x8x16xf32>
    %457 = vector.broadcast %1 : vector<1x1x16xf32> to vector<1x8x16xf32>
    %458 = arith.mulf %456, %457 : vector<1x8x16xf32>
    %cst_165 = arith.constant -2.000000e+01 : f32
    %459 = vector.broadcast %cst_165 : f32 to vector<1x8x16xf32>
    %460 = arith.mulf %459, %452 : vector<1x8x16xf32>
    %461 = math.exp %460 : vector<1x8x16xf32>
    %cst_166 = arith.constant dense<0.000000e+00> : vector<1x8xf32>
    %462 = vector.multi_reduction <add>, %458, %cst_166 [2] : vector<1x8x16xf32> to vector<1x8xf32>
    %463 = vector.shape_cast %462 : vector<1x8xf32> to vector<1x8x1xf32>
    %cst_167 = arith.constant 0.135335281 : f32
    %464 = vector.broadcast %cst_167 : f32 to vector<1x8x16xf32>
    %465 = arith.mulf %464, %461 : vector<1x8x16xf32>
    %466 = arith.mulf %458, %465 : vector<1x8x16xf32>
    %cst_168 = arith.constant dense<0.000000e+00> : vector<1x8xf32>
    %467 = vector.multi_reduction <add>, %466, %cst_168 [2] : vector<1x8x16xf32> to vector<1x8xf32>
    %468 = vector.shape_cast %467 : vector<1x8xf32> to vector<1x8x1xf32>
    %cst_169 = arith.constant 0.00247875229 : f32
    %469 = vector.broadcast %cst_169 : f32 to vector<1x8x16xf32>
    %470 = arith.mulf %469, %461 : vector<1x8x16xf32>
    %471 = arith.mulf %466, %470 : vector<1x8x16xf32>
    %cst_170 = arith.constant dense<0.000000e+00> : vector<1x8xf32>
    %472 = vector.multi_reduction <add>, %471, %cst_170 [2] : vector<1x8x16xf32> to vector<1x8xf32>
    %473 = vector.shape_cast %472 : vector<1x8xf32> to vector<1x8x1xf32>
    %cst_171 = arith.constant 4.5399931E-5 : f32
    %474 = vector.broadcast %cst_171 : f32 to vector<1x8x16xf32>
    %475 = arith.mulf %474, %461 : vector<1x8x16xf32>
    %476 = arith.mulf %471, %475 : vector<1x8x16xf32>
    %cst_172 = arith.constant dense<0.000000e+00> : vector<1x8xf32>
    %477 = vector.multi_reduction <add>, %476, %cst_172 [2] : vector<1x8x16xf32> to vector<1x8xf32>
    %478 = vector.shape_cast %477 : vector<1x8xf32> to vector<1x8x1xf32>
    %cst_173 = arith.constant 8.31528723E-7 : f32
    %479 = vector.broadcast %cst_173 : f32 to vector<1x8x16xf32>
    %480 = arith.mulf %479, %461 : vector<1x8x16xf32>
    %481 = arith.mulf %476, %480 : vector<1x8x16xf32>
    %cst_174 = arith.constant dense<0.000000e+00> : vector<1x8xf32>
    %482 = vector.multi_reduction <add>, %481, %cst_174 [2] : vector<1x8x16xf32> to vector<1x8xf32>
    %483 = vector.shape_cast %482 : vector<1x8xf32> to vector<1x8x1xf32>
    %cst_175 = arith.constant 1.52299791E-8 : f32
    %484 = vector.broadcast %cst_175 : f32 to vector<1x8x16xf32>
    %485 = arith.mulf %484, %461 : vector<1x8x16xf32>
    %486 = arith.mulf %481, %485 : vector<1x8x16xf32>
    %cst_176 = arith.constant dense<0.000000e+00> : vector<1x8xf32>
    %487 = vector.multi_reduction <add>, %486, %cst_176 [2] : vector<1x8x16xf32> to vector<1x8xf32>
    %488 = vector.shape_cast %487 : vector<1x8xf32> to vector<1x8x1xf32>
    %cst_177 = arith.constant 2.7894681E-10 : f32
    %489 = vector.broadcast %cst_177 : f32 to vector<1x8x16xf32>
    %490 = arith.mulf %489, %461 : vector<1x8x16xf32>
    %491 = arith.mulf %486, %490 : vector<1x8x16xf32>
    %cst_178 = arith.constant dense<0.000000e+00> : vector<1x8xf32>
    %492 = vector.multi_reduction <add>, %491, %cst_178 [2] : vector<1x8x16xf32> to vector<1x8xf32>
    %493 = vector.shape_cast %492 : vector<1x8xf32> to vector<1x8x1xf32>
    %cst_179 = arith.constant 5.10908893E-12 : f32
    %494 = vector.broadcast %cst_179 : f32 to vector<1x8x16xf32>
    %495 = arith.mulf %494, %461 : vector<1x8x16xf32>
    %496 = arith.mulf %491, %495 : vector<1x8x16xf32>
    %cst_180 = arith.constant dense<0.000000e+00> : vector<1x8xf32>
    %497 = vector.multi_reduction <add>, %496, %cst_180 [2] : vector<1x8x16xf32> to vector<1x8xf32>
    %498 = vector.shape_cast %497 : vector<1x8xf32> to vector<1x8x1xf32>
    %cst_181 = arith.constant 9.35762291E-14 : f32
    %499 = vector.broadcast %cst_181 : f32 to vector<1x8x16xf32>
    %500 = arith.mulf %499, %461 : vector<1x8x16xf32>
    %501 = arith.mulf %496, %500 : vector<1x8x16xf32>
    %cst_182 = arith.constant dense<0.000000e+00> : vector<1x8xf32>
    %502 = vector.multi_reduction <add>, %501, %cst_182 [2] : vector<1x8x16xf32> to vector<1x8xf32>
    %503 = vector.shape_cast %502 : vector<1x8xf32> to vector<1x8x1xf32>
    %cst_183 = arith.constant 1.71390838E-15 : f32
    %504 = vector.broadcast %cst_183 : f32 to vector<1x8x16xf32>
    %505 = arith.mulf %504, %461 : vector<1x8x16xf32>
    %506 = arith.mulf %501, %505 : vector<1x8x16xf32>
    %cst_184 = arith.constant dense<0.000000e+00> : vector<1x8xf32>
    %507 = vector.multi_reduction <add>, %506, %cst_184 [2] : vector<1x8x16xf32> to vector<1x8xf32>
    %508 = vector.shape_cast %507 : vector<1x8xf32> to vector<1x8x1xf32>
    %509 = tpu.concatenate %450, %463, %468, %473, %478, %483, %488, %493, %498, %503, %508 in 2 : vector<1x8x1xf32>, vector<1x8x1xf32>, vector<1x8x1xf32>, vector<1x8x1xf32>, vector<1x8x1xf32>, vector<1x8x1xf32>, vector<1x8x1xf32>, vector<1x8x1xf32>, vector<1x8x1xf32>, vector<1x8x1xf32>, vector<1x8x1xf32> -> vector<1x8x11xf32>
    %cst_185 = arith.constant 1.000000e-10 : f32
    %510 = vector.broadcast %cst_185 : f32 to vector<1x8x11xf32>
    %511 = arith.maximumf %509, %510 : vector<1x8x11xf32>
    %512 = math.log %511 : vector<1x8x11xf32>
    %513 = vector.broadcast %0 : vector<1x8x1xf32> to vector<1x8x11xf32>
    %514 = arith.mulf %512, %513 : vector<1x8x11xf32>
    %515 = vector.broadcast %7 : vector<1x1x1xf32> to vector<1x8x11xf32>
    %516 = arith.mulf %509, %515 : vector<1x8x11xf32>
    %cst_186 = arith.constant 1.000000e-10 : f32
    %517 = vector.broadcast %cst_186 : f32 to vector<1x8x11xf32>
    %518 = arith.maximumf %516, %517 : vector<1x8x11xf32>
    %519 = math.log %518 : vector<1x8x11xf32>
    %520 = vector.broadcast %0 : vector<1x8x1xf32> to vector<1x8x11xf32>
    %521 = arith.mulf %519, %520 : vector<1x8x11xf32>
    %cst_187 = arith.constant dense<0.000000e+00> : vector<1x11xf32>
    %522 = vector.multi_reduction <add>, %514, %cst_187 [1] : vector<1x8x11xf32> to vector<1x11xf32>
    %c0_188 = arith.constant 0 : index
    %c0_189 = arith.constant 0 : index
    %c33 = arith.constant 33 : index
    %523 = vector.load %arg9[%c0_188, %c0_189, %c33] : memref<1x1x44xf32, #tpu.memory_space<vmem>>, vector<1x1x11xf32>
    %524 = vector.shape_cast %523 : vector<1x1x11xf32> to vector<1x11xf32>
    %525 = vector.shape_cast %522 : vector<1x11xf32> to vector<1x1x11xf32>
    tpu.vector_store %arg9[%c0_188, %c0_189, %c33], %525 {strides = array<i32>} : memref<1x1x44xf32, #tpu.memory_space<vmem>>, vector<1x1x11xf32>,
    %cst_190 = arith.constant dense<0.000000e+00> : vector<1x11xf32>
    %526 = vector.multi_reduction <add>, %521, %cst_190 [1] : vector<1x8x11xf32> to vector<1x11xf32>
    %c0_191 = arith.constant 0 : index
    %c0_192 = arith.constant 0 : index
    %c33_193 = arith.constant 33 : index
    %527 = vector.load %arg10[%c0_191, %c0_192, %c33_193] : memref<1x1x44xf32, #tpu.memory_space<vmem>>, vector<1x1x11xf32>
    %528 = vector.shape_cast %527 : vector<1x1x11xf32> to vector<1x11xf32>
    %529 = vector.shape_cast %526 : vector<1x11xf32> to vector<1x1x11xf32>
    tpu.vector_store %arg10[%c0_191, %c0_192, %c33_193], %529 {strides = array<i32>} : memref<1x1x44xf32, #tpu.memory_space<vmem>>, vector<1x1x11xf32>,
    return
  }
  func.func @transform_0(%arg0: i32) -> (i32, i32, i32) {
    %c0_i32 = arith.constant 0 : i32
    %c0_i32_0 = arith.constant 0 : i32
    %c0_i32_1 = arith.constant 0 : i32
    return %arg0, %c0_i32, %c0_i32_0 : i32, i32, i32
  }
  func.func @transform_1(%arg0: i32) -> (i32, i32, i32) {
    %c0_i32 = arith.constant 0 : i32
    %c0_i32_0 = arith.constant 0 : i32
    %c0_i32_1 = arith.constant 0 : i32
    return %arg0, %c0_i32, %c0_i32_0 : i32, i32, i32
  }
  func.func @transform_2(%arg0: i32) -> (i32, i32, i32) {
    %c0_i32 = arith.constant 0 : i32
    %c0_i32_0 = arith.constant 0 : i32
    %c0_i32_1 = arith.constant 0 : i32
    return %arg0, %c0_i32, %c0_i32_0 : i32, i32, i32
  }
  func.func @transform_3(%arg0: i32) -> (i32, i32, i32) {
    %c0_i32 = arith.constant 0 : i32
    %c0_i32_0 = arith.constant 0 : i32
    %c0_i32_1 = arith.constant 0 : i32
    return %arg0, %c0_i32, %c0_i32_0 : i32, i32, i32
  }
  func.func @transform_4(%arg0: i32) -> (i32, i32) {
    %c0_i32 = arith.constant 0 : i32
    %c0_i32_0 = arith.constant 0 : i32
    %c0_i32_1 = arith.constant 0 : i32
    return %c0_i32, %c0_i32_0 : i32, i32
  }
  func.func @transform_5(%arg0: i32) -> (i32, i32) {
    %c0_i32 = arith.constant 0 : i32
    %c0_i32_0 = arith.constant 0 : i32
    %c0_i32_1 = arith.constant 0 : i32
    return %c0_i32, %c0_i32_0 : i32, i32
  }
  func.func @transform_6(%arg0: i32) -> (i32, i32) {
    %c0_i32 = arith.constant 0 : i32
    %c0_i32_0 = arith.constant 0 : i32
    %c0_i32_1 = arith.constant 0 : i32
    return %c0_i32, %c0_i32_0 : i32, i32
  }
  func.func @transform_7(%arg0: i32) -> (i32, i32) {
    %c0_i32 = arith.constant 0 : i32
    %c0_i32_0 = arith.constant 0 : i32
    %c0_i32_1 = arith.constant 0 : i32
    return %c0_i32, %c0_i32_0 : i32, i32
  }
  func.func @transform_8(%arg0: i32) -> (i32, i32, i32) {
    %c0_i32 = arith.constant 0 : i32
    %c0_i32_0 = arith.constant 0 : i32
    %c0_i32_1 = arith.constant 0 : i32
    return %arg0, %c0_i32, %c0_i32_0 : i32, i32, i32
  }
  func.func @transform_9(%arg0: i32) -> (i32, i32, i32) {
    %c0_i32 = arith.constant 0 : i32
    %c0_i32_0 = arith.constant 0 : i32
    %c0_i32_1 = arith.constant 0 : i32
    return %arg0, %c0_i32, %c0_i32_0 : i32, i32, i32
  }
}

</mosaic_0001>

<llo_original>
// kernel: matchmaker_forward.1
$region0: #{matchmaker_forward.1}
  #allocation0 [shape = 'u32[]', space=smem, size = 0x4, offset = 0x4, fixed_abs, tag = 'smem constant byte address 0x4 - core index']
  #allocation1 [shape = 'u32[144,128]{1,0:T(1,128)}', space=vmem, size = 0x12000, scoped, tag = 'internal scratch']
  %s0 = inlined_call_operand.vmem [shape: f32[2,8,64], index: 0, kind: input, shape index: {}]
  %s1 = inlined_call_operand.vmem [shape: f32[2,16,64], index: 1, kind: input, shape index: {}]
  %s2 = inlined_call_operand.vmem [shape: f32[2,8,1], index: 2, kind: input, shape index: {}]
  %s3 = inlined_call_operand.vmem [shape: f32[2,1,16], index: 3, kind: input, shape index: {}]
  %s4 = inlined_call_operand.vmem [shape: bf16[128,384], index: 4, kind: input, shape index: {}]
  %s5 = inlined_call_operand.vmem [shape: bf16[192,384], index: 5, kind: input, shape index: {}]
  %s6 = inlined_call_operand.vmem [shape: bf16[256,384], index: 6, kind: input, shape index: {}]
  %s7 = inlined_call_operand.vmem [shape: f32[3,384], index: 7, kind: input, shape index: {}]
  %s8 = inlined_call_operand.vmem [shape: f32[2,1,44], index: 8, kind: output, shape index: {0}]
  %s9 = inlined_call_operand.vmem [shape: f32[2,1,44], index: 9, kind: output, shape index: {1}]
  %10 = xla_tuple %s8, %s9
  %s11 = sld [smem:[#allocation0]]
  $region73: #{matchmaker_forward.1} parent=0
    _
  %s13 = ssub.s32 1, %s11
  %s14 = scalar_select 0, %s13, %s11
  loop: start=0, step=1, limit=4
  $region2: #{matchmaker_forward.1} parent=0 // loop_pre_header
    _
  $region3: #{matchmaker_forward.1} parent=0 // loop_header
    %s16 = sphi 0, %s20
    %p17 = scmp.ge.s32.totalorder %s16, 4
    %s26 = sphi 0, %s28
    %s29 = sphi 0, %s26
    %s30 = sphi 0, %s29
    %s46 = sphi 0, %s30
    %s52 = sphi 0, %s54
    %s55 = sphi 0, %s52
    %s56 = sphi 0, %s55
    %s72 = sphi 0, %s56
    %s78 = sphi 0, %s80
    %s81 = sphi 0, %s78
    %s82 = sphi 0, %s81
    %s98 = sphi 0, %s82
    %s104 = sphi 0, %s106
    %s107 = sphi 0, %s104
    %s108 = sphi 0, %s107
    %s124 = sphi 0, %s108
    %s128 = sphi 0, %s128
    %s130 = sphi 0, %s128
    %s131 = sphi 0, %s130
    %s145 = sphi 0, %s131
    %s149 = sphi 0, %s149
    %s151 = sphi 0, %s149
    %s152 = sphi 0, %s151
    %s166 = sphi 0, %s152
    %s170 = sphi 0, %s170
    %s172 = sphi 0, %s170
    %s173 = sphi 0, %s172
    %s187 = sphi 0, %s173
    %s191 = sphi 0, %s191
    %s193 = sphi 0, %s191
    %s194 = sphi 0, %s193
    %s208 = sphi 0, %s194
    %s214 = sphi 0, %s216
    %s217 = sphi 0, %s214
    %s218 = sphi 0, %s217
    %s234 = sphi 0, %s218
    %s240 = sphi 0, %s242
    %s243 = sphi 0, %s240
    %s244 = sphi 0, %s243
    %s260 = sphi 0, %s244
  $region4: #{matchmaker_forward.1} parent=0 // loop_header_branch
    %19 = sbr.rel (%p17) target = $region8
  $region5: #{matchmaker_forward.1} parent=0 // loop_body
    %s21 = ssub.s32 %s16, 1
    %s22 = ssub.s32 %s16, 2
    %s23 = sadd.s32 %s16, 1
    %s24 = ssub.s32 %s16, %s23
    %p25 = scmp.eq.s32.totalorder %s24, 0
    %s27 = sadd.s32 %s26, 1
    %s28 = scalar_select %p25, %s26, %s27
    %p31 = pneg %p25
    %p32 = scmp.eq.s32.totalorder %s16, 1
    %p33 = por %p31, %p32
    %p34 = scmp.ne.s32.totalorder %s26, %s29
    %p35 = scmp.eq.s32.totalorder %s16, 0
    %p36 = por %p34, %p35
    %p37 = scmp.ne.s32.totalorder %s26, %s29
    %p38 = scmp.eq.s32.totalorder %s21, 1
    %p39 = por %p37, %p38
    %p40 = scmp.ne.s32.totalorder %s29, %s30
    %p41 = scmp.eq.s32.totalorder %s21, 0
    %p42 = por %p40, %p41
    %p43 = scmp.ne.s32.totalorder %s29, %s30
    %p44 = scmp.eq.s32.totalorder %s22, 1
    %p45 = por %p43, %p44
    %p47 = scmp.ne.s32.totalorder %s30, %s46
    %p48 = scmp.eq.s32.totalorder %s22, 0
    %p49 = por %p47, %p48
    %s50 = ssub.s32 %s16, %s23
    %p51 = scmp.eq.s32.totalorder %s50, 0
    %s53 = sadd.s32 %s52, 1
    %s54 = scalar_select %p51, %s52, %s53
    %p57 = pneg %p51
    %p58 = scmp.eq.s32.totalorder %s16, 1
    %p59 = por %p57, %p58
    %p60 = scmp.ne.s32.totalorder %s52, %s55
    %p61 = scmp.eq.s32.totalorder %s16, 0
    %p62 = por %p60, %p61
    %p63 = scmp.ne.s32.totalorder %s52, %s55
    %p64 = scmp.eq.s32.totalorder %s21, 1
    %p65 = por %p63, %p64
    %p66 = scmp.ne.s32.totalorder %s55, %s56
    %p67 = scmp.eq.s32.totalorder %s21, 0
    %p68 = por %p66, %p67
    %p69 = scmp.ne.s32.totalorder %s55, %s56
    %p70 = scmp.eq.s32.totalorder %s22, 1
    %p71 = por %p69, %p70
    %p73 = scmp.ne.s32.totalorder %s56, %s72
    %p74 = scmp.eq.s32.totalorder %s22, 0
    %p75 = por %p73, %p74
    %s76 = ssub.s32 %s16, %s23
    %p77 = scmp.eq.s32.totalorder %s76, 0
    %s79 = sadd.s32 %s78, 1
    %s80 = scalar_select %p77, %s78, %s79
    %p83 = pneg %p77
    %p84 = scmp.eq.s32.totalorder %s16, 1
    %p85 = por %p83, %p84
    %p86 = scmp.ne.s32.totalorder %s78, %s81
    %p87 = scmp.eq.s32.totalorder %s16, 0
    %p88 = por %p86, %p87
    %p89 = scmp.ne.s32.totalorder %s78, %s81
    %p90 = scmp.eq.s32.totalorder %s21, 1
    %p91 = por %p89, %p90
    %p92 = scmp.ne.s32.totalorder %s81, %s82
    %p93 = scmp.eq.s32.totalorder %s21, 0
    %p94 = por %p92, %p93
    %p95 = scmp.ne.s32.totalorder %s81, %s82
    %p96 = scmp.eq.s32.totalorder %s22, 1
    %p97 = por %p95, %p96
    %p99 = scmp.ne.s32.totalorder %s82, %s98
    %p100 = scmp.eq.s32.totalorder %s22, 0
    %p101 = por %p99, %p100
    %s102 = ssub.s32 %s16, %s23
    %p103 = scmp.eq.s32.totalorder %s102, 0
    %s105 = sadd.s32 %s104, 1
    %s106 = scalar_select %p103, %s104, %s105
    %p109 = pneg %p103
    %p110 = scmp.eq.s32.totalorder %s16, 1
    %p111 = por %p109, %p110
    %p112 = scmp.ne.s32.totalorder %s104, %s107
    %p113 = scmp.eq.s32.totalorder %s16, 0
    %p114 = por %p112, %p113
    %p115 = scmp.ne.s32.totalorder %s104, %s107
    %p116 = scmp.eq.s32.totalorder %s21, 1
    %p117 = por %p115, %p116
    %p118 = scmp.ne.s32.totalorder %s107, %s108
    %p119 = scmp.eq.s32.totalorder %s21, 0
    %p120 = por %p118, %p119
    %p121 = scmp.ne.s32.totalorder %s107, %s108
    %p122 = scmp.eq.s32.totalorder %s22, 1
    %p123 = por %p121, %p122
    %p125 = scmp.ne.s32.totalorder %s108, %s124
    %p126 = scmp.eq.s32.totalorder %s22, 0
    %p127 = por %p125, %p126
    %s129 = sadd.s32 %s128, 1
    %p132 = scmp.eq.s32.totalorder %s16, 1
    %p133 = scmp.ne.s32.totalorder %s128, %s130
    %p134 = scmp.eq.s32.totalorder %s16, 0
    %p135 = por %p133, %p134
    %p136 = scmp.ne.s32.totalorder %s128, %s130
    %p137 = scmp.eq.s32.totalorder %s21, 1
    %p138 = por %p136, %p137
    %p139 = scmp.ne.s32.totalorder %s130, %s131
    %p140 = scmp.eq.s32.totalorder %s21, 0
    %p141 = por %p139, %p140
    %p142 = scmp.ne.s32.totalorder %s130, %s131
    %p143 = scmp.eq.s32.totalorder %s22, 1
    %p144 = por %p142, %p143
    %p146 = scmp.ne.s32.totalorder %s131, %s145
    %p147 = scmp.eq.s32.totalorder %s22, 0
    %p148 = por %p146, %p147
    %s150 = sadd.s32 %s149, 1
    %p153 = scmp.eq.s32.totalorder %s16, 1
    %p154 = scmp.ne.s32.totalorder %s149, %s151
    %p155 = scmp.eq.s32.totalorder %s16, 0
    %p156 = por %p154, %p155
    %p157 = scmp.ne.s32.totalorder %s149, %s151
    %p158 = scmp.eq.s32.totalorder %s21, 1
    %p159 = por %p157, %p158
    %p160 = scmp.ne.s32.totalorder %s151, %s152
    %p161 = scmp.eq.s32.totalorder %s21, 0
    %p162 = por %p160, %p161
    %p163 = scmp.ne.s32.totalorder %s151, %s152
    %p164 = scmp.eq.s32.totalorder %s22, 1
    %p165 = por %p163, %p164
    %p167 = scmp.ne.s32.totalorder %s152, %s166
    %p168 = scmp.eq.s32.totalorder %s22, 0
    %p169 = por %p167, %p168
    %s171 = sadd.s32 %s170, 1
    %p174 = scmp.eq.s32.totalorder %s16, 1
    %p175 = scmp.ne.s32.totalorder %s170, %s172
    %p176 = scmp.eq.s32.totalorder %s16, 0
    %p177 = por %p175, %p176
    %p178 = scmp.ne.s32.totalorder %s170, %s172
    %p179 = scmp.eq.s32.totalorder %s21, 1
    %p180 = por %p178, %p179
    %p181 = scmp.ne.s32.totalorder %s172, %s173
    %p182 = scmp.eq.s32.totalorder %s21, 0
    %p183 = por %p181, %p182
    %p184 = scmp.ne.s32.totalorder %s172, %s173
    %p185 = scmp.eq.s32.totalorder %s22, 1
    %p186 = por %p184, %p185
    %p188 = scmp.ne.s32.totalorder %s173, %s187
    %p189 = scmp.eq.s32.totalorder %s22, 0
    %p190 = por %p188, %p189
    %s192 = sadd.s32 %s191, 1
    %p195 = scmp.eq.s32.totalorder %s16, 1
    %p196 = scmp.ne.s32.totalorder %s191, %s193
    %p197 = scmp.eq.s32.totalorder %s16, 0
    %p198 = por %p196, %p197
    %p199 = scmp.ne.s32.totalorder %s191, %s193
    %p200 = scmp.eq.s32.totalorder %s21, 1
    %p201 = por %p199, %p200
    %p202 = scmp.ne.s32.totalorder %s193, %s194
    %p203 = scmp.eq.s32.totalorder %s21, 0
    %p204 = por %p202, %p203
    %p205 = scmp.ne.s32.totalorder %s193, %s194
    %p206 = scmp.eq.s32.totalorder %s22, 1
    %p207 = por %p205, %p206
    %p209 = scmp.ne.s32.totalorder %s194, %s208
    %p210 = scmp.eq.s32.totalorder %s22, 0
    %p211 = por %p209, %p210
    %s212 = ssub.s32 %s16, %s23
    %p213 = scmp.eq.s32.totalorder %s212, 0
    %s215 = sadd.s32 %s214, 1
    %s216 = scalar_select %p213, %s214, %s215
    %p219 = pneg %p213
    %p220 = scmp.eq.s32.totalorder %s16, 1
    %p221 = por %p219, %p220
    %p222 = scmp.ne.s32.totalorder %s214, %s217
    %p223 = scmp.eq.s32.totalorder %s16, 0
    %p224 = por %p222, %p223
    %p225 = scmp.ne.s32.totalorder %s214, %s217
    %p226 = scmp.eq.s32.totalorder %s21, 1
    %p227 = por %p225, %p226
    %p228 = scmp.ne.s32.totalorder %s217, %s218
    %p229 = scmp.eq.s32.totalorder %s21, 0
    %p230 = por %p228, %p229
    %p231 = scmp.ne.s32.totalorder %s217, %s218
    %p232 = scmp.eq.s32.totalorder %s22, 1
    %p233 = por %p231, %p232
    %p235 = scmp.ne.s32.totalorder %s218, %s234
    %p236 = scmp.eq.s32.totalorder %s22, 0
    %p237 = por %p235, %p236
    %s238 = ssub.s32 %s16, %s23
    %p239 = scmp.eq.s32.totalorder %s238, 0
    %s241 = sadd.s32 %s240, 1
    %s242 = scalar_select %p239, %s240, %s241
    %p245 = pneg %p239
    %p246 = scmp.eq.s32.totalorder %s16, 1
    %p247 = por %p245, %p246
    %p248 = scmp.ne.s32.totalorder %s240, %s243
    %p249 = scmp.eq.s32.totalorder %s16, 0
    %p250 = por %p248, %p249
    %p251 = scmp.ne.s32.totalorder %s240, %s243
    %p252 = scmp.eq.s32.totalorder %s21, 1
    %p253 = por %p251, %p252
    %p254 = scmp.ne.s32.totalorder %s243, %s244
    %p255 = scmp.eq.s32.totalorder %s21, 0
    %p256 = por %p254, %p255
    %p257 = scmp.ne.s32.totalorder %s243, %s244
    %p258 = scmp.eq.s32.totalorder %s22, 1
    %p259 = por %p257, %p258
    %p261 = scmp.ne.s32.totalorder %s244, %s260
    %p262 = scmp.eq.s32.totalorder %s22, 0
    %p263 = por %p261, %p262
    %p264 = scmp.le.s32.totalorder 1, %s16
    %p265 = scmp.lt.s32.totalorder %s16, 3
    %p266 = pnand %p264, %p265
    %p267 = pneg %p266
    // Predicated region
    $region9: #{matchmaker_forward.1} parent=5 // pred_check
      _
    $region10: #{matchmaker_forward.1} parent=5 // pred_check_branch
      %269 = sbr.rel (%p266) target = $region12
    $region11: #{matchmaker_forward.1} parent=5 // pred_region
      %s270 = ssub.s32 %s16, 1
      // Predicated region
      $region13: #{matchmaker_forward.1} parent=11 // pred_check
        %p271 = pneg %p141
      $region14: #{matchmaker_forward.1} parent=11 // pred_check_branch
        %273 = sbr.rel (%p271) target = $region16
      $region15: #{matchmaker_forward.1} parent=11 // pred_region
        _
      $region16: #{matchmaker_forward.1} parent=11 // pred_fallthru
        _
      // Predicated region
      $region17: #{matchmaker_forward.1} parent=11 // pred_check
        %p274 = pneg %p162
      $region18: #{matchmaker_forward.1} parent=11 // pred_check_branch
        %276 = sbr.rel (%p274) target = $region20
      $region19: #{matchmaker_forward.1} parent=11 // pred_region
        _
      $region20: #{matchmaker_forward.1} parent=11 // pred_fallthru
        _
      // Predicated region
      $region21: #{matchmaker_forward.1} parent=11 // pred_check
        %p277 = pneg %p183
      $region22: #{matchmaker_forward.1} parent=11 // pred_check_branch
        %279 = sbr.rel (%p277) target = $region24
      $region23: #{matchmaker_forward.1} parent=11 // pred_region
        _
      $region24: #{matchmaker_forward.1} parent=11 // pred_fallthru
        _
      // Predicated region
      $region25: #{matchmaker_forward.1} parent=11 // pred_check
        %p280 = pneg %p204
      $region26: #{matchmaker_forward.1} parent=11 // pred_check_branch
        %282 = sbr.rel (%p280) target = $region28
      $region27: #{matchmaker_forward.1} parent=11 // pred_region
        _
      $region28: #{matchmaker_forward.1} parent=11 // pred_fallthru
        _
    $region12: #{matchmaker_forward.1} parent=5 // pred_fallthru
      _
    %p283 = scmp.lt.s32.totalorder %s16, 2
    // Predicated region
    $region29: #{matchmaker_forward.1} parent=5 // pred_check
      %p284 = pneg %p283
    $region30: #{matchmaker_forward.1} parent=5 // pred_check_branch
      %286 = sbr.rel (%p284) target = $region32
    $region31: #{matchmaker_forward.1} parent=5 // pred_region
      // Predicated region
      $region33: #{matchmaker_forward.1} parent=31 // pred_check
        %p287 = pneg %p36
      $region34: #{matchmaker_forward.1} parent=31 // pred_check_branch
        %289 = sbr.rel (%p287) target = $region36
      $region35: #{matchmaker_forward.1} parent=31 // pred_region
        %p290 = scmp.lt.s32.totalorder %s16, 1
        %s291 = scalar_select %p290, %s16, 1
        %s292 = smul.addr %s291, 8
        %s293 = scalar_lea.vmem %s0, %s292
      $region36: #{matchmaker_forward.1} parent=31 // pred_fallthru
        _
      // Predicated region
      $region37: #{matchmaker_forward.1} parent=31 // pred_check
        %p294 = pneg %p62
      $region38: #{matchmaker_forward.1} parent=31 // pred_check_branch
        %296 = sbr.rel (%p294) target = $region40
      $region39: #{matchmaker_forward.1} parent=31 // pred_region
        %p297 = scmp.lt.s32.totalorder %s16, 1
        %s298 = scalar_select %p297, %s16, 1
        %s299 = smul.addr %s298, 2
        %s300 = smul.addr %s299, 8
        %s301 = scalar_lea.vmem %s1, %s300
      $region40: #{matchmaker_forward.1} parent=31 // pred_fallthru
        _
      // Predicated region
      $region41: #{matchmaker_forward.1} parent=31 // pred_check
        %p302 = pneg %p88
      $region42: #{matchmaker_forward.1} parent=31 // pred_check_branch
        %304 = sbr.rel (%p302) target = $region44
      $region43: #{matchmaker_forward.1} parent=31 // pred_region
        %p305 = scmp.lt.s32.totalorder %s16, 1
        %s306 = scalar_select %p305, %s16, 1
        %s307 = smul.addr %s306, 8
        %s308 = scalar_lea.vmem %s2, %s307
      $region44: #{matchmaker_forward.1} parent=31 // pred_fallthru
        _
      // Predicated region
      $region45: #{matchmaker_forward.1} parent=31 // pred_check
        %p309 = pneg %p114
      $region46: #{matchmaker_forward.1} parent=31 // pred_check_branch
        %311 = sbr.rel (%p309) target = $region48
      $region47: #{matchmaker_forward.1} parent=31 // pred_region
        %p312 = scmp.lt.s32.totalorder %s16, 1
        %s313 = scalar_select %p312, %s16, 1
        %s314 = scalar_lea.vmem %s3, %s313
      $region48: #{matchmaker_forward.1} parent=31 // pred_fallthru
        _
    $region32: #{matchmaker_forward.1} parent=5 // pred_fallthru
      _
    %p315 = scmp.le.s32.totalorder 1, %s16
    %p316 = scmp.lt.s32.totalorder %s16, 3
    %p317 = pnand %p315, %p316
    %p318 = pneg %p317
    // Predicated region
    $region49: #{matchmaker_forward.1} parent=5 // pred_check
      _
    $region50: #{matchmaker_forward.1} parent=5 // pred_check_branch
      %320 = sbr.rel (%p317) target = $region52
    $region51: #{matchmaker_forward.1} parent=5 // pred_region
      %s321 = ssub.s32 %s16, 1
      %p322 = scmp.lt.s32.totalorder %s21, 1
      %s323 = scalar_select %p322, %s21, 1
      %s324 = smul.addr %s323, 8
      %s325 = scalar_lea.vmem %s0, %s324
      %p326 = pneg %p42
      %p327 = pneg %p39
      %p328 = scmp.lt.s32.totalorder %s21, 1
      %s329 = scalar_select %p328, %s21, 1
      %s330 = smul.addr %s329, 2
      %s331 = smul.addr %s330, 8
      %s332 = scalar_lea.vmem %s1, %s331
      %p333 = pneg %p68
      %p334 = pneg %p65
      %p335 = scmp.lt.s32.totalorder %s21, 1
      %s336 = scalar_select %p335, %s21, 1
      %s337 = smul.addr %s336, 8
      %s338 = scalar_lea.vmem %s2, %s337
      %p339 = pneg %p94
      %p340 = pneg %p91
      %p341 = scmp.lt.s32.totalorder %s21, 1
      %s342 = scalar_select %p341, %s21, 1
      %s343 = scalar_lea.vmem %s3, %s342
      %p344 = pneg %p120
      %p345 = pneg %p117
      %p346 = pneg %p141
      %p347 = pneg %p138
      %p348 = pneg %p162
      %p349 = pneg %p159
      %p350 = pneg %p183
      %p351 = pneg %p180
      %p352 = pneg %p204
      %p353 = pneg %p201
      %p354 = pneg %p230
      %p355 = pneg %p227
      %p356 = scmp.lt.s32.totalorder %s21, 1
      %s357 = scalar_select %p356, %s21, 1
      %s358 = scalar_lea.vmem %s8, %s357
      %p359 = pneg %p256
      %p360 = pneg %p253
      %p361 = scmp.lt.s32.totalorder %s21, 1
      %s362 = scalar_select %p361, %s21, 1
      %s363 = scalar_lea.vmem %s9, %s362
      %p364 = scmp.lt.s32.totalorder %s21, 1
      %s365 = scalar_select %p364, %s21, 1
      %s366 = smul.addr %s365, 8
      %s367 = scalar_lea.vmem %s0, %s366
      %p368 = scmp.lt.s32.totalorder %s21, 1
      %s369 = scalar_select %p368, %s21, 1
      %s370 = smul.addr %s369, 2
      %s371 = smul.addr %s370, 8
      %s372 = scalar_lea.vmem %s1, %s371
      %p373 = scmp.lt.s32.totalorder %s21, 1
      %s374 = scalar_select %p373, %s21, 1
      %s375 = smul.addr %s374, 8
      %s376 = scalar_lea.vmem %s2, %s375
      %p377 = scmp.lt.s32.totalorder %s21, 1
      %s378 = scalar_select %p377, %s21, 1
      %s379 = scalar_lea.vmem %s3, %s378
      %p380 = scmp.lt.s32.totalorder %s21, 1
      %s381 = scalar_select %p380, %s21, 1
      %s382 = scalar_lea.vmem %s8, %s381
      %p383 = scmp.lt.s32.totalorder %s21, 1
      %s384 = scalar_select %p383, %s21, 1
      %s385 = scalar_lea.vmem %s9, %s384
      %v387 = vld [vmem:[%s376] sm:$0xff]
      %v388 = vld [vmem:[%s379] sm:$0x1]
      %vm389 = vcmask 122880
      %v390 = vsel %vm389, %v388, 0.0
      %391 = vadd.xlane.f32.xlu0 %v390
      %v392 = vpop.xlane.xlu0 %391
      %v393 = vmax.f32 %v392, 1e-10
      %v394 = vrcp.pop %v393
      %v395 = vmul.f32 1.0, %v394
      %v396 = vld [vmem:[%s367] sm:$0xff]
      %v397 = vld [vmem:[%s372] sm:$0xff]
      %v398 = vld [vmem:[%s372 + $0x8] sm:$0xff]
      %v399 = vmul.f32 %v396, %v396
      %vm400 = vcmask 523264
      %v401 = vsel %vm400, %v399, 0.0
      %402 = vadd.xlane.f32.xlu0 %v401
      %v403 = vpop.xlane.xlu0 %402
      %v404 = vrsqrt.pop %v403
      %v405 = vmul.f32 %v403, %v404
      %vm406 = vcmp.eq.f32.partialorder %v403, inf
      %v407 = vsel %vm406, %v403, %v405
      %vm408 = vcmp.eq.f32.partialorder %v403, 0.0
      %v409 = vand.u32 %v403, 2147483648
      %v410 = vsel %vm408, %v409, %v407
      %v411 = vadd.f32 %v410, 1e-13
      %v412 = vrcp.pop %v411
      %v413 = vmul.f32 1.0, %v412
      %v414 = vmul.f32 %v396, %v413
      %v415 = vmul.f32 %v397, %v397
      %v416 = vmul.f32 %v398, %v398
      %v417 = vsel %vm400, %v415, 0.0
      %418 = vadd.xlane.f32.xlu0 %v417
      %v419 = vpop.xlane.xlu0 %418
      %v420 = vsel %vm400, %v416, 0.0
      %421 = vadd.xlane.f32.xlu0 %v420
      %v422 = vpop.xlane.xlu0 %421
      %v423 = vrsqrt.pop %v419
      %v424 = vmul.f32 %v419, %v423
      %vm425 = vcmp.eq.f32.partialorder %v419, inf
      %v426 = vsel %vm425, %v419, %v424
      %vm427 = vcmp.eq.f32.partialorder %v419, 0.0
      %v428 = vand.u32 %v419, 2147483648
      %v429 = vsel %vm427, %v428, %v426
      %v430 = vrsqrt.pop %v422
      %v431 = vmul.f32 %v422, %v430
      %vm432 = vcmp.eq.f32.partialorder %v422, inf
      %v433 = vsel %vm432, %v422, %v431
      %vm434 = vcmp.eq.f32.partialorder %v422, 0.0
      %v435 = vand.u32 %v422, 2147483648
      %v436 = vsel %vm434, %v435, %v433
      %v437 = vadd.f32 %v429, 1e-13
      %v438 = vadd.f32 %v436, 1e-13
      %v439 = vrcp.pop %v437
      %v440 = vmul.f32 1.0, %v439
      %v441 = vrcp.pop %v438
      %v442 = vmul.f32 1.0, %v441
      %v443 = vmul.f32 %v397, %v440
      %v444 = vmul.f32 %v398, %v442
      %v445 = vpack.c.bf16 %v414, %v414
      %v446 = vpack.c.bf16 %v444, %v443
      %v448 = vsel %vm400, %v445, 0
      %v451 = vsel %vm400, %v446, 0
      %453 = vmatprep.subr.bf16.mxu0 0
      %454 = vmatpush1.bf16.xpose.msra.mxu0 0
      %455 = vmatprep.subr.bf16.mxu0 0
      %456 = vmatpush1.bf16.xpose.msra.mxu0 0
      %457 = vmatprep.subr.bf16.mxu0 0
      %458 = vmatpush1.bf16.xpose.msra.mxu0 0
      %459 = vmatprep.subr.bf16.mxu0 0
      %460 = vmatpush1.bf16.xpose.msra.mxu0 0
      %461 = vmatprep.subr.bf16.mxu0 0
      %462 = vmatpush1.bf16.xpose.msra.mxu0 0
      %463 = vmatprep.subr.bf16.mxu0 0
      %464 = vmatpush1.bf16.xpose.msra.mxu0 0
      %465 = vmatprep.subr.bf16.mxu0 0
      %466 = vmatpush1.bf16.xpose.msra.mxu0 0
      %467 = vmatprep.subr.bf16.mxu0 0
      %468 = vmatpush1.bf16.xpose.msra.mxu0 %v451
      %469 = vmatprep.subr.bf16.mxu0 0
      %470 = vmatpush2.bf16.xpose.msra.mxu0 0
      %471 = vmatprep.subr.bf16.mxu0 0
      %472 = vmatpush2.bf16.xpose.msra.mxu0 0
      %473 = vmatprep.subr.bf16.mxu0 0
      %474 = vmatpush2.bf16.xpose.msra.mxu0 0
      %475 = vmatprep.subr.bf16.mxu0 0
      %476 = vmatpush2.bf16.xpose.msra.mxu0 0
      %477 = vmatprep.subr.bf16.mxu0 0
      %478 = vmatpush2.bf16.xpose.msra.mxu0 0
      %479 = vmatprep.subr.bf16.mxu0 0
      %480 = vmatpush2.bf16.xpose.msra.mxu0 0
      %481 = vmatprep.subr.bf16.mxu0 0
      %482 = vmatpush2.bf16.xpose.msra.mxu0 0
      %483 = vmatprep.subr.bf16.mxu0 0
      %484 = vmatpush2.bf16.xpose.msra.mxu0 0
      %485 = vmatprep.mubr.bf16.mxu0 0
      %486 = vmatmul.mubr.bf16.gmra.mxu0 %v448
      %v487 = vpop.f32.mrf.mxu0
      %v488 = vadd.f32 0.0, %v487
      %v489 = vpop.f32.mrf.mxu0
      %v490 = vpop.f32.mrf.mxu0
      %v491 = vpop.f32.mrf.mxu0
      %492 = vdwg.mxu0
      %v493 = vtanh.pop %v488
      %v494 = vsub.f32 %v493, 1.0
      %v495 = vmul.f32 %v494, %v494
      %v496 = vmul.f32 %v495, -50000000.0
      %v497 = vmul.f32 %v496, 1.442695
      %v498 = vpow.pop %v497
      %v500 = vlaneseq
      %v501 = vshrl.u32 %v500, 7
      %v502 = vsub.s32 0, %v501
      %v503 = vrot.slane %v388, %v502
      %v505 = vmul.f32 %v498, %v503
      %vm506 = vcmask 130048
      %v507 = vsel %vm506, %v505, 0.0
      %508 = vadd.xlane.f32.xlu0 %v507
      %v509 = vpop.xlane.xlu0 %508
      %v510 = vsub.f32 %v493, 0.9
      %v511 = vmul.f32 %v510, %v510
      %v512 = vmul.f32 %v511, -50.0
      %v513 = vmul.f32 %v512, 1.442695
      %v514 = vpow.pop %v513
      %v515 = vmul.f32 %v514, %v503
      %v516 = vmul.f32 %v510, -20.0
      %v517 = vmul.f32 %v516, 1.442695
      %v518 = vpow.pop %v517
      %v519 = vsel %vm506, %v515, 0.0
      %520 = vadd.xlane.f32.xlu0 %v519
      %v521 = vpop.xlane.xlu0 %520
      %v522 = vmul.f32 %v518, 0.13533528
      %v523 = vmul.f32 %v515, %v522
      %v524 = vsel %vm506, %v523, 0.0
      %525 = vadd.xlane.f32.xlu0 %v524
      %v526 = vpop.xlane.xlu0 %525
      %v527 = vmul.f32 %v518, 0.0024787523
      %v528 = vmul.f32 %v523, %v527
      %v529 = vsel %vm506, %v528, 0.0
      %530 = vadd.xlane.f32.xlu0 %v529
      %v531 = vpop.xlane.xlu0 %530
      %v532 = vmul.f32 %v518, 4.539993e-05
      %v533 = vmul.f32 %v528, %v532
      %v534 = vsel %vm506, %v533, 0.0
      %535 = vadd.xlane.f32.xlu0 %v534
      %v536 = vpop.xlane.xlu0 %535
      %v537 = vmul.f32 %v518, 8.315287e-07
      %v538 = vmul.f32 %v533, %v537
      %v539 = vsel %vm506, %v538, 0.0
      %540 = vadd.xlane.f32.xlu0 %v539
      %v541 = vpop.xlane.xlu0 %540
      %v542 = vmul.f32 %v518, 1.5229979e-08
      %v543 = vmul.f32 %v538, %v542
      %v544 = vsel %vm506, %v543, 0.0
      %545 = vadd.xlane.f32.xlu0 %v544
      %v546 = vpop.xlane.xlu0 %545
      %v547 = vmul.f32 %v518, 2.789468e-10
      %v548 = vmul.f32 %v543, %v547
      %v549 = vsel %vm506, %v548, 0.0
      %550 = vadd.xlane.f32.xlu0 %v549
      %v551 = vpop.xlane.xlu0 %550
      %v552 = vmul.f32 %v518, 5.109089e-12
      %v553 = vmul.f32 %v548, %v552
      %v554 = vsel %vm506, %v553, 0.0
      %555 = vadd.xlane.f32.xlu0 %v554
      %v556 = vpop.xlane.xlu0 %555
      %v557 = vmul.f32 %v518, 9.357623e-14
      %v558 = vmul.f32 %v553, %v557
      %v559 = vsel %vm506, %v558, 0.0
      %560 = vadd.xlane.f32.xlu0 %v559
      %v561 = vpop.xlane.xlu0 %560
      %v562 = vmul.f32 %v518, 1.7139084e-15
      %v563 = vmul.f32 %v558, %v562
      %v564 = vsel %vm506, %v563, 0.0
      %565 = vadd.xlane.f32.xlu0 %v564
      %v566 = vpop.xlane.xlu0 %565
      %vm567 = vcmask 7168
      %v568 = vsel %vm567, %v509, %v521
      %vm569 = vcmask 15360
      %v570 = vsel %vm569, %v568, %v526
      %vm571 = vcmask 23552
      %v572 = vsel %vm571, %v570, %v531
      %vm573 = vcmask 31744
      %v574 = vsel %vm573, %v572, %v536
      %vm575 = vcmask 39936
      %v576 = vsel %vm575, %v574, %v541
      %vm577 = vcmask 48128
      %v578 = vsel %vm577, %v576, %v546
      %vm579 = vcmask 56320
      %v580 = vsel %vm579, %v578, %v551
      %vm581 = vcmask 64512
      %v582 = vsel %vm581, %v580, %v556
      %vm583 = vcmask 72704
      %v584 = vsel %vm583, %v582, %v561
      %vm585 = vcmask 80896
      %v586 = vsel %vm585, %v584, %v566
      %v587 = vmax.f32 %v586, 1e-10
      %v588 = vlog2.pop %v587
      %v589 = vmul.f32 %v588, 0.6931472
      %591 = vset.pattern.permute.xlu0 0
      %592 = vperm.xlu0 %591, %v387
      %v593 = vpop.permute.xlu0 %592
      %v595 = vmul.f32 %v589, %v593
      %v596 = vlaneseq
      %v597 = vshrl.u32 %v596, 7
      %v598 = vsub.s32 0, %v597
      %v599 = vrot.slane %v395, %v598
      %v600 = vmul.f32 %v586, %v599
      %v601 = vmax.f32 %v600, 1e-10
      %v602 = vlog2.pop %v601
      %v603 = vmul.f32 %v602, 0.6931472
      %v604 = vmul.f32 %v603, %v593
      %vm605 = vcmask 89088
      %v606 = vsel %vm605, %v595, 0.0
      %v607 = vrot.slane %v606, 4
      %v608 = vadd.f32 %v606, %v607
      %v609 = vrot.slane %v608, 2
      %v610 = vadd.f32 %v608, %v609
      %v611 = vrot.slane %v610, 1
      %v612 = vadd.f32 %v610, %v611
      %vm613 = vcmask 81920
      %614 = vst.msk [vmem:[%s382] sm:$0x1] %vm613, %v612
      %v615 = vsel %vm605, %v604, 0.0
      %v616 = vrot.slane %v615, 4
      %v617 = vadd.f32 %v615, %v616
      %v618 = vrot.slane %v617, 2
      %v619 = vadd.f32 %v617, %v618
      %v620 = vrot.slane %v619, 1
      %v621 = vadd.f32 %v619, %v620
      %622 = vst.msk [vmem:[%s385] sm:$0x1] %vm613, %v621
      %v623 = vld [vmem:[%s7] sm:$0x77]
      %v624 = vld [vmem:[%s7 + $0x8] sm:$0x7]
      %v625 = vld [vmem:[%s4] sm:$0xff]
      %v626 = vld [vmem:[%s4 + $0x8] sm:$0xf]
      %v627 = vld [vmem:[%s4 + $0xc] sm:$0xff]
      %v628 = vld [vmem:[%s4 + $0x14] sm:$0xf]
      %v629 = vld [vmem:[%s4 + $0x18] sm:$0xff]
      %v630 = vld [vmem:[%s4 + $0x20] sm:$0xf]
      %v631 = vld [vmem:[%s4 + $0x24] sm:$0xff]
      %v632 = vld [vmem:[%s4 + $0x2c] sm:$0xf]
      %v633 = vld [vmem:[%s4 + $0x30] sm:$0xff]
      %v634 = vld [vmem:[%s4 + $0x38] sm:$0xf]
      %v635 = vld [vmem:[%s4 + $0x3c] sm:$0xff]
      %v636 = vld [vmem:[%s4 + $0x44] sm:$0xf]
      %v637 = vld [vmem:[%s4 + $0x48] sm:$0xff]
      %v638 = vld [vmem:[%s4 + $0x50] sm:$0xf]
      %v639 = vld [vmem:[%s4 + $0x54] sm:$0xff]
      %v640 = vld [vmem:[%s4 + $0x5c] sm:$0xf]
      %v641 = vld [vmem:[%s4 + $0x60] sm:$0xff]
      %v642 = vld [vmem:[%s4 + $0x68] sm:$0xf]
      %v643 = vld [vmem:[%s4 + $0x6c] sm:$0xff]
      %v644 = vld [vmem:[%s4 + $0x74] sm:$0xf]
      %v645 = vld [vmem:[%s4 + $0x78] sm:$0xff]
      %v646 = vld [vmem:[%s4 + $0x80] sm:$0xf]
      %v647 = vld [vmem:[%s4 + $0x84] sm:$0xff]
      %v648 = vld [vmem:[%s4 + $0x8c] sm:$0xf]
      %v649 = vld [vmem:[%s4 + $0x90] sm:$0xff]
      %v650 = vld [vmem:[%s4 + $0x98] sm:$0xf]
      %v651 = vld [vmem:[%s4 + $0x9c] sm:$0xff]
      %v652 = vld [vmem:[%s4 + $0xa4] sm:$0xf]
      %v653 = vld [vmem:[%s4 + $0xa8] sm:$0xff]
      %v654 = vld [vmem:[%s4 + $0xb0] sm:$0xf]
      %v655 = vld [vmem:[%s4 + $0xb4] sm:$0xff]
      %v656 = vld [vmem:[%s4 + $0xbc] sm:$0xf]
      %vm659 = vcmask 1046528
      %v660 = vrot.slane %v396, 1
      %v661 = vrot.slane 0.0, 1
      %v662 = vsel %vm659, %v660, %v661
      %663 = vrot.lane.b32.xlu0 %v662, 64
      %v664 = vpop.permute.xlu0 %663
      %v666 = vsel %vm400, %v396, %v664
      %v669 = vrot.slane %v397, 1
      %v670 = vrot.slane %v398, 1
      %v671 = vsel %vm659, %v669, %v670
      %v672 = vsel %vm659, %v670, %v661
      %673 = vrot.lane.b32.xlu0 %v671, 64
      %v674 = vpop.permute.xlu0 %673
      %675 = vrot.lane.b32.xlu0 %v672, 64
      %v676 = vpop.permute.xlu0 %675
      %v679 = vsel %vm400, %v397, %v674
      %v680 = vsel %vm400, %v398, %v676
      %v681 = vpack.c.bf16 %v679, %v666
      %v682 = vpack.c.bf16 %v680, %v680
      %v685 = vlaneseq
      %v686 = vshrl.u32 %v685, 7
      %v687 = vsub.s32 0, %v686
      %v688 = vrot.slane %v623, %v687
      %v689 = vlaneseq
      %v690 = vshrl.u32 %v689, 7
      %v691 = vsub.s32 4, %v690
      %v692 = vrot.slane %v623, %v691
      %v693 = vlaneseq
      %v694 = vshrl.u32 %v693, 7
      %v695 = vsub.s32 0, %v694
      %v696 = vrot.slane %v624, %v695
      %v700 = vlaneseq
      %v701 = vshrl.u32 %v700, 7
      %v702 = vsub.s32 0, %v701
      %v703 = vrot.slane %v688, %v702
      %v704 = vlaneseq
      %v705 = vshrl.u32 %v704, 7
      %v706 = vsub.s32 0, %v705
      %v707 = vrot.slane %v692, %v706
      %v708 = vlaneseq
      %v709 = vshrl.u32 %v708, 7
      %v710 = vsub.s32 0, %v709
      %v711 = vrot.slane %v696, %v710
      %v744 = vunpack.c.l.b16 %v625
      %v745 = vunpack.c.h.b16 %v625
      %v746 = vunpack.c.l.b16 %v626
      %v747 = vunpack.c.l.b16 %v627
      %v748 = vunpack.c.h.b16 %v627
      %v749 = vunpack.c.l.b16 %v628
      %v750 = vunpack.c.l.b16 %v629
      %v751 = vunpack.c.h.b16 %v629
      %v752 = vunpack.c.l.b16 %v630
      %v753 = vunpack.c.l.b16 %v631
      %v754 = vunpack.c.h.b16 %v631
      %v755 = vunpack.c.l.b16 %v632
      %v756 = vunpack.c.l.b16 %v633
      %v757 = vunpack.c.h.b16 %v633
      %v758 = vunpack.c.l.b16 %v634
      %v759 = vunpack.c.l.b16 %v635
      %v760 = vunpack.c.h.b16 %v635
      %v761 = vunpack.c.l.b16 %v636
      %v762 = vunpack.c.l.b16 %v637
      %v763 = vunpack.c.h.b16 %v637
      %v764 = vunpack.c.l.b16 %v638
      %v765 = vunpack.c.l.b16 %v639
      %v766 = vunpack.c.h.b16 %v639
      %v767 = vunpack.c.l.b16 %v640
      %v768 = vunpack.c.l.b16 %v641
      %v769 = vunpack.c.h.b16 %v641
      %v770 = vunpack.c.l.b16 %v642
      %v771 = vunpack.c.l.b16 %v643
      %v772 = vunpack.c.h.b16 %v643
      %v773 = vunpack.c.l.b16 %v644
      %v774 = vunpack.c.l.b16 %v645
      %v775 = vunpack.c.h.b16 %v645
      %v776 = vunpack.c.l.b16 %v646
      %v777 = vunpack.c.l.b16 %v647
      %v778 = vunpack.c.h.b16 %v647
      %v779 = vunpack.c.l.b16 %v648
      %v780 = vunpack.c.l.b16 %v649
      %v781 = vunpack.c.h.b16 %v649
      %v782 = vunpack.c.l.b16 %v650
      %v783 = vunpack.c.l.b16 %v651
      %v784 = vunpack.c.h.b16 %v651
      %v785 = vunpack.c.l.b16 %v652
      %v786 = vunpack.c.l.b16 %v653
      %v787 = vunpack.c.h.b16 %v653
      %v788 = vunpack.c.l.b16 %v654
      %v789 = vunpack.c.l.b16 %v655
      %v790 = vunpack.c.h.b16 %v655
      %v791 = vunpack.c.l.b16 %v656
      %v792 = vpack.c.b16 %v747, %v744
      %v793 = vpack.c.b16 %v748, %v745
      %v794 = vpack.c.b16 %v749, %v746
      %v795 = vpack.c.b16 %v753, %v750
      %v796 = vpack.c.b16 %v754, %v751
      %v797 = vpack.c.b16 %v755, %v752
      %v798 = vpack.c.b16 %v759, %v756
      %v799 = vpack.c.b16 %v760, %v757
      %v800 = vpack.c.b16 %v761, %v758
      %v801 = vpack.c.b16 %v765, %v762
      %v802 = vpack.c.b16 %v766, %v763
      %v803 = vpack.c.b16 %v767, %v764
      %v804 = vpack.c.b16 %v771, %v768
      %v805 = vpack.c.b16 %v772, %v769
      %v806 = vpack.c.b16 %v773, %v770
      %v807 = vpack.c.b16 %v777, %v774
      %v808 = vpack.c.b16 %v778, %v775
      %v809 = vpack.c.b16 %v779, %v776
      %v810 = vpack.c.b16 %v783, %v780
      %v811 = vpack.c.b16 %v784, %v781
      %v812 = vpack.c.b16 %v785, %v782
      %v813 = vpack.c.b16 %v789, %v786
      %v814 = vpack.c.b16 %v790, %v787
      %v815 = vpack.c.b16 %v791, %v788
      %840 = vmatprep.subr.bf16.mxu0 %v814
      %841 = vmatpush1.bf16.msra.mxu0 %v813
      %842 = vmatprep.subr.bf16.mxu0 %v811
      %843 = vmatpush1.bf16.msra.mxu0 %v810
      %844 = vmatprep.subr.bf16.mxu0 %v808
      %845 = vmatpush1.bf16.msra.mxu0 %v807
      %846 = vmatprep.subr.bf16.mxu0 %v805
      %847 = vmatpush1.bf16.msra.mxu0 %v804
      %848 = vmatprep.subr.bf16.mxu0 %v802
      %849 = vmatpush1.bf16.msra.mxu0 %v801
      %850 = vmatprep.subr.bf16.mxu0 %v799
      %851 = vmatpush1.bf16.msra.mxu0 %v798
      %852 = vmatprep.subr.bf16.mxu0 %v796
      %853 = vmatpush1.bf16.msra.mxu0 %v795
      %854 = vmatprep.subr.bf16.mxu0 %v793
      %855 = vmatpush1.bf16.msra.mxu0 %v792
      %856 = vmatprep.subr.bf16.mxu0 0
      %857 = vmatpush2.bf16.msra.mxu0 0
      %858 = vmatprep.subr.bf16.mxu0 0
      %859 = vmatpush2.bf16.msra.mxu0 0
      %860 = vmatprep.subr.bf16.mxu0 0
      %861 = vmatpush2.bf16.msra.mxu0 0
      %862 = vmatprep.subr.bf16.mxu0 0
      %863 = vmatpush2.bf16.msra.mxu0 0
      %864 = vmatprep.subr.bf16.mxu0 0
      %865 = vmatpush2.bf16.msra.mxu0 0
      %866 = vmatprep.subr.bf16.mxu0 0
      %867 = vmatpush2.bf16.msra.mxu0 0
      %868 = vmatprep.subr.bf16.mxu0 0
      %869 = vmatpush2.bf16.msra.mxu0 0
      %870 = vmatprep.subr.bf16.mxu0 0
      %871 = vmatpush2.bf16.msra.mxu0 0
      %872 = vmatprep.mubr.bf16.mxu0 0
      %873 = vmatmul.mubr.bf16.gmra.mxu0 %v681
      %v874 = vpop.f32.mrf.mxu0
      %v875 = vadd.f32 %v703, %v874
      %v876 = vpop.f32.mrf.mxu0
      %v877 = vadd.f32 %v707, %v876
      %v878 = vpop.f32.mrf.mxu0
      %v879 = vadd.f32 %v703, %v878
      %v880 = vpop.f32.mrf.mxu0
      %v881 = vadd.f32 %v707, %v880
      %882 = vmatprep.mubr.bf16.mxu0 0
      %883 = vmatmul.mubr.bf16.gmra.mxu0 %v682
      %v884 = vpop.f32.mrf.mxu0
      %v885 = vadd.f32 %v703, %v884
      %v886 = vpop.f32.mrf.mxu0
      %v887 = vadd.f32 %v707, %v886
      %v888 = vpop.f32.mrf.mxu0
      %v889 = vpop.f32.mrf.mxu0
      %890 = vdwg.mxu0
      %891 = vmatprep.subr.bf16.mxu0 0
      %892 = vmatpush1.bf16.msra.mxu0 %v815
      %893 = vmatprep.subr.bf16.mxu0 0
      %894 = vmatpush1.bf16.msra.mxu0 %v812
      %895 = vmatprep.subr.bf16.mxu0 0
      %896 = vmatpush1.bf16.msra.mxu0 %v809
      %897 = vmatprep.subr.bf16.mxu0 0
      %898 = vmatpush1.bf16.msra.mxu0 %v806
      %899 = vmatprep.subr.bf16.mxu0 0
      %900 = vmatpush1.bf16.msra.mxu0 %v803
      %901 = vmatprep.subr.bf16.mxu0 0
      %902 = vmatpush1.bf16.msra.mxu0 %v800
      %903 = vmatprep.subr.bf16.mxu0 0
      %904 = vmatpush1.bf16.msra.mxu0 %v797
      %905 = vmatprep.subr.bf16.mxu0 0
      %906 = vmatpush1.bf16.msra.mxu0 %v794
      %907 = vmatprep.subr.bf16.mxu0 0
      %908 = vmatpush2.bf16.msra.mxu0 0
      %909 = vmatprep.subr.bf16.mxu0 0
      %910 = vmatpush2.bf16.msra.mxu0 0
      %911 = vmatprep.subr.bf16.mxu0 0
      %912 = vmatpush2.bf16.msra.mxu0 0
      %913 = vmatprep.subr.bf16.mxu0 0
      %914 = vmatpush2.bf16.msra.mxu0 0
      %915 = vmatprep.subr.bf16.mxu0 0
      %916 = vmatpush2.bf16.msra.mxu0 0
      %917 = vmatprep.subr.bf16.mxu0 0
      %918 = vmatpush2.bf16.msra.mxu0 0
      %919 = vmatprep.subr.bf16.mxu0 0
      %920 = vmatpush2.bf16.msra.mxu0 0
      %921 = vmatprep.subr.bf16.mxu0 0
      %922 = vmatpush2.bf16.msra.mxu0 0
      %923 = vmatprep.mubr.bf16.mxu0 0
      %924 = vmatmul.mubr.bf16.gmra.mxu0 %v681
      %v925 = vpop.f32.mrf.mxu0
      %v926 = vadd.f32 %v711, %v925
      %v927 = vpop.f32.mrf.mxu0
      %v928 = vpop.f32.mrf.mxu0
      %v929 = vadd.f32 %v711, %v928
      %v930 = vpop.f32.mrf.mxu0
      %931 = vmatprep.mubr.bf16.mxu0 0
      %932 = vmatmul.mubr.bf16.gmra.mxu0 %v682
      %v933 = vpop.f32.mrf.mxu0
      %v934 = vadd.f32 %v711, %v933
      %v935 = vpop.f32.mrf.mxu0
      %v936 = vpop.f32.mrf.mxu0
      %v937 = vpop.f32.mrf.mxu0
      %938 = vdwg.mxu0
      %v939 = vmax.f32 %v875, 0.0
      %v940 = vmax.f32 %v877, 0.0
      %v941 = vmax.f32 %v926, 0.0
      %v942 = vmax.f32 %v879, 0.0
      %v943 = vmax.f32 %v881, 0.0
      %v944 = vmax.f32 %v929, 0.0
      %v945 = vmax.f32 %v885, 0.0
      %v946 = vmax.f32 %v887, 0.0
      %v947 = vmax.f32 %v934, 0.0
      %v948 = vmul.f32 %v939, %v939
      %v949 = vmul.f32 %v940, %v940
      %v950 = vmul.f32 %v941, %v941
      %v951 = vadd.f32 %v948, %v949
      %v952 = vadd.f32 %v951, %v950
      %953 = vadd.xlane.f32.xlu0 %v952
      %v954 = vpop.xlane.xlu0 %953
      %v955 = vrsqrt.pop %v954
      %v956 = vmul.f32 %v954, %v955
      %vm957 = vcmp.eq.f32.partialorder %v954, inf
      %v958 = vsel %vm957, %v954, %v956
      %vm959 = vcmp.eq.f32.partialorder %v954, 0.0
      %v960 = vand.u32 %v954, 2147483648
      %v961 = vsel %vm959, %v960, %v958
      %v962 = vadd.f32 %v961, 1e-13
      %v963 = vrcp.pop %v962
      %v964 = vmul.f32 1.0, %v963
      %v965 = vmul.f32 %v939, %v964
      %v966 = vmul.f32 %v940, %v964
      %v967 = vmul.f32 %v941, %v964
      %v968 = vmul.f32 %v942, %v942
      %v969 = vmul.f32 %v943, %v943
      %v970 = vmul.f32 %v944, %v944
      %v971 = vmul.f32 %v945, %v945
      %v972 = vmul.f32 %v946, %v946
      %v973 = vmul.f32 %v947, %v947
      %v974 = vadd.f32 %v968, %v969
      %v975 = vadd.f32 %v974, %v970
      %976 = vadd.xlane.f32.xlu0 %v975
      %v977 = vpop.xlane.xlu0 %976
      %v978 = vadd.f32 %v971, %v972
      %v979 = vadd.f32 %v978, %v973
      %980 = vadd.xlane.f32.xlu0 %v979
      %v981 = vpop.xlane.xlu0 %980
      %v982 = vrsqrt.pop %v977
      %v983 = vmul.f32 %v977, %v982
      %vm984 = vcmp.eq.f32.partialorder %v977, inf
      %v985 = vsel %vm984, %v977, %v983
      %vm986 = vcmp.eq.f32.partialorder %v977, 0.0
      %v987 = vand.u32 %v977, 2147483648
      %v988 = vsel %vm986, %v987, %v985
      %v989 = vrsqrt.pop %v981
      %v990 = vmul.f32 %v981, %v989
      %vm991 = vcmp.eq.f32.partialorder %v981, inf
      %v992 = vsel %vm991, %v981, %v990
      %vm993 = vcmp.eq.f32.partialorder %v981, 0.0
      %v994 = vand.u32 %v981, 2147483648
      %v995 = vsel %vm993, %v994, %v992
      %v996 = vadd.f32 %v988, 1e-13
      %v997 = vadd.f32 %v995, 1e-13
      %v998 = vrcp.pop %v996
      %v999 = vmul.f32 1.0, %v998
      %v1000 = vrcp.pop %v997
      %v1001 = vmul.f32 1.0, %v1000
      %v1002 = vmul.f32 %v942, %v999
      %v1003 = vmul.f32 %v943, %v999
      %v1004 = vmul.f32 %v944, %v999
      %v1005 = vmul.f32 %v945, %v1001
      %v1006 = vmul.f32 %v946, %v1001
      %v1007 = vmul.f32 %v947, %v1001
      %v1008 = vpack.c.bf16 %v965, %v965
      %v1009 = vpack.c.bf16 %v966, %v966
      %v1010 = vpack.c.bf16 %v967, %v967
      %v1011 = vpack.c.bf16 %v1005, %v1002
      %v1012 = vpack.c.bf16 %v1006, %v1003
      %v1013 = vpack.c.bf16 %v1007, %v1004
      %1014 = vmatprep.subr.bf16.mxu0 0
      %1015 = vmatpush1.bf16.xpose.msra.mxu0 0
      %1016 = vmatprep.subr.bf16.mxu0 0
      %1017 = vmatpush1.bf16.xpose.msra.mxu0 0
      %1018 = vmatprep.subr.bf16.mxu0 0
      %1019 = vmatpush1.bf16.xpose.msra.mxu0 0
      %1020 = vmatprep.subr.bf16.mxu0 0
      %1021 = vmatpush1.bf16.xpose.msra.mxu0 0
      %1022 = vmatprep.subr.bf16.mxu0 0
      %1023 = vmatpush1.bf16.xpose.msra.mxu0 0
      %1024 = vmatprep.subr.bf16.mxu0 0
      %1025 = vmatpush1.bf16.xpose.msra.mxu0 0
      %1026 = vmatprep.subr.bf16.mxu0 0
      %1027 = vmatpush1.bf16.xpose.msra.mxu0 0
      %1028 = vmatprep.subr.bf16.mxu0 %v1012
      %1029 = vmatpush1.bf16.xpose.msra.mxu0 %v1011
      %1030 = vmatprep.subr.bf16.mxu0 0
      %1031 = vmatpush2.bf16.xpose.msra.mxu0 0
      %1032 = vmatprep.subr.bf16.mxu0 0
      %1033 = vmatpush2.bf16.xpose.msra.mxu0 0
      %1034 = vmatprep.subr.bf16.mxu0 0
      %1035 = vmatpush2.bf16.xpose.msra.mxu0 0
      %1036 = vmatprep.subr.bf16.mxu0 0
      %1037 = vmatpush2.bf16.xpose.msra.mxu0 0
      %1038 = vmatprep.subr.bf16.mxu0 0
      %1039 = vmatpush2.bf16.xpose.msra.mxu0 0
      %1040 = vmatprep.subr.bf16.mxu0 0
      %1041 = vmatpush2.bf16.xpose.msra.mxu0 0
      %1042 = vmatprep.subr.bf16.mxu0 0
      %1043 = vmatpush2.bf16.xpose.msra.mxu0 0
      %1044 = vmatprep.subr.bf16.mxu0 0
      %1045 = vmatpush2.bf16.xpose.msra.mxu0 0
      %1046 = vmatprep.mubr.bf16.mxu0 %v1009
      %1047 = vmatmul.mubr.bf16.gmra.mxu0 %v1008
      %v1048 = vpop.f32.mrf.mxu0
      %v1049 = vadd.f32 0.0, %v1048
      %v1050 = vpop.f32.mrf.mxu0
      %v1051 = vpop.f32.mrf.mxu0
      %v1052 = vpop.f32.mrf.mxu0
      %1053 = vdwg.mxu0
      %1054 = vmatprep.subr.bf16.mxu0 0
      %1055 = vmatpush1.bf16.xpose.msra.mxu0 0
      %1056 = vmatprep.subr.bf16.mxu0 0
      %1057 = vmatpush1.bf16.xpose.msra.mxu0 0
      %1058 = vmatprep.subr.bf16.mxu0 0
      %1059 = vmatpush1.bf16.xpose.msra.mxu0 0
      %1060 = vmatprep.subr.bf16.mxu0 0
      %1061 = vmatpush1.bf16.xpose.msra.mxu0 0
      %1062 = vmatprep.subr.bf16.mxu0 0
      %1063 = vmatpush1.bf16.xpose.msra.mxu0 0
      %1064 = vmatprep.subr.bf16.mxu0 0
      %1065 = vmatpush1.bf16.xpose.msra.mxu0 0
      %1066 = vmatprep.subr.bf16.mxu0 0
      %1067 = vmatpush1.bf16.xpose.msra.mxu0 0
      %1068 = vmatprep.subr.bf16.mxu0 0
      %1069 = vmatpush1.bf16.xpose.msra.mxu0 %v1013
      %1070 = vmatprep.subr.bf16.mxu0 0
      %1071 = vmatpush2.bf16.xpose.msra.mxu0 0
      %1072 = vmatprep.subr.bf16.mxu0 0
      %1073 = vmatpush2.bf16.xpose.msra.mxu0 0
      %1074 = vmatprep.subr.bf16.mxu0 0
      %1075 = vmatpush2.bf16.xpose.msra.mxu0 0
      %1076 = vmatprep.subr.bf16.mxu0 0
      %1077 = vmatpush2.bf16.xpose.msra.mxu0 0
      %1078 = vmatprep.subr.bf16.mxu0 0
      %1079 = vmatpush2.bf16.xpose.msra.mxu0 0
      %1080 = vmatprep.subr.bf16.mxu0 0
      %1081 = vmatpush2.bf16.xpose.msra.mxu0 0
      %1082 = vmatprep.subr.bf16.mxu0 0
      %1083 = vmatpush2.bf16.xpose.msra.mxu0 0
      %1084 = vmatprep.subr.bf16.mxu0 0
      %1085 = vmatpush2.bf16.xpose.msra.mxu0 0
      %1086 = vmatprep.mubr.bf16.mxu0 0
      %1087 = vmatmul.mubr.bf16.gmra.mxu0 %v1010
      %v1088 = vpop.f32.mrf.mxu0
      %v1089 = vadd.f32 %v1049, %v1088
      %v1090 = vpop.f32.mrf.mxu0
      %v1091 = vpop.f32.mrf.mxu0
      %v1092 = vpop.f32.mrf.mxu0
      %1093 = vdwg.mxu0
      %v1094 = vtanh.pop %v1089
      %v1095 = vsub.f32 %v1094, 1.0
      %v1096 = vmul.f32 %v1095, %v1095
      %v1097 = vmul.f32 %v1096, -50000000.0
      %v1098 = vmul.f32 %v1097, 1.442695
      %v1099 = vpow.pop %v1098
      %v1100 = vmul.f32 %v1099, %v503
      %v1101 = vsel %vm506, %v1100, 0.0
      %1102 = vadd.xlane.f32.xlu0 %v1101
      %v1103 = vpop.xlane.xlu0 %1102
      %v1104 = vsub.f32 %v1094, 0.9
      %v1105 = vmul.f32 %v1104, %v1104
      %v1106 = vmul.f32 %v1105, -50.0
      %v1107 = vmul.f32 %v1106, 1.442695
      %v1108 = vpow.pop %v1107
      %v1109 = vmul.f32 %v1108, %v503
      %v1110 = vmul.f32 %v1104, -20.0
      %v1111 = vmul.f32 %v1110, 1.442695
      %v1112 = vpow.pop %v1111
      %v1113 = vsel %vm506, %v1109, 0.0
      %1114 = vadd.xlane.f32.xlu0 %v1113
      %v1115 = vpop.xlane.xlu0 %1114
      %v1116 = vmul.f32 %v1112, 0.13533528
      %v1117 = vmul.f32 %v1109, %v1116
      %v1118 = vsel %vm506, %v1117, 0.0
      %1119 = vadd.xlane.f32.xlu0 %v1118
      %v1120 = vpop.xlane.xlu0 %1119
      %v1121 = vmul.f32 %v1112, 0.0024787523
      %v1122 = vmul.f32 %v1117, %v1121
      %v1123 = vsel %vm506, %v1122, 0.0
      %1124 = vadd.xlane.f32.xlu0 %v1123
      %v1125 = vpop.xlane.xlu0 %1124
      %v1126 = vmul.f32 %v1112, 4.539993e-05
      %v1127 = vmul.f32 %v1122, %v1126
      %v1128 = vsel %vm506, %v1127, 0.0
      %1129 = vadd.xlane.f32.xlu0 %v1128
      %v1130 = vpop.xlane.xlu0 %1129
      %v1131 = vmul.f32 %v1112, 8.315287e-07
      %v1132 = vmul.f32 %v1127, %v1131
      %v1133 = vsel %vm506, %v1132, 0.0
      %1134 = vadd.xlane.f32.xlu0 %v1133
      %v1135 = vpop.xlane.xlu0 %1134
      %v1136 = vmul.f32 %v1112, 1.5229979e-08
      %v1137 = vmul.f32 %v1132, %v1136
      %v1138 = vsel %vm506, %v1137, 0.0
      %1139 = vadd.xlane.f32.xlu0 %v1138
      %v1140 = vpop.xlane.xlu0 %1139
      %v1141 = vmul.f32 %v1112, 2.789468e-10
      %v1142 = vmul.f32 %v1137, %v1141
      %v1143 = vsel %vm506, %v1142, 0.0
      %1144 = vadd.xlane.f32.xlu0 %v1143
      %v1145 = vpop.xlane.xlu0 %1144
      %v1146 = vmul.f32 %v1112, 5.109089e-12
      %v1147 = vmul.f32 %v1142, %v1146
      %v1148 = vsel %vm506, %v1147, 0.0
      %1149 = vadd.xlane.f32.xlu0 %v1148
      %v1150 = vpop.xlane.xlu0 %1149
      %v1151 = vmul.f32 %v1112, 9.357623e-14
      %v1152 = vmul.f32 %v1147, %v1151
      %v1153 = vsel %vm506, %v1152, 0.0
      %1154 = vadd.xlane.f32.xlu0 %v1153
      %v1155 = vpop.xlane.xlu0 %1154
      %v1156 = vmul.f32 %v1112, 1.7139084e-15
      %v1157 = vmul.f32 %v1152, %v1156
      %v1158 = vsel %vm506, %v1157, 0.0
      %1159 = vadd.xlane.f32.xlu0 %v1158
      %v1160 = vpop.xlane.xlu0 %1159
      %v1161 = vsel %vm567, %v1103, %v1115
      %v1162 = vsel %vm569, %v1161, %v1120
      %v1163 = vsel %vm571, %v1162, %v1125
      %v1164 = vsel %vm573, %v1163, %v1130
      %v1165 = vsel %vm575, %v1164, %v1135
      %v1166 = vsel %vm577, %v1165, %v1140
      %v1167 = vsel %vm579, %v1166, %v1145
      %v1168 = vsel %vm581, %v1167, %v1150
      %v1169 = vsel %vm583, %v1168, %v1155
      %v1170 = vsel %vm585, %v1169, %v1160
      %v1171 = vmax.f32 %v1170, 1e-10
      %v1172 = vlog2.pop %v1171
      %v1173 = vmul.f32 %v1172, 0.6931472
      %v1174 = vmul.f32 %v1173, %v593
      %v1175 = vmul.f32 %v1170, %v599
      %v1176 = vmax.f32 %v1175, 1e-10
      %v1177 = vlog2.pop %v1176
      %v1178 = vmul.f32 %v1177, 0.6931472
      %v1179 = vmul.f32 %v1178, %v593
      %v1180 = vsel %vm605, %v1174, 0.0
      %v1181 = vrot.slane %v1180, 4
      %v1182 = vadd.f32 %v1180, %v1181
      %v1183 = vrot.slane %v1182, 2
      %v1184 = vadd.f32 %v1182, %v1183
      %v1185 = vrot.slane %v1184, 1
      %v1186 = vadd.f32 %v1184, %v1185
      %1188 = vrot.lane.b32.xlu0 %v1186, 11
      %v1189 = vpop.permute.xlu0 %1188
      %vm1191 = vcmask 172120
      %1192 = vst.msk [vmem:[%s382] sm:$0x1] %vm1191, %v1189
      %v1193 = vsel %vm605, %v1179, 0.0
      %v1194 = vrot.slane %v1193, 4
      %v1195 = vadd.f32 %v1193, %v1194
      %v1196 = vrot.slane %v1195, 2
      %v1197 = vadd.f32 %v1195, %v1196
      %v1198 = vrot.slane %v1197, 1
      %v1199 = vadd.f32 %v1197, %v1198
      %1201 = vrot.lane.b32.xlu0 %v1199, 11
      %v1202 = vpop.permute.xlu0 %1201
      %1204 = vst.msk [vmem:[%s385] sm:$0x1] %vm1191, %v1202
      %v1205 = vld [vmem:[%s5] sm:$0xff]
      %v1206 = vld [vmem:[%s5 + $0x8] sm:$0xf]
      %v1207 = vld [vmem:[%s5 + $0xc] sm:$0xff]
      %v1208 = vld [vmem:[%s5 + $0x14] sm:$0xf]
      %v1209 = vld [vmem:[%s5 + $0x18] sm:$0xff]
      %v1210 = vld [vmem:[%s5 + $0x20] sm:$0xf]
      %v1211 = vld [vmem:[%s5 + $0x24] sm:$0xff]
      %v1212 = vld [vmem:[%s5 + $0x2c] sm:$0xf]
      %v1213 = vld [vmem:[%s5 + $0x30] sm:$0xff]
      %v1214 = vld [vmem:[%s5 + $0x38] sm:$0xf]
      %v1215 = vld [vmem:[%s5 + $0x3c] sm:$0xff]
      %v1216 = vld [vmem:[%s5 + $0x44] sm:$0xf]
      %v1217 = vld [vmem:[%s5 + $0x48] sm:$0xff]
      %v1218 = vld [vmem:[%s5 + $0x50] sm:$0xf]
      %v1219 = vld [vmem:[%s5 + $0x54] sm:$0xff]
      %v1220 = vld [vmem:[%s5 + $0x5c] sm:$0xf]
      %v1221 = vld [vmem:[%s5 + $0x60] sm:$0xff]
      %v1222 = vld [vmem:[%s5 + $0x68] sm:$0xf]
      %v1223 = vld [vmem:[%s5 + $0x6c] sm:$0xff]
      %v1224 = vld [vmem:[%s5 + $0x74] sm:$0xf]
      %v1225 = vld [vmem:[%s5 + $0x78] sm:$0xff]
      %v1226 = vld [vmem:[%s5 + $0x80] sm:$0xf]
      %v1227 = vld [vmem:[%s5 + $0x84] sm:$0xff]
      %v1228 = vld [vmem:[%s5 + $0x8c] sm:$0xf]
      %v1229 = vld [vmem:[%s5 + $0x90] sm:$0xff]
      %v1230 = vld [vmem:[%s5 + $0x98] sm:$0xf]
      %v1231 = vld [vmem:[%s5 + $0x9c] sm:$0xff]
      %v1232 = vld [vmem:[%s5 + $0xa4] sm:$0xf]
      %v1233 = vld [vmem:[%s5 + $0xa8] sm:$0xff]
      %v1234 = vld [vmem:[%s5 + $0xb0] sm:$0xf]
      %v1235 = vld [vmem:[%s5 + $0xb4] sm:$0xff]
      %v1236 = vld [vmem:[%s5 + $0xbc] sm:$0xf]
      %v1237 = vld [vmem:[%s5 + $0xc0] sm:$0xff]
      %v1238 = vld [vmem:[%s5 + $0xc8] sm:$0xf]
      %v1239 = vld [vmem:[%s5 + $0xcc] sm:$0xff]
      %v1240 = vld [vmem:[%s5 + $0xd4] sm:$0xf]
      %v1241 = vld [vmem:[%s5 + $0xd8] sm:$0xff]
      %v1242 = vld [vmem:[%s5 + $0xe0] sm:$0xf]
      %v1243 = vld [vmem:[%s5 + $0xe4] sm:$0xff]
      %v1244 = vld [vmem:[%s5 + $0xec] sm:$0xf]
      %v1245 = vld [vmem:[%s5 + $0xf0] sm:$0xff]
      %v1246 = vld [vmem:[%s5 + $0xf8] sm:$0xf]
      %v1247 = vld [vmem:[%s5 + $0xfc] sm:$0xff]
      %v1248 = vld [vmem:[%s5 + $0x104] sm:$0xf]
      %v1249 = vld [vmem:[%s5 + $0x108] sm:$0xff]
      %v1250 = vld [vmem:[%s5 + $0x110] sm:$0xf]
      %v1251 = vld [vmem:[%s5 + $0x114] sm:$0xff]
      %v1252 = vld [vmem:[%s5 + $0x11c] sm:$0xf]
      %vm1253 = vcmask 1045504
      %v1254 = vrot.slane %v396, 2
      %v1255 = vrot.slane 0.0, 2
      %v1256 = vsel %vm1253, %v1254, %v1255
      %v1258 = vrot.slane %v397, 2
      %v1259 = vrot.slane %v398, 2
      %v1260 = vsel %vm1253, %v1258, %v1259
      %v1261 = vsel %vm1253, %v1259, %v1255
      %v1264 = vpack.c.bf16 %v1260, %v1256
      %v1265 = vpack.c.bf16 %v1261, %v1261
      %v1266 = vlaneseq
      %v1267 = vshrl.u32 %v1266, 7
      %v1268 = vsub.s32 1, %v1267
      %v1269 = vrot.slane %v623, %v1268
      %v1270 = vlaneseq
      %v1271 = vshrl.u32 %v1270, 7
      %v1272 = vsub.s32 5, %v1271
      %v1273 = vrot.slane %v623, %v1272
      %v1274 = vlaneseq
      %v1275 = vshrl.u32 %v1274, 7
      %v1276 = vsub.s32 1, %v1275
      %v1277 = vrot.slane %v624, %v1276
      %v1281 = vlaneseq
      %v1282 = vshrl.u32 %v1281, 7
      %v1283 = vsub.s32 1, %v1282
      %v1284 = vrot.slane %v1269, %v1283
      %v1285 = vlaneseq
      %v1286 = vshrl.u32 %v1285, 7
      %v1287 = vsub.s32 1, %v1286
      %v1288 = vrot.slane %v1273, %v1287
      %v1289 = vlaneseq
      %v1290 = vshrl.u32 %v1289, 7
      %v1291 = vsub.s32 1, %v1290
      %v1292 = vrot.slane %v1277, %v1291
      %v1341 = vunpack.c.l.b16 %v1205
      %v1342 = vunpack.c.h.b16 %v1205
      %v1343 = vunpack.c.l.b16 %v1206
      %v1344 = vunpack.c.l.b16 %v1207
      %v1345 = vunpack.c.h.b16 %v1207
      %v1346 = vunpack.c.l.b16 %v1208
      %v1347 = vunpack.c.l.b16 %v1209
      %v1348 = vunpack.c.h.b16 %v1209
      %v1349 = vunpack.c.l.b16 %v1210
      %v1350 = vunpack.c.l.b16 %v1211
      %v1351 = vunpack.c.h.b16 %v1211
      %v1352 = vunpack.c.l.b16 %v1212
      %v1353 = vunpack.c.l.b16 %v1213
      %v1354 = vunpack.c.h.b16 %v1213
      %v1355 = vunpack.c.l.b16 %v1214
      %v1356 = vunpack.c.l.b16 %v1215
      %v1357 = vunpack.c.h.b16 %v1215
      %v1358 = vunpack.c.l.b16 %v1216
      %v1359 = vunpack.c.l.b16 %v1217
      %v1360 = vunpack.c.h.b16 %v1217
      %v1361 = vunpack.c.l.b16 %v1218
      %v1362 = vunpack.c.l.b16 %v1219
      %v1363 = vunpack.c.h.b16 %v1219
      %v1364 = vunpack.c.l.b16 %v1220
      %v1365 = vunpack.c.l.b16 %v1221
      %v1366 = vunpack.c.h.b16 %v1221
      %v1367 = vunpack.c.l.b16 %v1222
      %v1368 = vunpack.c.l.b16 %v1223
      %v1369 = vunpack.c.h.b16 %v1223
      %v1370 = vunpack.c.l.b16 %v1224
      %v1371 = vunpack.c.l.b16 %v1225
      %v1372 = vunpack.c.h.b16 %v1225
      %v1373 = vunpack.c.l.b16 %v1226
      %v1374 = vunpack.c.l.b16 %v1227
      %v1375 = vunpack.c.h.b16 %v1227
      %v1376 = vunpack.c.l.b16 %v1228
      %v1377 = vunpack.c.l.b16 %v1229
      %v1378 = vunpack.c.h.b16 %v1229
      %v1379 = vunpack.c.l.b16 %v1230
      %v1380 = vunpack.c.l.b16 %v1231
      %v1381 = vunpack.c.h.b16 %v1231
      %v1382 = vunpack.c.l.b16 %v1232
      %v1383 = vunpack.c.l.b16 %v1233
      %v1384 = vunpack.c.h.b16 %v1233
      %v1385 = vunpack.c.l.b16 %v1234
      %v1386 = vunpack.c.l.b16 %v1235
      %v1387 = vunpack.c.h.b16 %v1235
      %v1388 = vunpack.c.l.b16 %v1236
      %v1389 = vunpack.c.l.b16 %v1237
      %v1390 = vunpack.c.h.b16 %v1237
      %v1391 = vunpack.c.l.b16 %v1238
      %v1392 = vunpack.c.l.b16 %v1239
      %v1393 = vunpack.c.h.b16 %v1239
      %v1394 = vunpack.c.l.b16 %v1240
      %v1395 = vunpack.c.l.b16 %v1241
      %v1396 = vunpack.c.h.b16 %v1241
      %v1397 = vunpack.c.l.b16 %v1242
      %v1398 = vunpack.c.l.b16 %v1243
      %v1399 = vunpack.c.h.b16 %v1243
      %v1400 = vunpack.c.l.b16 %v1244
      %v1401 = vunpack.c.l.b16 %v1245
      %v1402 = vunpack.c.h.b16 %v1245
      %v1403 = vunpack.c.l.b16 %v1246
      %v1404 = vunpack.c.l.b16 %v1247
      %v1405 = vunpack.c.h.b16 %v1247
      %v1406 = vunpack.c.l.b16 %v1248
      %v1407 = vunpack.c.l.b16 %v1249
      %v1408 = vunpack.c.h.b16 %v1249
      %v1409 = vunpack.c.l.b16 %v1250
      %v1410 = vunpack.c.l.b16 %v1251
      %v1411 = vunpack.c.h.b16 %v1251
      %v1412 = vunpack.c.l.b16 %v1252
      %v1413 = vpack.c.b16 %v1344, %v1341
      %v1414 = vpack.c.b16 %v1345, %v1342
      %v1415 = vpack.c.b16 %v1346, %v1343
      %v1416 = vpack.c.b16 %v1350, %v1347
      %v1417 = vpack.c.b16 %v1351, %v1348
      %v1418 = vpack.c.b16 %v1352, %v1349
      %v1419 = vpack.c.b16 %v1356, %v1353
      %v1420 = vpack.c.b16 %v1357, %v1354
      %v1421 = vpack.c.b16 %v1358, %v1355
      %v1422 = vpack.c.b16 %v1362, %v1359
      %v1423 = vpack.c.b16 %v1363, %v1360
      %v1424 = vpack.c.b16 %v1364, %v1361
      %v1425 = vpack.c.b16 %v1368, %v1365
      %v1426 = vpack.c.b16 %v1369, %v1366
      %v1427 = vpack.c.b16 %v1370, %v1367
      %v1428 = vpack.c.b16 %v1374, %v1371
      %v1429 = vpack.c.b16 %v1375, %v1372
      %v1430 = vpack.c.b16 %v1376, %v1373
      %v1431 = vpack.c.b16 %v1380, %v1377
      %v1432 = vpack.c.b16 %v1381, %v1378
      %v1433 = vpack.c.b16 %v1382, %v1379
      %v1434 = vpack.c.b16 %v1386, %v1383
      %v1435 = vpack.c.b16 %v1387, %v1384
      %v1436 = vpack.c.b16 %v1388, %v1385
      %v1437 = vpack.c.b16 %v1392, %v1389
      %v1438 = vpack.c.b16 %v1393, %v1390
      %v1439 = vpack.c.b16 %v1394, %v1391
      %v1440 = vpack.c.b16 %v1398, %v1395
      %v1441 = vpack.c.b16 %v1399, %v1396
      %v1442 = vpack.c.b16 %v1400, %v1397
      %v1443 = vpack.c.b16 %v1404, %v1401
      %v1444 = vpack.c.b16 %v1405, %v1402
      %v1445 = vpack.c.b16 %v1406, %v1403
      %v1446 = vpack.c.b16 %v1410, %v1407
      %v1447 = vpack.c.b16 %v1411, %v1408
      %v1448 = vpack.c.b16 %v1412, %v1409
      %v1486 = vsel %vm400, %v1264, 0
      %v1489 = vsel %vm400, %v1265, 0
      %1491 = vmatprep.subr.bf16.mxu0 %v1435
      %1492 = vmatpush1.bf16.msra.mxu0 %v1434
      %1493 = vmatprep.subr.bf16.mxu0 %v1432
      %1494 = vmatpush1.bf16.msra.mxu0 %v1431
      %1495 = vmatprep.subr.bf16.mxu0 %v1429
      %1496 = vmatpush1.bf16.msra.mxu0 %v1428
      %1497 = vmatprep.subr.bf16.mxu0 %v1426
      %1498 = vmatpush1.bf16.msra.mxu0 %v1425
      %1499 = vmatprep.subr.bf16.mxu0 %v1423
      %1500 = vmatpush1.bf16.msra.mxu0 %v1422
      %1501 = vmatprep.subr.bf16.mxu0 %v1420
      %1502 = vmatpush1.bf16.msra.mxu0 %v1419
      %1503 = vmatprep.subr.bf16.mxu0 %v1417
      %1504 = vmatpush1.bf16.msra.mxu0 %v1416
      %1505 = vmatprep.subr.bf16.mxu0 %v1414
      %1506 = vmatpush1.bf16.msra.mxu0 %v1413
      %1507 = vmatprep.subr.bf16.mxu0 0
      %1508 = vmatpush2.bf16.msra.mxu0 0
      %1509 = vmatprep.subr.bf16.mxu0 0
      %1510 = vmatpush2.bf16.msra.mxu0 0
      %1511 = vmatprep.subr.bf16.mxu0 0
      %1512 = vmatpush2.bf16.msra.mxu0 0
      %1513 = vmatprep.subr.bf16.mxu0 0
      %1514 = vmatpush2.bf16.msra.mxu0 0
      %1515 = vmatprep.subr.bf16.mxu0 %v1447
      %1516 = vmatpush2.bf16.msra.mxu0 %v1446
      %1517 = vmatprep.subr.bf16.mxu0 %v1444
      %1518 = vmatpush2.bf16.msra.mxu0 %v1443
      %1519 = vmatprep.subr.bf16.mxu0 %v1441
      %1520 = vmatpush2.bf16.msra.mxu0 %v1440
      %1521 = vmatprep.subr.bf16.mxu0 %v1438
      %1522 = vmatpush2.bf16.msra.mxu0 %v1437
      %1523 = vmatprep.mubr.bf16.mxu0 %v1486
      %1524 = vmatmul.mubr.bf16.gmra.mxu0 %v681
      %v1525 = vpop.f32.mrf.mxu0
      %v1526 = vadd.f32 %v1284, %v1525
      %v1527 = vpop.f32.mrf.mxu0
      %v1528 = vadd.f32 %v1288, %v1527
      %v1529 = vpop.f32.mrf.mxu0
      %v1530 = vadd.f32 %v1284, %v1529
      %v1531 = vpop.f32.mrf.mxu0
      %v1532 = vadd.f32 %v1288, %v1531
      %1533 = vmatprep.mubr.bf16.mxu0 %v1489
      %1534 = vmatmul.mubr.bf16.gmra.mxu0 %v682
      %v1535 = vpop.f32.mrf.mxu0
      %v1536 = vadd.f32 %v1284, %v1535
      %v1537 = vpop.f32.mrf.mxu0
      %v1538 = vadd.f32 %v1288, %v1537
      %v1539 = vpop.f32.mrf.mxu0
      %v1540 = vpop.f32.mrf.mxu0
      %1541 = vdwg.mxu0
      %1542 = vmatprep.subr.bf16.mxu0 0
      %1543 = vmatpush1.bf16.msra.mxu0 %v1436
      %1544 = vmatprep.subr.bf16.mxu0 0
      %1545 = vmatpush1.bf16.msra.mxu0 %v1433
      %1546 = vmatprep.subr.bf16.mxu0 0
      %1547 = vmatpush1.bf16.msra.mxu0 %v1430
      %1548 = vmatprep.subr.bf16.mxu0 0
      %1549 = vmatpush1.bf16.msra.mxu0 %v1427
      %1550 = vmatprep.subr.bf16.mxu0 0
      %1551 = vmatpush1.bf16.msra.mxu0 %v1424
      %1552 = vmatprep.subr.bf16.mxu0 0
      %1553 = vmatpush1.bf16.msra.mxu0 %v1421
      %1554 = vmatprep.subr.bf16.mxu0 0
      %1555 = vmatpush1.bf16.msra.mxu0 %v1418
      %1556 = vmatprep.subr.bf16.mxu0 0
      %1557 = vmatpush1.bf16.msra.mxu0 %v1415
      %1558 = vmatprep.subr.bf16.mxu0 0
      %1559 = vmatpush2.bf16.msra.mxu0 0
      %1560 = vmatprep.subr.bf16.mxu0 0
      %1561 = vmatpush2.bf16.msra.mxu0 0
      %1562 = vmatprep.subr.bf16.mxu0 0
      %1563 = vmatpush2.bf16.msra.mxu0 0
      %1564 = vmatprep.subr.bf16.mxu0 0
      %1565 = vmatpush2.bf16.msra.mxu0 0
      %1566 = vmatprep.subr.bf16.mxu0 0
      %1567 = vmatpush2.bf16.msra.mxu0 %v1448
      %1568 = vmatprep.subr.bf16.mxu0 0
      %1569 = vmatpush2.bf16.msra.mxu0 %v1445
      %1570 = vmatprep.subr.bf16.mxu0 0
      %1571 = vmatpush2.bf16.msra.mxu0 %v1442
      %1572 = vmatprep.subr.bf16.mxu0 0
      %1573 = vmatpush2.bf16.msra.mxu0 %v1439
      %1574 = vmatprep.mubr.bf16.mxu0 %v1486
      %1575 = vmatmul.mubr.bf16.gmra.mxu0 %v681
      %v1576 = vpop.f32.mrf.mxu0
      %v1577 = vadd.f32 %v1292, %v1576
      %v1578 = vpop.f32.mrf.mxu0
      %v1579 = vpop.f32.mrf.mxu0
      %v1580 = vadd.f32 %v1292, %v1579
      %v1581 = vpop.f32.mrf.mxu0
      %1582 = vmatprep.mubr.bf16.mxu0 %v1489
      %1583 = vmatmul.mubr.bf16.gmra.mxu0 %v682
      %v1584 = vpop.f32.mrf.mxu0
      %v1585 = vadd.f32 %v1292, %v1584
      %v1586 = vpop.f32.mrf.mxu0
      %v1587 = vpop.f32.mrf.mxu0
      %v1588 = vpop.f32.mrf.mxu0
      %1589 = vdwg.mxu0
      %v1590 = vmax.f32 %v1526, 0.0
      %v1591 = vmax.f32 %v1528, 0.0
      %v1592 = vmax.f32 %v1577, 0.0
      %v1593 = vmax.f32 %v1530, 0.0
      %v1594 = vmax.f32 %v1532, 0.0
      %v1595 = vmax.f32 %v1580, 0.0
      %v1596 = vmax.f32 %v1536, 0.0
      %v1597 = vmax.f32 %v1538, 0.0
      %v1598 = vmax.f32 %v1585, 0.0
      %v1599 = vmul.f32 %v1590, %v1590
      %v1600 = vmul.f32 %v1591, %v1591
      %v1601 = vmul.f32 %v1592, %v1592
      %v1602 = vadd.f32 %v1599, %v1600
      %v1603 = vadd.f32 %v1602, %v1601
      %1604 = vadd.xlane.f32.xlu0 %v1603
      %v1605 = vpop.xlane.xlu0 %1604
      %v1606 = vrsqrt.pop %v1605
      %v1607 = vmul.f32 %v1605, %v1606
      %vm1608 = vcmp.eq.f32.partialorder %v1605, inf
      %v1609 = vsel %vm1608, %v1605, %v1607
      %vm1610 = vcmp.eq.f32.partialorder %v1605, 0.0
      %v1611 = vand.u32 %v1605, 2147483648
      %v1612 = vsel %vm1610, %v1611, %v1609
      %v1613 = vadd.f32 %v1612, 1e-13
      %v1614 = vrcp.pop %v1613
      %v1615 = vmul.f32 1.0, %v1614
      %v1616 = vmul.f32 %v1590, %v1615
      %v1617 = vmul.f32 %v1591, %v1615
      %v1618 = vmul.f32 %v1592, %v1615
      %v1619 = vmul.f32 %v1593, %v1593
      %v1620 = vmul.f32 %v1594, %v1594
      %v1621 = vmul.f32 %v1595, %v1595
      %v1622 = vmul.f32 %v1596, %v1596
      %v1623 = vmul.f32 %v1597, %v1597
      %v1624 = vmul.f32 %v1598, %v1598
      %v1625 = vadd.f32 %v1619, %v1620
      %v1626 = vadd.f32 %v1625, %v1621
      %1627 = vadd.xlane.f32.xlu0 %v1626
      %v1628 = vpop.xlane.xlu0 %1627
      %v1629 = vadd.f32 %v1622, %v1623
      %v1630 = vadd.f32 %v1629, %v1624
      %1631 = vadd.xlane.f32.xlu0 %v1630
      %v1632 = vpop.xlane.xlu0 %1631
      %v1633 = vrsqrt.pop %v1628
      %v1634 = vmul.f32 %v1628, %v1633
      %vm1635 = vcmp.eq.f32.partialorder %v1628, inf
      %v1636 = vsel %vm1635, %v1628, %v1634
      %vm1637 = vcmp.eq.f32.partialorder %v1628, 0.0
      %v1638 = vand.u32 %v1628, 2147483648
      %v1639 = vsel %vm1637, %v1638, %v1636
      %v1640 = vrsqrt.pop %v1632
      %v1641 = vmul.f32 %v1632, %v1640
      %vm1642 = vcmp.eq.f32.partialorder %v1632, inf
      %v1643 = vsel %vm1642, %v1632, %v1641
      %vm1644 = vcmp.eq.f32.partialorder %v1632, 0.0
      %v1645 = vand.u32 %v1632, 2147483648
      %v1646 = vsel %vm1644, %v1645, %v1643
      %v1647 = vadd.f32 %v1639, 1e-13
      %v1648 = vadd.f32 %v1646, 1e-13
      %v1649 = vrcp.pop %v1647
      %v1650 = vmul.f32 1.0, %v1649
      %v1651 = vrcp.pop %v1648
      %v1652 = vmul.f32 1.0, %v1651
      %v1653 = vmul.f32 %v1593, %v1650
      %v1654 = vmul.f32 %v1594, %v1650
      %v1655 = vmul.f32 %v1595, %v1650
      %v1656 = vmul.f32 %v1596, %v1652
      %v1657 = vmul.f32 %v1597, %v1652
      %v1658 = vmul.f32 %v1598, %v1652
      %v1659 = vpack.c.bf16 %v1616, %v1616
      %v1660 = vpack.c.bf16 %v1617, %v1617
      %v1661 = vpack.c.bf16 %v1618, %v1618
      %v1662 = vpack.c.bf16 %v1656, %v1653
      %v1663 = vpack.c.bf16 %v1657, %v1654
      %v1664 = vpack.c.bf16 %v1658, %v1655
      %1665 = vmatprep.subr.bf16.mxu0 0
      %1666 = vmatpush1.bf16.xpose.msra.mxu0 0
      %1667 = vmatprep.subr.bf16.mxu0 0
      %1668 = vmatpush1.bf16.xpose.msra.mxu0 0
      %1669 = vmatprep.subr.bf16.mxu0 0
      %1670 = vmatpush1.bf16.xpose.msra.mxu0 0
      %1671 = vmatprep.subr.bf16.mxu0 0
      %1672 = vmatpush1.bf16.xpose.msra.mxu0 0
      %1673 = vmatprep.subr.bf16.mxu0 0
      %1674 = vmatpush1.bf16.xpose.msra.mxu0 0
      %1675 = vmatprep.subr.bf16.mxu0 0
      %1676 = vmatpush1.bf16.xpose.msra.mxu0 0
      %1677 = vmatprep.subr.bf16.mxu0 0
      %1678 = vmatpush1.bf16.xpose.msra.mxu0 0
      %1679 = vmatprep.subr.bf16.mxu0 %v1663
      %1680 = vmatpush1.bf16.xpose.msra.mxu0 %v1662
      %1681 = vmatprep.subr.bf16.mxu0 0
      %1682 = vmatpush2.bf16.xpose.msra.mxu0 0
      %1683 = vmatprep.subr.bf16.mxu0 0
      %1684 = vmatpush2.bf16.xpose.msra.mxu0 0
      %1685 = vmatprep.subr.bf16.mxu0 0
      %1686 = vmatpush2.bf16.xpose.msra.mxu0 0
      %1687 = vmatprep.subr.bf16.mxu0 0
      %1688 = vmatpush2.bf16.xpose.msra.mxu0 0
      %1689 = vmatprep.subr.bf16.mxu0 0
      %1690 = vmatpush2.bf16.xpose.msra.mxu0 0
      %1691 = vmatprep.subr.bf16.mxu0 0
      %1692 = vmatpush2.bf16.xpose.msra.mxu0 0
      %1693 = vmatprep.subr.bf16.mxu0 0
      %1694 = vmatpush2.bf16.xpose.msra.mxu0 0
      %1695 = vmatprep.subr.bf16.mxu0 0
      %1696 = vmatpush2.bf16.xpose.msra.mxu0 0
      %1697 = vmatprep.mubr.bf16.mxu0 %v1660
      %1698 = vmatmul.mubr.bf16.gmra.mxu0 %v1659
      %v1699 = vpop.f32.mrf.mxu0
      %v1700 = vadd.f32 0.0, %v1699
      %v1701 = vpop.f32.mrf.mxu0
      %v1702 = vpop.f32.mrf.mxu0
      %v1703 = vpop.f32.mrf.mxu0
      %1704 = vdwg.mxu0
      %1705 = vmatprep.subr.bf16.mxu0 0
      %1706 = vmatpush1.bf16.xpose.msra.mxu0 0
      %1707 = vmatprep.subr.bf16.mxu0 0
      %1708 = vmatpush1.bf16.xpose.msra.mxu0 0
      %1709 = vmatprep.subr.bf16.mxu0 0
      %1710 = vmatpush1.bf16.xpose.msra.mxu0 0
      %1711 = vmatprep.subr.bf16.mxu0 0
      %1712 = vmatpush1.bf16.xpose.msra.mxu0 0
      %1713 = vmatprep.subr.bf16.mxu0 0
      %1714 = vmatpush1.bf16.xpose.msra.mxu0 0
      %1715 = vmatprep.subr.bf16.mxu0 0
      %1716 = vmatpush1.bf16.xpose.msra.mxu0 0
      %1717 = vmatprep.subr.bf16.mxu0 0
      %1718 = vmatpush1.bf16.xpose.msra.mxu0 0
      %1719 = vmatprep.subr.bf16.mxu0 0
      %1720 = vmatpush1.bf16.xpose.msra.mxu0 %v1664
      %1721 = vmatprep.subr.bf16.mxu0 0
      %1722 = vmatpush2.bf16.xpose.msra.mxu0 0
      %1723 = vmatprep.subr.bf16.mxu0 0
      %1724 = vmatpush2.bf16.xpose.msra.mxu0 0
      %1725 = vmatprep.subr.bf16.mxu0 0
      %1726 = vmatpush2.bf16.xpose.msra.mxu0 0
      %1727 = vmatprep.subr.bf16.mxu0 0
      %1728 = vmatpush2.bf16.xpose.msra.mxu0 0
      %1729 = vmatprep.subr.bf16.mxu0 0
      %1730 = vmatpush2.bf16.xpose.msra.mxu0 0
      %1731 = vmatprep.subr.bf16.mxu0 0
      %1732 = vmatpush2.bf16.xpose.msra.mxu0 0
      %1733 = vmatprep.subr.bf16.mxu0 0
      %1734 = vmatpush2.bf16.xpose.msra.mxu0 0
      %1735 = vmatprep.subr.bf16.mxu0 0
      %1736 = vmatpush2.bf16.xpose.msra.mxu0 0
      %1737 = vmatprep.mubr.bf16.mxu0 0
      %1738 = vmatmul.mubr.bf16.gmra.mxu0 %v1661
      %v1739 = vpop.f32.mrf.mxu0
      %v1740 = vadd.f32 %v1700, %v1739
      %v1741 = vpop.f32.mrf.mxu0
      %v1742 = vpop.f32.mrf.mxu0
      %v1743 = vpop.f32.mrf.mxu0
      %1744 = vdwg.mxu0
      %v1745 = vtanh.pop %v1740
      %v1746 = vsub.f32 %v1745, 1.0
      %v1747 = vmul.f32 %v1746, %v1746
      %v1748 = vmul.f32 %v1747, -50000000.0
      %v1749 = vmul.f32 %v1748, 1.442695
      %v1750 = vpow.pop %v1749
      %v1751 = vmul.f32 %v1750, %v503
      %v1752 = vsel %vm506, %v1751, 0.0
      %1753 = vadd.xlane.f32.xlu0 %v1752
      %v1754 = vpop.xlane.xlu0 %1753
      %v1755 = vsub.f32 %v1745, 0.9
      %v1756 = vmul.f32 %v1755, %v1755
      %v1757 = vmul.f32 %v1756, -50.0
      %v1758 = vmul.f32 %v1757, 1.442695
      %v1759 = vpow.pop %v1758
      %v1760 = vmul.f32 %v1759, %v503
      %v1761 = vmul.f32 %v1755, -20.0
      %v1762 = vmul.f32 %v1761, 1.442695
      %v1763 = vpow.pop %v1762
      %v1764 = vsel %vm506, %v1760, 0.0
      %1765 = vadd.xlane.f32.xlu0 %v1764
      %v1766 = vpop.xlane.xlu0 %1765
      %v1767 = vmul.f32 %v1763, 0.13533528
      %v1768 = vmul.f32 %v1760, %v1767
      %v1769 = vsel %vm506, %v1768, 0.0
      %1770 = vadd.xlane.f32.xlu0 %v1769
      %v1771 = vpop.xlane.xlu0 %1770
      %v1772 = vmul.f32 %v1763, 0.0024787523
      %v1773 = vmul.f32 %v1768, %v1772
      %v1774 = vsel %vm506, %v1773, 0.0
      %1775 = vadd.xlane.f32.xlu0 %v1774
      %v1776 = vpop.xlane.xlu0 %1775
      %v1777 = vmul.f32 %v1763, 4.539993e-05
      %v1778 = vmul.f32 %v1773, %v1777
      %v1779 = vsel %vm506, %v1778, 0.0
      %1780 = vadd.xlane.f32.xlu0 %v1779
      %v1781 = vpop.xlane.xlu0 %1780
      %v1782 = vmul.f32 %v1763, 8.315287e-07
      %v1783 = vmul.f32 %v1778, %v1782
      %v1784 = vsel %vm506, %v1783, 0.0
      %1785 = vadd.xlane.f32.xlu0 %v1784
      %v1786 = vpop.xlane.xlu0 %1785
      %v1787 = vmul.f32 %v1763, 1.5229979e-08
      %v1788 = vmul.f32 %v1783, %v1787
      %v1789 = vsel %vm506, %v1788, 0.0
      %1790 = vadd.xlane.f32.xlu0 %v1789
      %v1791 = vpop.xlane.xlu0 %1790
      %v1792 = vmul.f32 %v1763, 2.789468e-10
      %v1793 = vmul.f32 %v1788, %v1792
      %v1794 = vsel %vm506, %v1793, 0.0
      %1795 = vadd.xlane.f32.xlu0 %v1794
      %v1796 = vpop.xlane.xlu0 %1795
      %v1797 = vmul.f32 %v1763, 5.109089e-12
      %v1798 = vmul.f32 %v1793, %v1797
      %v1799 = vsel %vm506, %v1798, 0.0
      %1800 = vadd.xlane.f32.xlu0 %v1799
      %v1801 = vpop.xlane.xlu0 %1800
      %v1802 = vmul.f32 %v1763, 9.357623e-14
      %v1803 = vmul.f32 %v1798, %v1802
      %v1804 = vsel %vm506, %v1803, 0.0
      %1805 = vadd.xlane.f32.xlu0 %v1804
      %v1806 = vpop.xlane.xlu0 %1805
      %v1807 = vmul.f32 %v1763, 1.7139084e-15
      %v1808 = vmul.f32 %v1803, %v1807
      %v1809 = vsel %vm506, %v1808, 0.0
      %1810 = vadd.xlane.f32.xlu0 %v1809
      %v1811 = vpop.xlane.xlu0 %1810
      %v1812 = vsel %vm567, %v1754, %v1766
      %v1813 = vsel %vm569, %v1812, %v1771
      %v1814 = vsel %vm571, %v1813, %v1776
      %v1815 = vsel %vm573, %v1814, %v1781
      %v1816 = vsel %vm575, %v1815, %v1786
      %v1817 = vsel %vm577, %v1816, %v1791
      %v1818 = vsel %vm579, %v1817, %v1796
      %v1819 = vsel %vm581, %v1818, %v1801
      %v1820 = vsel %vm583, %v1819, %v1806
      %v1821 = vsel %vm585, %v1820, %v1811
      %v1822 = vmax.f32 %v1821, 1e-10
      %v1823 = vlog2.pop %v1822
      %v1824 = vmul.f32 %v1823, 0.6931472
      %v1825 = vmul.f32 %v1824, %v593
      %v1826 = vmul.f32 %v1821, %v599
      %v1827 = vmax.f32 %v1826, 1e-10
      %v1828 = vlog2.pop %v1827
      %v1829 = vmul.f32 %v1828, 0.6931472
      %v1830 = vmul.f32 %v1829, %v593
      %v1831 = vsel %vm605, %v1825, 0.0
      %v1832 = vrot.slane %v1831, 4
      %v1833 = vadd.f32 %v1831, %v1832
      %v1834 = vrot.slane %v1833, 2
      %v1835 = vadd.f32 %v1833, %v1834
      %v1836 = vrot.slane %v1835, 1
      %v1837 = vadd.f32 %v1835, %v1836
      %1839 = vrot.lane.b32.xlu0 %v1837, 22
      %v1840 = vpop.permute.xlu0 %1839
      %vm1842 = vcmask 262320
      %1843 = vst.msk [vmem:[%s382] sm:$0x1] %vm1842, %v1840
      %v1844 = vsel %vm605, %v1830, 0.0
      %v1845 = vrot.slane %v1844, 4
      %v1846 = vadd.f32 %v1844, %v1845
      %v1847 = vrot.slane %v1846, 2
      %v1848 = vadd.f32 %v1846, %v1847
      %v1849 = vrot.slane %v1848, 1
      %v1850 = vadd.f32 %v1848, %v1849
      %1852 = vrot.lane.b32.xlu0 %v1850, 22
      %v1853 = vpop.permute.xlu0 %1852
      %1855 = vst.msk [vmem:[%s385] sm:$0x1] %vm1842, %v1853
      %v1856 = vld [vmem:[%s6] sm:$0xff]
      %v1857 = vld [vmem:[%s6 + $0x8] sm:$0xf]
      %v1858 = vld [vmem:[%s6 + $0xc] sm:$0xff]
      %v1859 = vld [vmem:[%s6 + $0x14] sm:$0xf]
      %v1860 = vld [vmem:[%s6 + $0x18] sm:$0xff]
      %v1861 = vld [vmem:[%s6 + $0x20] sm:$0xf]
      %v1862 = vld [vmem:[%s6 + $0x24] sm:$0xff]
      %v1863 = vld [vmem:[%s6 + $0x2c] sm:$0xf]
      %v1864 = vld [vmem:[%s6 + $0x30] sm:$0xff]
      %v1865 = vld [vmem:[%s6 + $0x38] sm:$0xf]
      %v1866 = vld [vmem:[%s6 + $0x3c] sm:$0xff]
      %v1867 = vld [vmem:[%s6 + $0x44] sm:$0xf]
      %v1868 = vld [vmem:[%s6 + $0x48] sm:$0xff]
      %v1869 = vld [vmem:[%s6 + $0x50] sm:$0xf]
      %v1870 = vld [vmem:[%s6 + $0x54] sm:$0xff]
      %v1871 = vld [vmem:[%s6 + $0x5c] sm:$0xf]
      %v1872 = vld [vmem:[%s6 + $0x60] sm:$0xff]
      %v1873 = vld [vmem:[%s6 + $0x68] sm:$0xf]
      %v1874 = vld [vmem:[%s6 + $0x6c] sm:$0xff]
      %v1875 = vld [vmem:[%s6 + $0x74] sm:$0xf]
      %v1876 = vld [vmem:[%s6 + $0x78] sm:$0xff]
      %v1877 = vld [vmem:[%s6 + $0x80] sm:$0xf]
      %v1878 = vld [vmem:[%s6 + $0x84] sm:$0xff]
      %v1879 = vld [vmem:[%s6 + $0x8c] sm:$0xf]
      %v1880 = vld [vmem:[%s6 + $0x90] sm:$0xff]
      %v1881 = vld [vmem:[%s6 + $0x98] sm:$0xf]
      %v1882 = vld [vmem:[%s6 + $0x9c] sm:$0xff]
      %v1883 = vld [vmem:[%s6 + $0xa4] sm:$0xf]
      %v1884 = vld [vmem:[%s6 + $0xa8] sm:$0xff]
      %v1885 = vld [vmem:[%s6 + $0xb0] sm:$0xf]
      %v1886 = vld [vmem:[%s6 + $0xb4] sm:$0xff]
      %v1887 = vld [vmem:[%s6 + $0xbc] sm:$0xf]
      %v1888 = vld [vmem:[%s6 + $0xc0] sm:$0xff]
      %v1889 = vld [vmem:[%s6 + $0xc8] sm:$0xf]
      %v1890 = vld [vmem:[%s6 + $0xcc] sm:$0xff]
      %v1891 = vld [vmem:[%s6 + $0xd4] sm:$0xf]
      %v1892 = vld [vmem:[%s6 + $0xd8] sm:$0xff]
      %v1893 = vld [vmem:[%s6 + $0xe0] sm:$0xf]
      %v1894 = vld [vmem:[%s6 + $0xe4] sm:$0xff]
      %v1895 = vld [vmem:[%s6 + $0xec] sm:$0xf]
      %v1896 = vld [vmem:[%s6 + $0xf0] sm:$0xff]
      %v1897 = vld [vmem:[%s6 + $0xf8] sm:$0xf]
      %v1898 = vld [vmem:[%s6 + $0xfc] sm:$0xff]
      %v1899 = vld [vmem:[%s6 + $0x104] sm:$0xf]
      %v1900 = vld [vmem:[%s6 + $0x108] sm:$0xff]
      %v1901 = vld [vmem:[%s6 + $0x110] sm:$0xf]
      %v1902 = vld [vmem:[%s6 + $0x114] sm:$0xff]
      %v1903 = vld [vmem:[%s6 + $0x11c] sm:$0xf]
      %v1904 = vld [vmem:[%s6 + $0x120] sm:$0xff]
      %v1905 = vld [vmem:[%s6 + $0x128] sm:$0xf]
      %v1906 = vld [vmem:[%s6 + $0x12c] sm:$0xff]
      %v1907 = vld [vmem:[%s6 + $0x134] sm:$0xf]
      %v1908 = vld [vmem:[%s6 + $0x138] sm:$0xff]
      %v1909 = vld [vmem:[%s6 + $0x140] sm:$0xf]
      %v1910 = vld [vmem:[%s6 + $0x144] sm:$0xff]
      %v1911 = vld [vmem:[%s6 + $0x14c] sm:$0xf]
      %v1912 = vld [vmem:[%s6 + $0x150] sm:$0xff]
      %v1913 = vld [vmem:[%s6 + $0x158] sm:$0xf]
      %v1914 = vld [vmem:[%s6 + $0x15c] sm:$0xff]
      %v1915 = vld [vmem:[%s6 + $0x164] sm:$0xf]
      %v1916 = vld [vmem:[%s6 + $0x168] sm:$0xff]
      %v1917 = vld [vmem:[%s6 + $0x170] sm:$0xf]
      %v1918 = vld [vmem:[%s6 + $0x174] sm:$0xff]
      %v1919 = vld [vmem:[%s6 + $0x17c] sm:$0xf]
      %vm1920 = vcmask 1044480
      %v1921 = vrot.slane %v396, 3
      %v1922 = vrot.slane 0.0, 3
      %v1923 = vsel %vm1920, %v1921, %v1922
      %1924 = vrot.lane.b32.xlu0 %v1923, 64
      %v1925 = vpop.permute.xlu0 %1924
      %v1927 = vsel %vm400, %v1256, %v1925
      %v1928 = vrot.slane %v397, 3
      %v1929 = vrot.slane %v398, 3
      %v1930 = vsel %vm1920, %v1928, %v1929
      %v1931 = vsel %vm1920, %v1929, %v1922
      %1932 = vrot.lane.b32.xlu0 %v1930, 64
      %v1933 = vpop.permute.xlu0 %1932
      %1934 = vrot.lane.b32.xlu0 %v1931, 64
      %v1935 = vpop.permute.xlu0 %1934
      %v1938 = vsel %vm400, %v1260, %v1933
      %v1939 = vsel %vm400, %v1261, %v1935
      %v1940 = vpack.c.bf16 %v1938, %v1927
      %v1941 = vpack.c.bf16 %v1939, %v1939
      %v1942 = vlaneseq
      %v1943 = vshrl.u32 %v1942, 7
      %v1944 = vsub.s32 2, %v1943
      %v1945 = vrot.slane %v623, %v1944
      %v1946 = vlaneseq
      %v1947 = vshrl.u32 %v1946, 7
      %v1948 = vsub.s32 6, %v1947
      %v1949 = vrot.slane %v623, %v1948
      %v1950 = vlaneseq
      %v1951 = vshrl.u32 %v1950, 7
      %v1952 = vsub.s32 2, %v1951
      %v1953 = vrot.slane %v624, %v1952
      %v1957 = vlaneseq
      %v1958 = vshrl.u32 %v1957, 7
      %v1959 = vsub.s32 2, %v1958
      %v1960 = vrot.slane %v1945, %v1959
      %v1961 = vlaneseq
      %v1962 = vshrl.u32 %v1961, 7
      %v1963 = vsub.s32 2, %v1962
      %v1964 = vrot.slane %v1949, %v1963
      %v1965 = vlaneseq
      %v1966 = vshrl.u32 %v1965, 7
      %v1967 = vsub.s32 2, %v1966
      %v1968 = vrot.slane %v1953, %v1967
      %v2033 = vunpack.c.l.b16 %v1856
      %v2034 = vunpack.c.h.b16 %v1856
      %v2035 = vunpack.c.l.b16 %v1857
      %v2036 = vunpack.c.l.b16 %v1858
      %v2037 = vunpack.c.h.b16 %v1858
      %v2038 = vunpack.c.l.b16 %v1859
      %v2039 = vunpack.c.l.b16 %v1860
      %v2040 = vunpack.c.h.b16 %v1860
      %v2041 = vunpack.c.l.b16 %v1861
      %v2042 = vunpack.c.l.b16 %v1862
      %v2043 = vunpack.c.h.b16 %v1862
      %v2044 = vunpack.c.l.b16 %v1863
      %v2045 = vunpack.c.l.b16 %v1864
      %v2046 = vunpack.c.h.b16 %v1864
      %v2047 = vunpack.c.l.b16 %v1865
      %v2048 = vunpack.c.l.b16 %v1866
      %v2049 = vunpack.c.h.b16 %v1866
      %v2050 = vunpack.c.l.b16 %v1867
      %v2051 = vunpack.c.l.b16 %v1868
      %v2052 = vunpack.c.h.b16 %v1868
      %v2053 = vunpack.c.l.b16 %v1869
      %v2054 = vunpack.c.l.b16 %v1870
      %v2055 = vunpack.c.h.b16 %v1870
      %v2056 = vunpack.c.l.b16 %v1871
      %v2057 = vunpack.c.l.b16 %v1872
      %v2058 = vunpack.c.h.b16 %v1872
      %v2059 = vunpack.c.l.b16 %v1873
      %v2060 = vunpack.c.l.b16 %v1874
      %v2061 = vunpack.c.h.b16 %v1874
      %v2062 = vunpack.c.l.b16 %v1875
      %v2063 = vunpack.c.l.b16 %v1876
      %v2064 = vunpack.c.h.b16 %v1876
      %v2065 = vunpack.c.l.b16 %v1877
      %v2066 = vunpack.c.l.b16 %v1878
      %v2067 = vunpack.c.h.b16 %v1878
      %v2068 = vunpack.c.l.b16 %v1879
      %v2069 = vunpack.c.l.b16 %v1880
      %v2070 = vunpack.c.h.b16 %v1880
      %v2071 = vunpack.c.l.b16 %v1881
      %v2072 = vunpack.c.l.b16 %v1882
      %v2073 = vunpack.c.h.b16 %v1882
      %v2074 = vunpack.c.l.b16 %v1883
      %v2075 = vunpack.c.l.b16 %v1884
      %v2076 = vunpack.c.h.b16 %v1884
      %v2077 = vunpack.c.l.b16 %v1885
      %v2078 = vunpack.c.l.b16 %v1886
      %v2079 = vunpack.c.h.b16 %v1886
      %v2080 = vunpack.c.l.b16 %v1887
      %v2081 = vunpack.c.l.b16 %v1888
      %v2082 = vunpack.c.h.b16 %v1888
      %v2083 = vunpack.c.l.b16 %v1889
      %v2084 = vunpack.c.l.b16 %v1890
      %v2085 = vunpack.c.h.b16 %v1890
      %v2086 = vunpack.c.l.b16 %v1891
      %v2087 = vunpack.c.l.b16 %v1892
      %v2088 = vunpack.c.h.b16 %v1892
      %v2089 = vunpack.c.l.b16 %v1893
      %v2090 = vunpack.c.l.b16 %v1894
      %v2091 = vunpack.c.h.b16 %v1894
      %v2092 = vunpack.c.l.b16 %v1895
      %v2093 = vunpack.c.l.b16 %v1896
      %v2094 = vunpack.c.h.b16 %v1896
      %v2095 = vunpack.c.l.b16 %v1897
      %v2096 = vunpack.c.l.b16 %v1898
      %v2097 = vunpack.c.h.b16 %v1898
      %v2098 = vunpack.c.l.b16 %v1899
      %v2099 = vunpack.c.l.b16 %v1900
      %v2100 = vunpack.c.h.b16 %v1900
      %v2101 = vunpack.c.l.b16 %v1901
      %v2102 = vunpack.c.l.b16 %v1902
      %v2103 = vunpack.c.h.b16 %v1902
      %v2104 = vunpack.c.l.b16 %v1903
      %v2105 = vunpack.c.l.b16 %v1904
      %v2106 = vunpack.c.h.b16 %v1904
      %v2107 = vunpack.c.l.b16 %v1905
      %v2108 = vunpack.c.l.b16 %v1906
      %v2109 = vunpack.c.h.b16 %v1906
      %v2110 = vunpack.c.l.b16 %v1907
      %v2111 = vunpack.c.l.b16 %v1908
      %v2112 = vunpack.c.h.b16 %v1908
      %v2113 = vunpack.c.l.b16 %v1909
      %v2114 = vunpack.c.l.b16 %v1910
      %v2115 = vunpack.c.h.b16 %v1910
      %v2116 = vunpack.c.l.b16 %v1911
      %v2117 = vunpack.c.l.b16 %v1912
      %v2118 = vunpack.c.h.b16 %v1912
      %v2119 = vunpack.c.l.b16 %v1913
      %v2120 = vunpack.c.l.b16 %v1914
      %v2121 = vunpack.c.h.b16 %v1914
      %v2122 = vunpack.c.l.b16 %v1915
      %v2123 = vunpack.c.l.b16 %v1916
      %v2124 = vunpack.c.h.b16 %v1916
      %v2125 = vunpack.c.l.b16 %v1917
      %v2126 = vunpack.c.l.b16 %v1918
      %v2127 = vunpack.c.h.b16 %v1918
      %v2128 = vunpack.c.l.b16 %v1919
      %v2129 = vpack.c.b16 %v2036, %v2033
      %v2130 = vpack.c.b16 %v2037, %v2034
      %v2131 = vpack.c.b16 %v2038, %v2035
      %v2132 = vpack.c.b16 %v2042, %v2039
      %v2133 = vpack.c.b16 %v2043, %v2040
      %v2134 = vpack.c.b16 %v2044, %v2041
      %v2135 = vpack.c.b16 %v2048, %v2045
      %v2136 = vpack.c.b16 %v2049, %v2046
      %v2137 = vpack.c.b16 %v2050, %v2047
      %v2138 = vpack.c.b16 %v2054, %v2051
      %v2139 = vpack.c.b16 %v2055, %v2052
      %v2140 = vpack.c.b16 %v2056, %v2053
      %v2141 = vpack.c.b16 %v2060, %v2057
      %v2142 = vpack.c.b16 %v2061, %v2058
      %v2143 = vpack.c.b16 %v2062, %v2059
      %v2144 = vpack.c.b16 %v2066, %v2063
      %v2145 = vpack.c.b16 %v2067, %v2064
      %v2146 = vpack.c.b16 %v2068, %v2065
      %v2147 = vpack.c.b16 %v2072, %v2069
      %v2148 = vpack.c.b16 %v2073, %v2070
      %v2149 = vpack.c.b16 %v2074, %v2071
      %v2150 = vpack.c.b16 %v2078, %v2075
      %v2151 = vpack.c.b16 %v2079, %v2076
      %v2152 = vpack.c.b16 %v2080, %v2077
      %v2153 = vpack.c.b16 %v2084, %v2081
      %v2154 = vpack.c.b16 %v2085, %v2082
      %v2155 = vpack.c.b16 %v2086, %v2083
      %v2156 = vpack.c.b16 %v2090, %v2087
      %v2157 = vpack.c.b16 %v2091, %v2088
      %v2158 = vpack.c.b16 %v2092, %v2089
      %v2159 = vpack.c.b16 %v2096, %v2093
      %v2160 = vpack.c.b16 %v2097, %v2094
      %v2161 = vpack.c.b16 %v2098, %v2095
      %v2162 = vpack.c.b16 %v2102, %v2099
      %v2163 = vpack.c.b16 %v2103, %v2100
      %v2164 = vpack.c.b16 %v2104, %v2101
      %v2165 = vpack.c.b16 %v2108, %v2105
      %v2166 = vpack.c.b16 %v2109, %v2106
      %v2167 = vpack.c.b16 %v2110, %v2107
      %v2168 = vpack.c.b16 %v2114, %v2111
      %v2169 = vpack.c.b16 %v2115, %v2112
      %v2170 = vpack.c.b16 %v2116, %v2113
      %v2171 = vpack.c.b16 %v2120, %v2117
      %v2172 = vpack.c.b16 %v2121, %v2118
      %v2173 = vpack.c.b16 %v2122, %v2119
      %v2174 = vpack.c.b16 %v2126, %v2123
      %v2175 = vpack.c.b16 %v2127, %v2124
      %v2176 = vpack.c.b16 %v2128, %v2125
      %2225 = vmatprep.subr.bf16.mxu0 %v2151
      %2226 = vmatpush1.bf16.msra.mxu0 %v2150
      %2227 = vmatprep.subr.bf16.mxu0 %v2148
      %2228 = vmatpush1.bf16.msra.mxu0 %v2147
      %2229 = vmatprep.subr.bf16.mxu0 %v2145
      %2230 = vmatpush1.bf16.msra.mxu0 %v2144
      %2231 = vmatprep.subr.bf16.mxu0 %v2142
      %2232 = vmatpush1.bf16.msra.mxu0 %v2141
      %2233 = vmatprep.subr.bf16.mxu0 %v2139
      %2234 = vmatpush1.bf16.msra.mxu0 %v2138
      %2235 = vmatprep.subr.bf16.mxu0 %v2136
      %2236 = vmatpush1.bf16.msra.mxu0 %v2135
      %2237 = vmatprep.subr.bf16.mxu0 %v2133
      %2238 = vmatpush1.bf16.msra.mxu0 %v2132
      %2239 = vmatprep.subr.bf16.mxu0 %v2130
      %2240 = vmatpush1.bf16.msra.mxu0 %v2129
      %2241 = vmatprep.subr.bf16.mxu0 %v2175
      %2242 = vmatpush2.bf16.msra.mxu0 %v2174
      %2243 = vmatprep.subr.bf16.mxu0 %v2172
      %2244 = vmatpush2.bf16.msra.mxu0 %v2171
      %2245 = vmatprep.subr.bf16.mxu0 %v2169
      %2246 = vmatpush2.bf16.msra.mxu0 %v2168
      %2247 = vmatprep.subr.bf16.mxu0 %v2166
      %2248 = vmatpush2.bf16.msra.mxu0 %v2165
      %2249 = vmatprep.subr.bf16.mxu0 %v2163
      %2250 = vmatpush2.bf16.msra.mxu0 %v2162
      %2251 = vmatprep.subr.bf16.mxu0 %v2160
      %2252 = vmatpush2.bf16.msra.mxu0 %v2159
      %2253 = vmatprep.subr.bf16.mxu0 %v2157
      %2254 = vmatpush2.bf16.msra.mxu0 %v2156
      %2255 = vmatprep.subr.bf16.mxu0 %v2154
      %2256 = vmatpush2.bf16.msra.mxu0 %v2153
      %2257 = vmatprep.mubr.bf16.mxu0 %v1940
      %2258 = vmatmul.mubr.bf16.gmra.mxu0 %v681
      %v2259 = vpop.f32.mrf.mxu0
      %v2260 = vadd.f32 %v1960, %v2259
      %v2261 = vpop.f32.mrf.mxu0
      %v2262 = vadd.f32 %v1964, %v2261
      %v2263 = vpop.f32.mrf.mxu0
      %v2264 = vadd.f32 %v1960, %v2263
      %v2265 = vpop.f32.mrf.mxu0
      %v2266 = vadd.f32 %v1964, %v2265
      %2267 = vmatprep.mubr.bf16.mxu0 %v1941
      %2268 = vmatmul.mubr.bf16.gmra.mxu0 %v682
      %v2269 = vpop.f32.mrf.mxu0
      %v2270 = vadd.f32 %v1960, %v2269
      %v2271 = vpop.f32.mrf.mxu0
      %v2272 = vadd.f32 %v1964, %v2271
      %v2273 = vpop.f32.mrf.mxu0
      %v2274 = vpop.f32.mrf.mxu0
      %2275 = vdwg.mxu0
      %2276 = vmatprep.subr.bf16.mxu0 0
      %2277 = vmatpush1.bf16.msra.mxu0 %v2152
      %2278 = vmatprep.subr.bf16.mxu0 0
      %2279 = vmatpush1.bf16.msra.mxu0 %v2149
      %2280 = vmatprep.subr.bf16.mxu0 0
      %2281 = vmatpush1.bf16.msra.mxu0 %v2146
      %2282 = vmatprep.subr.bf16.mxu0 0
      %2283 = vmatpush1.bf16.msra.mxu0 %v2143
      %2284 = vmatprep.subr.bf16.mxu0 0
      %2285 = vmatpush1.bf16.msra.mxu0 %v2140
      %2286 = vmatprep.subr.bf16.mxu0 0
      %2287 = vmatpush1.bf16.msra.mxu0 %v2137
      %2288 = vmatprep.subr.bf16.mxu0 0
      %2289 = vmatpush1.bf16.msra.mxu0 %v2134
      %2290 = vmatprep.subr.bf16.mxu0 0
      %2291 = vmatpush1.bf16.msra.mxu0 %v2131
      %2292 = vmatprep.subr.bf16.mxu0 0
      %2293 = vmatpush2.bf16.msra.mxu0 %v2176
      %2294 = vmatprep.subr.bf16.mxu0 0
      %2295 = vmatpush2.bf16.msra.mxu0 %v2173
      %2296 = vmatprep.subr.bf16.mxu0 0
      %2297 = vmatpush2.bf16.msra.mxu0 %v2170
      %2298 = vmatprep.subr.bf16.mxu0 0
      %2299 = vmatpush2.bf16.msra.mxu0 %v2167
      %2300 = vmatprep.subr.bf16.mxu0 0
      %2301 = vmatpush2.bf16.msra.mxu0 %v2164
      %2302 = vmatprep.subr.bf16.mxu0 0
      %2303 = vmatpush2.bf16.msra.mxu0 %v2161
      %2304 = vmatprep.subr.bf16.mxu0 0
      %2305 = vmatpush2.bf16.msra.mxu0 %v2158
      %2306 = vmatprep.subr.bf16.mxu0 0
      %2307 = vmatpush2.bf16.msra.mxu0 %v2155
      %2308 = vmatprep.mubr.bf16.mxu0 %v1940
      %2309 = vmatmul.mubr.bf16.gmra.mxu0 %v681
      %v2310 = vpop.f32.mrf.mxu0
      %v2311 = vadd.f32 %v1968, %v2310
      %v2312 = vpop.f32.mrf.mxu0
      %v2313 = vpop.f32.mrf.mxu0
      %v2314 = vadd.f32 %v1968, %v2313
      %v2315 = vpop.f32.mrf.mxu0
      %2316 = vmatprep.mubr.bf16.mxu0 %v1941
      %2317 = vmatmul.mubr.bf16.gmra.mxu0 %v682
      %v2318 = vpop.f32.mrf.mxu0
      %v2319 = vadd.f32 %v1968, %v2318
      %v2320 = vpop.f32.mrf.mxu0
      %v2321 = vpop.f32.mrf.mxu0
      %v2322 = vpop.f32.mrf.mxu0
      %2323 = vdwg.mxu0
      %v2324 = vmax.f32 %v2260, 0.0
      %v2325 = vmax.f32 %v2262, 0.0
      %v2326 = vmax.f32 %v2311, 0.0
      %v2327 = vmax.f32 %v2264, 0.0
      %v2328 = vmax.f32 %v2266, 0.0
      %v2329 = vmax.f32 %v2314, 0.0
      %v2330 = vmax.f32 %v2270, 0.0
      %v2331 = vmax.f32 %v2272, 0.0
      %v2332 = vmax.f32 %v2319, 0.0
      %v2333 = vmul.f32 %v2324, %v2324
      %v2334 = vmul.f32 %v2325, %v2325
      %v2335 = vmul.f32 %v2326, %v2326
      %v2336 = vadd.f32 %v2333, %v2334
      %v2337 = vadd.f32 %v2336, %v2335
      %2338 = vadd.xlane.f32.xlu0 %v2337
      %v2339 = vpop.xlane.xlu0 %2338
      %v2340 = vrsqrt.pop %v2339
      %v2341 = vmul.f32 %v2339, %v2340
      %vm2342 = vcmp.eq.f32.partialorder %v2339, inf
      %v2343 = vsel %vm2342, %v2339, %v2341
      %vm2344 = vcmp.eq.f32.partialorder %v2339, 0.0
      %v2345 = vand.u32 %v2339, 2147483648
      %v2346 = vsel %vm2344, %v2345, %v2343
      %v2347 = vadd.f32 %v2346, 1e-13
      %v2348 = vrcp.pop %v2347
      %v2349 = vmul.f32 1.0, %v2348
      %v2350 = vmul.f32 %v2324, %v2349
      %v2351 = vmul.f32 %v2325, %v2349
      %v2352 = vmul.f32 %v2326, %v2349
      %v2353 = vmul.f32 %v2327, %v2327
      %v2354 = vmul.f32 %v2328, %v2328
      %v2355 = vmul.f32 %v2329, %v2329
      %v2356 = vmul.f32 %v2330, %v2330
      %v2357 = vmul.f32 %v2331, %v2331
      %v2358 = vmul.f32 %v2332, %v2332
      %v2359 = vadd.f32 %v2353, %v2354
      %v2360 = vadd.f32 %v2359, %v2355
      %2361 = vadd.xlane.f32.xlu0 %v2360
      %v2362 = vpop.xlane.xlu0 %2361
      %v2363 = vadd.f32 %v2356, %v2357
      %v2364 = vadd.f32 %v2363, %v2358
      %2365 = vadd.xlane.f32.xlu0 %v2364
      %v2366 = vpop.xlane.xlu0 %2365
      %v2367 = vrsqrt.pop %v2362
      %v2368 = vmul.f32 %v2362, %v2367
      %vm2369 = vcmp.eq.f32.partialorder %v2362, inf
      %v2370 = vsel %vm2369, %v2362, %v2368
      %vm2371 = vcmp.eq.f32.partialorder %v2362, 0.0
      %v2372 = vand.u32 %v2362, 2147483648
      %v2373 = vsel %vm2371, %v2372, %v2370
      %v2374 = vrsqrt.pop %v2366
      %v2375 = vmul.f32 %v2366, %v2374
      %vm2376 = vcmp.eq.f32.partialorder %v2366, inf
      %v2377 = vsel %vm2376, %v2366, %v2375
      %vm2378 = vcmp.eq.f32.partialorder %v2366, 0.0
      %v2379 = vand.u32 %v2366, 2147483648
      %v2380 = vsel %vm2378, %v2379, %v2377
      %v2381 = vadd.f32 %v2373, 1e-13
      %v2382 = vadd.f32 %v2380, 1e-13
      %v2383 = vrcp.pop %v2381
      %v2384 = vmul.f32 1.0, %v2383
      %v2385 = vrcp.pop %v2382
      %v2386 = vmul.f32 1.0, %v2385
      %v2387 = vmul.f32 %v2327, %v2384
      %v2388 = vmul.f32 %v2328, %v2384
      %v2389 = vmul.f32 %v2329, %v2384
      %v2390 = vmul.f32 %v2330, %v2386
      %v2391 = vmul.f32 %v2331, %v2386
      %v2392 = vmul.f32 %v2332, %v2386
      %v2393 = vpack.c.bf16 %v2350, %v2350
      %v2394 = vpack.c.bf16 %v2351, %v2351
      %v2395 = vpack.c.bf16 %v2352, %v2352
      %v2396 = vpack.c.bf16 %v2390, %v2387
      %v2397 = vpack.c.bf16 %v2391, %v2388
      %v2398 = vpack.c.bf16 %v2392, %v2389
      %2399 = vmatprep.subr.bf16.mxu0 0
      %2400 = vmatpush1.bf16.xpose.msra.mxu0 0
      %2401 = vmatprep.subr.bf16.mxu0 0
      %2402 = vmatpush1.bf16.xpose.msra.mxu0 0
      %2403 = vmatprep.subr.bf16.mxu0 0
      %2404 = vmatpush1.bf16.xpose.msra.mxu0 0
      %2405 = vmatprep.subr.bf16.mxu0 0
      %2406 = vmatpush1.bf16.xpose.msra.mxu0 0
      %2407 = vmatprep.subr.bf16.mxu0 0
      %2408 = vmatpush1.bf16.xpose.msra.mxu0 0
      %2409 = vmatprep.subr.bf16.mxu0 0
      %2410 = vmatpush1.bf16.xpose.msra.mxu0 0
      %2411 = vmatprep.subr.bf16.mxu0 0
      %2412 = vmatpush1.bf16.xpose.msra.mxu0 0
      %2413 = vmatprep.subr.bf16.mxu0 %v2397
      %2414 = vmatpush1.bf16.xpose.msra.mxu0 %v2396
      %2415 = vmatprep.subr.bf16.mxu0 0
      %2416 = vmatpush2.bf16.xpose.msra.mxu0 0
      %2417 = vmatprep.subr.bf16.mxu0 0
      %2418 = vmatpush2.bf16.xpose.msra.mxu0 0
      %2419 = vmatprep.subr.bf16.mxu0 0
      %2420 = vmatpush2.bf16.xpose.msra.mxu0 0
      %2421 = vmatprep.subr.bf16.mxu0 0
      %2422 = vmatpush2.bf16.xpose.msra.mxu0 0
      %2423 = vmatprep.subr.bf16.mxu0 0
      %2424 = vmatpush2.bf16.xpose.msra.mxu0 0
      %2425 = vmatprep.subr.bf16.mxu0 0
      %2426 = vmatpush2.bf16.xpose.msra.mxu0 0
      %2427 = vmatprep.subr.bf16.mxu0 0
      %2428 = vmatpush2.bf16.xpose.msra.mxu0 0
      %2429 = vmatprep.subr.bf16.mxu0 0
      %2430 = vmatpush2.bf16.xpose.msra.mxu0 0
      %2431 = vmatprep.mubr.bf16.mxu0 %v2394
      %2432 = vmatmul.mubr.bf16.gmra.mxu0 %v2393
      %v2433 = vpop.f32.mrf.mxu0
      %v2434 = vadd.f32 0.0, %v2433
      %v2435 = vpop.f32.mrf.mxu0
      %v2436 = vpop.f32.mrf.mxu0
      %v2437 = vpop.f32.mrf.mxu0
      %2438 = vdwg.mxu0
      %2439 = vmatprep.subr.bf16.mxu0 0
      %2440 = vmatpush1.bf16.xpose.msra.mxu0 0
      %2441 = vmatprep.subr.bf16.mxu0 0
      %2442 = vmatpush1.bf16.xpose.msra.mxu0 0
      %2443 = vmatprep.subr.bf16.mxu0 0
      %2444 = vmatpush1.bf16.xpose.msra.mxu0 0
      %2445 = vmatprep.subr.bf16.mxu0 0
      %2446 = vmatpush1.bf16.xpose.msra.mxu0 0
      %2447 = vmatprep.subr.bf16.mxu0 0
      %2448 = vmatpush1.bf16.xpose.msra.mxu0 0
      %2449 = vmatprep.subr.bf16.mxu0 0
      %2450 = vmatpush1.bf16.xpose.msra.mxu0 0
      %2451 = vmatprep.subr.bf16.mxu0 0
      %2452 = vmatpush1.bf16.xpose.msra.mxu0 0
      %2453 = vmatprep.subr.bf16.mxu0 0
      %2454 = vmatpush1.bf16.xpose.msra.mxu0 %v2398
      %2455 = vmatprep.subr.bf16.mxu0 0
      %2456 = vmatpush2.bf16.xpose.msra.mxu0 0
      %2457 = vmatprep.subr.bf16.mxu0 0
      %2458 = vmatpush2.bf16.xpose.msra.mxu0 0
      %2459 = vmatprep.subr.bf16.mxu0 0
      %2460 = vmatpush2.bf16.xpose.msra.mxu0 0
      %2461 = vmatprep.subr.bf16.mxu0 0
      %2462 = vmatpush2.bf16.xpose.msra.mxu0 0
      %2463 = vmatprep.subr.bf16.mxu0 0
      %2464 = vmatpush2.bf16.xpose.msra.mxu0 0
      %2465 = vmatprep.subr.bf16.mxu0 0
      %2466 = vmatpush2.bf16.xpose.msra.mxu0 0
      %2467 = vmatprep.subr.bf16.mxu0 0
      %2468 = vmatpush2.bf16.xpose.msra.mxu0 0
      %2469 = vmatprep.subr.bf16.mxu0 0
      %2470 = vmatpush2.bf16.xpose.msra.mxu0 0
      %2471 = vmatprep.mubr.bf16.mxu0 0
      %2472 = vmatmul.mubr.bf16.gmra.mxu0 %v2395
      %v2473 = vpop.f32.mrf.mxu0
      %v2474 = vadd.f32 %v2434, %v2473
      %v2475 = vpop.f32.mrf.mxu0
      %v2476 = vpop.f32.mrf.mxu0
      %v2477 = vpop.f32.mrf.mxu0
      %2478 = vdwg.mxu0
      %v2479 = vtanh.pop %v2474
      %v2480 = vsub.f32 %v2479, 1.0
      %v2481 = vmul.f32 %v2480, %v2480
      %v2482 = vmul.f32 %v2481, -50000000.0
      %v2483 = vmul.f32 %v2482, 1.442695
      %v2484 = vpow.pop %v2483
      %v2485 = vmul.f32 %v2484, %v503
      %v2486 = vsel %vm506, %v2485, 0.0
      %2487 = vadd.xlane.f32.xlu0 %v2486
      %v2488 = vpop.xlane.xlu0 %2487
      %v2489 = vsub.f32 %v2479, 0.9
      %v2490 = vmul.f32 %v2489, %v2489
      %v2491 = vmul.f32 %v2490, -50.0
      %v2492 = vmul.f32 %v2491, 1.442695
      %v2493 = vpow.pop %v2492
      %v2494 = vmul.f32 %v2493, %v503
      %v2495 = vmul.f32 %v2489, -20.0
      %v2496 = vmul.f32 %v2495, 1.442695
      %v2497 = vpow.pop %v2496
      %v2498 = vsel %vm506, %v2494, 0.0
      %2499 = vadd.xlane.f32.xlu0 %v2498
      %v2500 = vpop.xlane.xlu0 %2499
      %v2501 = vmul.f32 %v2497, 0.13533528
      %v2502 = vmul.f32 %v2494, %v2501
      %v2503 = vsel %vm506, %v2502, 0.0
      %2504 = vadd.xlane.f32.xlu0 %v2503
      %v2505 = vpop.xlane.xlu0 %2504
      %v2506 = vmul.f32 %v2497, 0.0024787523
      %v2507 = vmul.f32 %v2502, %v2506
      %v2508 = vsel %vm506, %v2507, 0.0
      %2509 = vadd.xlane.f32.xlu0 %v2508
      %v2510 = vpop.xlane.xlu0 %2509
      %v2511 = vmul.f32 %v2497, 4.539993e-05
      %v2512 = vmul.f32 %v2507, %v2511
      %v2513 = vsel %vm506, %v2512, 0.0
      %2514 = vadd.xlane.f32.xlu0 %v2513
      %v2515 = vpop.xlane.xlu0 %2514
      %v2516 = vmul.f32 %v2497, 8.315287e-07
      %v2517 = vmul.f32 %v2512, %v2516
      %v2518 = vsel %vm506, %v2517, 0.0
      %2519 = vadd.xlane.f32.xlu0 %v2518
      %v2520 = vpop.xlane.xlu0 %2519
      %v2521 = vmul.f32 %v2497, 1.5229979e-08
      %v2522 = vmul.f32 %v2517, %v2521
      %v2523 = vsel %vm506, %v2522, 0.0
      %2524 = vadd.xlane.f32.xlu0 %v2523
      %v2525 = vpop.xlane.xlu0 %2524
      %v2526 = vmul.f32 %v2497, 2.789468e-10
      %v2527 = vmul.f32 %v2522, %v2526
      %v2528 = vsel %vm506, %v2527, 0.0
      %2529 = vadd.xlane.f32.xlu0 %v2528
      %v2530 = vpop.xlane.xlu0 %2529
      %v2531 = vmul.f32 %v2497, 5.109089e-12
      %v2532 = vmul.f32 %v2527, %v2531
      %v2533 = vsel %vm506, %v2532, 0.0
      %2534 = vadd.xlane.f32.xlu0 %v2533
      %v2535 = vpop.xlane.xlu0 %2534
      %v2536 = vmul.f32 %v2497, 9.357623e-14
      %v2537 = vmul.f32 %v2532, %v2536
      %v2538 = vsel %vm506, %v2537, 0.0
      %2539 = vadd.xlane.f32.xlu0 %v2538
      %v2540 = vpop.xlane.xlu0 %2539
      %v2541 = vmul.f32 %v2497, 1.7139084e-15
      %v2542 = vmul.f32 %v2537, %v2541
      %v2543 = vsel %vm506, %v2542, 0.0
      %2544 = vadd.xlane.f32.xlu0 %v2543
      %v2545 = vpop.xlane.xlu0 %2544
      %v2546 = vsel %vm567, %v2488, %v2500
      %v2547 = vsel %vm569, %v2546, %v2505
      %v2548 = vsel %vm571, %v2547, %v2510
      %v2549 = vsel %vm573, %v2548, %v2515
      %v2550 = vsel %vm575, %v2549, %v2520
      %v2551 = vsel %vm577, %v2550, %v2525
      %v2552 = vsel %vm579, %v2551, %v2530
      %v2553 = vsel %vm581, %v2552, %v2535
      %v2554 = vsel %vm583, %v2553, %v2540
      %v2555 = vsel %vm585, %v2554, %v2545
      %v2556 = vmax.f32 %v2555, 1e-10
      %v2557 = vlog2.pop %v2556
      %v2558 = vmul.f32 %v2557, 0.6931472
      %v2559 = vmul.f32 %v2558, %v593
      %v2560 = vmul.f32 %v2555, %v599
      %v2561 = vmax.f32 %v2560, 1e-10
      %v2562 = vlog2.pop %v2561
      %v2563 = vmul.f32 %v2562, 0.6931472
      %v2564 = vmul.f32 %v2563, %v593
      %v2565 = vsel %vm605, %v2559, 0.0
      %v2566 = vrot.slane %v2565, 4
      %v2567 = vadd.f32 %v2565, %v2566
      %v2568 = vrot.slane %v2567, 2
      %v2569 = vadd.f32 %v2567, %v2568
      %v2570 = vrot.slane %v2569, 1
      %v2571 = vadd.f32 %v2569, %v2570
      %2573 = vrot.lane.b32.xlu0 %v2571, 33
      %v2574 = vpop.permute.xlu0 %2573
      %vm2576 = vcmask 352520
      %2577 = vst.msk [vmem:[%s382] sm:$0x1] %vm2576, %v2574
      %v2578 = vsel %vm605, %v2564, 0.0
      %v2579 = vrot.slane %v2578, 4
      %v2580 = vadd.f32 %v2578, %v2579
      %v2581 = vrot.slane %v2580, 2
      %v2582 = vadd.f32 %v2580, %v2581
      %v2583 = vrot.slane %v2582, 1
      %v2584 = vadd.f32 %v2582, %v2583
      %2586 = vrot.lane.b32.xlu0 %v2584, 33
      %v2587 = vpop.permute.xlu0 %2586
      %2589 = vst.msk [vmem:[%s385] sm:$0x1] %vm2576, %v2587
      %p2590 = scmp.lt.s32.totalorder %s21, 1
      %s2591 = scalar_select %p2590, %s21, 1
      %s2592 = scalar_lea.vmem %s8, %s2591
      %p2593 = scmp.lt.s32.totalorder %s21, 1
      %s2594 = scalar_select %p2593, %s21, 1
      %s2595 = scalar_lea.vmem %s9, %s2594
      // Predicated region
      $region53: #{matchmaker_forward.1} parent=51 // pred_check
        %p2596 = pneg %p227
      $region54: #{matchmaker_forward.1} parent=51 // pred_check_branch
        %2598 = sbr.rel (%p2596) target = $region56
      $region55: #{matchmaker_forward.1} parent=51 // pred_region
        _
      $region56: #{matchmaker_forward.1} parent=51 // pred_fallthru
        _
      // Predicated region
      $region57: #{matchmaker_forward.1} parent=51 // pred_check
        %p2599 = pneg %p253
      $region58: #{matchmaker_forward.1} parent=51 // pred_check_branch
        %2601 = sbr.rel (%p2599) target = $region60
      $region59: #{matchmaker_forward.1} parent=51 // pred_region
        _
      $region60: #{matchmaker_forward.1} parent=51 // pred_fallthru
        _
    $region52: #{matchmaker_forward.1} parent=5 // pred_fallthru
      _
    %p2602 = scmp.le.s32.totalorder 2, %s16
    // Predicated region
    $region61: #{matchmaker_forward.1} parent=5 // pred_check
      %p2603 = pneg %p2602
    $region62: #{matchmaker_forward.1} parent=5 // pred_check_branch
      %2605 = sbr.rel (%p2603) target = $region64
    $region63: #{matchmaker_forward.1} parent=5 // pred_region
      %s2606 = ssub.s32 %s16, 2
      // Predicated region
      $region65: #{matchmaker_forward.1} parent=63 // pred_check
        %p2607 = pneg %p233
      $region66: #{matchmaker_forward.1} parent=63 // pred_check_branch
        %2609 = sbr.rel (%p2607) target = $region68
      $region67: #{matchmaker_forward.1} parent=63 // pred_region
        %p2610 = scmp.lt.s32.totalorder %s22, 1
        %s2611 = scalar_select %p2610, %s22, 1
        %s2612 = scalar_lea.vmem %s8, %s2611
      $region68: #{matchmaker_forward.1} parent=63 // pred_fallthru
        _
      // Predicated region
      $region69: #{matchmaker_forward.1} parent=63 // pred_check
        %p2613 = pneg %p259
      $region70: #{matchmaker_forward.1} parent=63 // pred_check_branch
        %2615 = sbr.rel (%p2613) target = $region72
      $region71: #{matchmaker_forward.1} parent=63 // pred_region
        %p2616 = scmp.lt.s32.totalorder %s22, 1
        %s2617 = scalar_select %p2616, %s22, 1
        %s2618 = scalar_lea.vmem %s9, %s2617
      $region72: #{matchmaker_forward.1} parent=63 // pred_fallthru
        _
    $region64: #{matchmaker_forward.1} parent=5 // pred_fallthru
      _
  $region6: #{matchmaker_forward.1} parent=0 // loop_footer
    %s20 = sadd.s32 1, %s16
  $region7: #{matchmaker_forward.1} parent=0 // loop_footer_branch
    %15 = sbr.rel target = $region3
  $region8: #{matchmaker_forward.1} parent=0 // loop_exit
    _

</llo_original>
